<compile_context>
chip_gen: v5e
topology: v5e:2x2
jax: 0.10.0
libtpu: 0.0.40
codegen_flags: <defaults>
</compile_context>

<pallas_src>
import functools
import numpy as np
import jax
import jax.numpy as jnp
from jax.experimental import pallas as pl
from jax.experimental.pallas import tpu as pltpu


# Set to jnp.bfloat16 to feed the MXU at full rate on v5e/v6e/v7x (accumulation
# stays f32 via preferred_element_type). Kept f32 by default for bit-faithful
# semantics w.r.t. the PyTorch reference.
MXU_DTYPE = jnp.float32


def _cast(x):
    return x.astype(MXU_DTYPE)


def _compiler(dims):
    return pltpu.CompilerParams(dimension_semantics=dims,
                                vmem_limit_bytes=32 * 1024 * 1024)


def _row_tile(m, cap=512):
    for c in (cap, 256, 128, 64, 32, 16, 8):
        if c <= m and m % c == 0:
            return c
    return m


# ----------------------------------------------------------------------------
# Kernel 1: fused linear (+ optional ReLU), tiled over rows.
# ----------------------------------------------------------------------------
def _linear_kernel(x_ref, w_ref, b_ref, o_ref, *, relu):
    y = jnp.dot(_cast(x_ref[...]), _cast(w_ref[...]),
                preferred_element_type=jnp.float32) + b_ref[...]
    o_ref[...] = jnp.maximum(y, 0.0) if relu else y


def linear(x, w, b, relu):
    """x: [..., K] @ w: [K, N] + b: [N] (optionally ReLU)."""
    lead = x.shape[:-1]
    M = int(np.prod(lead))
    K = x.shape[-1]
    N = w.shape[-1]
    x2 = x.reshape(M, K)
    tm = _row_tile(M)
    out = pl.pallas_call(
        functools.partial(_linear_kernel, relu=relu),
        out_shape=jax.ShapeDtypeStruct((M, N), jnp.float32),
        grid=(M // tm,),
        in_specs=[
            pl.BlockSpec((tm, K), lambda i: (i, 0)),
            pl.BlockSpec((K, N), lambda i: (0, 0)),
            pl.BlockSpec((1, N), lambda i: (0, 0)),
        ],
        out_specs=pl.BlockSpec((tm, N), lambda i: (i, 0)),
        compiler_params=_compiler(("parallel",)),
    )(x2, w, b.reshape(1, N))
    return out.reshape(*lead, N)


# ----------------------------------------------------------------------------
# Kernel 2: two-layer MLP (ReLU . Linear . ReLU . Linear) — fuses the tucker
#           FCNet with the rank-fused projection (attention path).
# ----------------------------------------------------------------------------
def _mlp2_kernel(x_ref, w1_ref, b1_ref, w2_ref, b2_ref, o_ref):
    h = jnp.maximum(jnp.dot(_cast(x_ref[...]), _cast(w1_ref[...]),
                            preferred_element_type=jnp.float32) + b1_ref[...], 0.0)
    o_ref[...] = jnp.maximum(jnp.dot(_cast(h), _cast(w2_ref[...]),
                                     preferred_element_type=jnp.float32) + b2_ref[...], 0.0)


def mlp2(x2, w1, b1, w2, b2):
    M, K = x2.shape
    H = w1.shape[-1]
    N = w2.shape[-1]
    tm = _row_tile(M)
    return pl.pallas_call(
        _mlp2_kernel,
        out_shape=jax.ShapeDtypeStruct((M, N), jnp.float32),
        grid=(M // tm,),
        in_specs=[
            pl.BlockSpec((tm, K), lambda i: (i, 0)),
            pl.BlockSpec((K, H), lambda i: (0, 0)),
            pl.BlockSpec((1, H), lambda i: (0, 0)),
            pl.BlockSpec((H, N), lambda i: (0, 0)),
            pl.BlockSpec((1, N), lambda i: (0, 0)),
        ],
        out_specs=pl.BlockSpec((tm, N), lambda i: (i, 0)),
        compiler_params=_compiler(("parallel",)),
    )(x2, w1, b1.reshape(1, H), w2, b2.reshape(1, N))


# ----------------------------------------------------------------------------
# Kernel 3: stacked linear — one weight per glimpse, glimpse as a grid axis.
# ----------------------------------------------------------------------------
def _stacked_linear_kernel(x_ref, w_ref, b_ref, o_ref, *, relu):
    y = jnp.dot(_cast(x_ref[...]), _cast(w_ref[0]),
                preferred_element_type=jnp.float32) + b_ref[0]
    o_ref[0] = jnp.maximum(y, 0.0) if relu else y


def linear_stacked(x2, w, b, relu):
    """x2: [M, K]; w: [S, K, N]; b: [S, N] -> out [S, M, N]."""
    M, K = x2.shape
    S, _, N = w.shape
    tm = _row_tile(M)
    return pl.pallas_call(
        functools.partial(_stacked_linear_kernel, relu=relu),
        out_shape=jax.ShapeDtypeStruct((S, M, N), jnp.float32),
        grid=(S, M // tm),
        in_specs=[
            pl.BlockSpec((tm, K), lambda s, i: (i, 0)),
            pl.BlockSpec((1, K, N), lambda s, i: (s, 0, 0)),
            pl.BlockSpec((1, 1, N), lambda s, i: (s, 0, 0)),
        ],
        out_specs=pl.BlockSpec((1, tm, N), lambda s, i: (s, i, 0)),
        compiler_params=_compiler(("parallel", "parallel")),
    )(x2, w, b.reshape(S, 1, N))


# ----------------------------------------------------------------------------
# Kernel 4: trilinear attention logits + softmax, fused (grid = (B, G)).
#   rank is folded into the contraction via a block-diagonal core tensor
#   T_blk[g, (r,i), (r,j,k)]; the (q,a)x(j,k) expansion of Q/A depends only on
#   b, so it is computed once per batch element at g==0 and kept in VMEM.
# ----------------------------------------------------------------------------
def _tri_att_kernel(vr_ref, qr_ref, ar_ref, t_ref,
                    rowq_ref, rowa_ref, cj_ref, ck_ref,
                    o_ref, qa_ref):
    g = pl.program_id(1)

    @pl.when(g == 0)
    def _():
        qe = jnp.dot(jnp.dot(rowq_ref[...], qr_ref[0],
                             preferred_element_type=jnp.float32),
                     cj_ref[...], preferred_element_type=jnp.float32)
        ae = jnp.dot(jnp.dot(rowa_ref[...], ar_ref[0],
                             preferred_element_type=jnp.float32),
                     ck_ref[...], preferred_element_type=jnp.float32)
        qa_ref[...] = qe * ae                                   # [QA, R*hr*hr]

    p = jnp.dot(_cast(vr_ref[0]), _cast(t_ref[0]),
                preferred_element_type=jnp.float32)             # [nv, R*hr*hr]
    logits = jax.lax.dot_general(
        _cast(qa_ref[...]), _cast(p), (((1,), (1,)), ((), ())),
        preferred_element_type=jnp.float32)                     # [QA, nv]

    # softmax over the whole flattened (q, a, v) tile
    m = jnp.max(logits, axis=1, keepdims=True)
    m = jnp.max(m, axis=0, keepdims=True)
    e = jnp.exp(logits - m)
    s = jnp.sum(e, axis=1, keepdims=True)
    s = jnp.sum(s, axis=0, keepdims=True)
    o_ref[0, 0] = e / s


def tri_attention_softmax(Vr, Qr, Ar, t_blk, rowq, rowa, cj, ck):
    B, nv, RH = Vr.shape
    nq, na = Qr.shape[1], Ar.shape[1]
    G, _, RHH = t_blk.shape
    QA = nq * na
    return pl.pallas_call(
        _tri_att_kernel,
        out_shape=jax.ShapeDtypeStruct((B, G, QA, nv), jnp.float32),
        grid=(B, G),
        in_specs=[
            pl.BlockSpec((1, nv, RH), lambda b, g: (b, 0, 0)),
            pl.BlockSpec((1, nq, RH), lambda b, g: (b, 0, 0)),
            pl.BlockSpec((1, na, RH), lambda b, g: (b, 0, 0)),
            pl.BlockSpec((1, RH, RHH), lambda b, g: (g, 0, 0)),
            pl.BlockSpec((QA, nq), lambda b, g: (0, 0)),
            pl.BlockSpec((QA, na), lambda b, g: (0, 0)),
            pl.BlockSpec((RH, RHH), lambda b, g: (0, 0)),
            pl.BlockSpec((RH, RHH), lambda b, g: (0, 0)),
        ],
        out_specs=pl.BlockSpec((1, 1, QA, nv), lambda b, g: (b, g, 0, 0)),
        scratch_shapes=[pltpu.VMEM((QA, RHH), jnp.float32)],
        compiler_params=_compiler(("parallel", "arbitrary")),
    )(Vr, Qr, Ar, t_blk, rowq, rowa, cj, ck)


# ----------------------------------------------------------------------------
# Kernel 5: TCNet.forward_with_weights for every (b, g) in one call.
#   out[b,g,d] = sum_{v,q,a} att[b,g,(q,a),v] V[g,b,v,d] Q[g,b,q,d] A[g,b,a,d]
#   Row expansions are done as broadcast + reduce (no repeat-matrix matmuls).
# ----------------------------------------------------------------------------
def _fww_kernel(att_ref, v_ref, q_ref, a_ref, o_ref, *, nq, na):
    w = att_ref[0, 0]                                            # [QA, nv]
    t1 = jnp.dot(_cast(w), _cast(v_ref[0]),
                 preferred_element_type=jnp.float32)             # [QA, D2]
    t3 = t1.reshape(nq, na, t1.shape[-1])                        # [nq, na, D2]
    s2 = jnp.sum(t3 * a_ref[0][None, :, :], axis=1)              # [nq, D2]
    o_ref[0, 0] = jnp.sum(s2 * q_ref[0], axis=0, keepdims=True)  # [1, D2]


def forward_with_weights(att, v2, q2, a2, *, nq, na):
    B, G, QA, nv = att.shape
    D2 = v2.shape[-1]
    return pl.pallas_call(
        functools.partial(_fww_kernel, nq=nq, na=na),
        out_shape=jax.ShapeDtypeStruct((B, G, 1, D2), jnp.float32),
        grid=(B, G),
        in_specs=[
            pl.BlockSpec((1, 1, QA, nv), lambda b, g: (b, g, 0, 0)),
            pl.BlockSpec((1, nv, D2), lambda b, g: (g, b, 0)),
            pl.BlockSpec((1, nq, D2), lambda b, g: (g, b, 0)),
            pl.BlockSpec((1, na, D2), lambda b, g: (g, b, 0)),
        ],
        out_specs=pl.BlockSpec((1, 1, 1, D2), lambda b, g: (b, g, 0, 0)),
        compiler_params=_compiler(("parallel", "parallel")),
    )(att, v2, q2, a2)


# ----------------------------------------------------------------------------
# Kernel 6: q_prj / kg_prj (no activation) accumulated over the glimpse axis.
#   q and kg projections are concatenated on the output lanes (lane-dense).
# ----------------------------------------------------------------------------
def _prj_kernel(b_ref, w_ref, bias_ref, o_ref):
    g = pl.program_id(0)

    @pl.when(g == 0)
    def _():
        o_ref[...] = jnp.zeros_like(o_ref)

    x = b_ref[...][:, 0, 0, :]                                   # [B, D2]
    o_ref[...] += jnp.dot(_cast(x), _cast(w_ref[0]),
                          preferred_element_type=jnp.float32) + bias_ref[0]


def prj_accumulate(b_emb, w_cat, bias_cat):
    B = b_emb.shape[0]
    G, D2, N2 = w_cat.shape
    return pl.pallas_call(
        _prj_kernel,
        out_shape=jax.ShapeDtypeStruct((B, N2), jnp.float32),
        grid=(G,),
        in_specs=[
            pl.BlockSpec((B, 1, 1, D2), lambda g: (0, g, 0, 0)),
            pl.BlockSpec((1, D2, N2), lambda g: (g, 0, 0)),
            pl.BlockSpec((1, 1, N2), lambda g: (g, 0, 0)),
        ],
        out_specs=pl.BlockSpec((B, N2), lambda g: (0, 0)),
        compiler_params=_compiler(("arbitrary",)),
    )(b_emb, w_cat, bias_cat.reshape(G, 1, N2))


# ----------------------------------------------------------------------------
# Host-side glue: constants, parameters, forward.
# ----------------------------------------------------------------------------
def tri_constants(nq, na, rank, hr):
    """Row-expansion matrices and rank-block lane-expansion matrices."""
    QA = nq * na
    RH = rank * hr
    RHH = rank * hr * hr
    qa = np.arange(QA)
    rowq = (qa[:, None] // na == np.arange(nq)[None, :]).astype(np.float32)
    rowa = (qa[:, None] % na == np.arange(na)[None, :]).astype(np.float32)
    rows = np.arange(RH)
    cols = np.arange(RHH)
    row_r, row_x = rows // hr, rows % hr
    col_r = cols // (hr * hr)
    col_j = (cols % (hr * hr)) // hr
    col_k = cols % hr
    cj = ((row_r[:, None] == col_r[None, :]) &
          (row_x[:, None] == col_j[None, :])).astype(np.float32)
    ck = ((row_r[:, None] == col_r[None, :]) &
          (row_x[:, None] == col_k[None, :])).astype(np.float32)
    return jnp.asarray(rowq), jnp.asarray(rowa), jnp.asarray(cj), jnp.asarray(ck)


def init_params(key, cfg):
    v_dim, q_dim, kg_dim = cfg["v_dim"], cfg["q_dim"], cfg["kg_dim"]
    h, G, rank = cfg["h_dim"], cfg["glimpse"], cfg["rank"]
    hr = h // rank
    RH = rank * hr
    D2 = 2 * h

    keys = iter(jax.random.split(key, 64))

    def lin(fi, fo):
        w = jax.random.normal(next(keys), (fi, fo), jnp.float32) / np.sqrt(fi)
        b = 0.01 * jax.random.normal(next(keys), (fo,), jnp.float32)
        return w, b

    def lin_stack(fi, fo, s):
        w = jax.random.normal(next(keys), (s, fi, fo), jnp.float32) / np.sqrt(fi)
        b = 0.01 * jax.random.normal(next(keys), (s, fo), jnp.float32)
        return w, b

    p = {}
    # TriAttention tucker FCNets
    p["att_v_w"], p["att_v_b"] = lin(v_dim, h)
    p["att_q_w"], p["att_q_b"] = lin(q_dim, h)
    p["att_kg_w"], p["att_kg_b"] = lin(kg_dim, h)
    # per-rank projections, fused along the output dim (rank-major blocks of hr)
    p["vnet_w"], p["vnet_b"] = lin(h, RH)
    p["qnet_w"], p["qnet_b"] = lin(h, RH)
    p["anet_w"], p["anet_b"] = lin(h, RH)
    # core tensor, stored block-diagonal over rank: T_blk[g, r*hr+i, r*hr*hr + j*hr + k]
    t_core = 0.1 * jax.random.normal(next(keys), (G, rank, hr, hr, hr), jnp.float32)
    t_blk = jnp.zeros((G, RH, rank * hr * hr), jnp.float32)
    for r in range(rank):
        t_blk = t_blk.at[:, r * hr:(r + 1) * hr,
                         r * hr * hr:(r + 1) * hr * hr].set(
            t_core[:, r].reshape(G, hr, hr * hr))
    p["T_blk"] = t_blk
    # t_net tuckers (k=2), stacked over glimpse
    p["tn_v_w"], p["tn_v_b"] = lin_stack(v_dim, D2, G)
    p["tn_q_w"], p["tn_q_b"] = lin_stack(q_dim, D2, G)
    p["tn_kg_w"], p["tn_kg_b"] = lin_stack(kg_dim, D2, G)
    # q_prj / kg_prj (linear, no activation), concatenated on the output dim
    qp_w, qp_b = lin_stack(D2, D2, G)
    kp_w, kp_b = lin_stack(D2, D2, G)
    p["prj_w"] = jnp.concatenate([qp_w, kp_w], axis=-1)     # [G, D2, 2*D2]
    p["prj_b"] = jnp.concatenate([qp_b, kp_b], axis=-1)     # [G, 2*D2]
    # poolers (ReLU)
    p["q_pool_w"], p["q_pool_b"] = lin(q_dim, D2)
    p["kg_pool_w"], p["kg_pool_b"] = lin(kg_dim, D2)
    return p


def cti_forward(params, v_emb, q_emb_raw, kg_emb_raw, cfg):
    B, nv, v_dim = v_emb.shape
    _, nq, q_dim = q_emb_raw.shape
    _, na, kg_dim = kg_emb_raw.shape
    G, rank, h = cfg["glimpse"], cfg["rank"], cfg["h_dim"]
    hr = h // rank
    RH = rank * hr
    D2 = 2 * h

    rowq, rowa, cj, ck = tri_constants(nq, na, rank, hr)

    # --- TriAttention: tucker + fused per-rank projection (one 2-layer MLP each)
    Vr = mlp2(v_emb.reshape(B * nv, v_dim), params["att_v_w"], params["att_v_b"],
              params["vnet_w"], params["vnet_b"]).reshape(B, nv, RH)
    Qr = mlp2(q_emb_raw.reshape(B * nq, q_dim), params["att_q_w"], params["att_q_b"],
              params["qnet_w"], params["qnet_b"]).reshape(B, nq, RH)
    Ar = mlp2(kg_emb_raw.reshape(B * na, kg_dim), params["att_kg_w"], params["att_kg_b"],
              params["anet_w"], params["anet_b"]).reshape(B, na, RH)

    # fused logits + softmax over the flattened (v, q, a) axis: [B, G, nq*na, nv]
    att_flat = tri_attention_softmax(Vr, Qr, Ar, params["T_blk"],
                                     rowq, rowa, cj, ck)

    # --- t_net tucker features, glimpse as a grid axis: [G, B*n, 2h]
    V2 = linear_stacked(v_emb.reshape(B * nv, v_dim),
                        params["tn_v_w"], params["tn_v_b"], relu=True)
    Q2 = linear_stacked(q_emb_raw.reshape(B * nq, q_dim),
                        params["tn_q_w"], params["tn_q_b"], relu=True)
    A2 = linear_stacked(kg_emb_raw.reshape(B * na, kg_dim),
                        params["tn_kg_w"], params["tn_kg_b"], relu=True)

    # --- attention-weighted trilinear pooling, all (b, g) in one call
    b_emb = forward_with_weights(att_flat, V2, Q2, A2, nq=nq, na=na)  # [B, G, 1, 2h]

    # --- q/kg projections, accumulated over glimpse, fused on lanes
    delta = prj_accumulate(b_emb, params["prj_w"], params["prj_b"])   # [B, 4h]
    delta_q, delta_kg = delta[:, :D2], delta[:, D2:]

    # --- poolers
    q_pool = linear(q_emb_raw, params["q_pool_w"], params["q_pool_b"], relu=True)
    kg_pool = linear(kg_emb_raw, params["kg_pool_w"], params["kg_pool_b"], relu=True)

    # joint = sum_seq(pool) + n_seq * sum_g prj_g(b_emb_g): identical to the
    # reference loop which broadcasts each projection over the sequence axis.
    joint_emb = (q_pool.sum(axis=1) + kg_pool.sum(axis=1)
                 + nq * delta_q + na * delta_kg)

    # torch layout: att[b, v, q, a, g]
    att = att_flat.reshape(B, G, nq, na, nv).transpose(0, 4, 2, 3, 1)
    return joint_emb, att


if __name__ == "__main__":
    cfg = dict(v_dim=16, q_dim=16, kg_dim=16, h_dim=32, rank=4, glimpse=2)
    B, nv, nq, na = 2, 8, 8, 8

    key = jax.random.PRNGKey(0)
    k_p, k_v, k_q, k_a = jax.random.split(key, 4)
    params = init_params(k_p, cfg)
    v_emb = jax.random.normal(k_v, (B, nv, cfg["v_dim"]), jnp.float32)
    q_emb_raw = jax.random.normal(k_q, (B, nq, cfg["q_dim"]), jnp.float32)
    kg_emb_raw = jax.random.normal(k_a, (B, na, cfg["kg_dim"]), jnp.float32)

    fwd = jax.jit(functools.partial(cti_forward, cfg=cfg))
    joint_emb, att = fwd(params, v_emb, q_emb_raw, kg_emb_raw)
    jax.block_until_ready((joint_emb, att))

    assert joint_emb.shape == (B, cfg["h_dim"] * 2)
    assert att.shape == (B, nv, nq, na, cfg["glimpse"])
    assert bool(jnp.isfinite(joint_emb).all()) and bool(jnp.isfinite(att).all())
    # attention normalizes over the flattened (v, q, a) axis per glimpse
    s = att.sum(axis=(1, 2, 3))
    assert bool(jnp.allclose(s, 1.0, atol=1e-4))
    print("KERNEL_OK")
</pallas_src>

<mosaic_0001>
module attributes {stable_mosaic.version = 11 : i64} {
  func.func @_linear_kernel(%arg0: i32, %arg1: memref<16x16xf32, #tpu.memory_space<vmem>>, %arg2: memref<16x64xf32, #tpu.memory_space<vmem>>, %arg3: memref<1x64xf32, #tpu.memory_space<vmem>>, %arg4: memref<16x64xf32, #tpu.memory_space<vmem>>) attributes {dimension_semantics = [#tpu.dimension_semantics<parallel>], iteration_bounds = array<i64: 1>, scalar_prefetch = 0 : i64, scratch_operands = 0 : i64, tpu.core_type = #tpu.core_type<tc>, window_params = [{transform_indices = @transform_0, window_bounds = array<i64: 16, 16>}, {pipeline_mode = #tpu.pipeline_mode<synchronous>, transform_indices = @transform_1, window_bounds = array<i64: 16, 64>}, {pipeline_mode = #tpu.pipeline_mode<synchronous>, transform_indices = @transform_2, window_bounds = array<i64: 1, 64>}, {transform_indices = @transform_3, window_bounds = array<i64: 16, 64>}]} {
    %c0 = arith.constant 0 : index
    %c0_0 = arith.constant 0 : index
    %0 = vector.load %arg1[%c0, %c0_0] : memref<16x16xf32, #tpu.memory_space<vmem>>, vector<16x16xf32>
    %c0_1 = arith.constant 0 : index
    %c0_2 = arith.constant 0 : index
    %1 = vector.load %arg2[%c0_1, %c0_2] : memref<16x64xf32, #tpu.memory_space<vmem>>, vector<16x64xf32>
    %cst = arith.constant dense<0.000000e+00> : vector<16x64xf32>
    %2 = tpu.matmul %0, %1, %cst {dimension_numbers = #tpu.dot_dimension_numbers<[1], [0], [0], [1], [0, 0, 1, 1], [], []>} : vector<16x16xf32>, vector<16x64xf32>, vector<16x64xf32> -> vector<16x64xf32>
    %c0_3 = arith.constant 0 : index
    %c0_4 = arith.constant 0 : index
    %3 = vector.load %arg3[%c0_3, %c0_4] : memref<1x64xf32, #tpu.memory_space<vmem>>, vector<1x64xf32>
    %4 = vector.broadcast %3 : vector<1x64xf32> to vector<16x64xf32>
    %5 = arith.addf %2, %4 : vector<16x64xf32>
    %cst_5 = arith.constant 0.000000e+00 : f32
    %6 = vector.broadcast %cst_5 : f32 to vector<16x64xf32>
    %7 = arith.maximumf %5, %6 : vector<16x64xf32>
    %c0_6 = arith.constant 0 : index
    %c0_7 = arith.constant 0 : index
    %8 = vector.load %arg4[%c0_6, %c0_7] : memref<16x64xf32, #tpu.memory_space<vmem>>, vector<16x64xf32>
    tpu.vector_store %arg4[%c0_6, %c0_7], %7 {strides = array<i32>} : memref<16x64xf32, #tpu.memory_space<vmem>>, vector<16x64xf32>,
    return
  }
  func.func @transform_0(%arg0: i32) -> (i32, i32) {
    %c0_i32 = arith.constant 0 : i32
    %c0_i32_0 = arith.constant 0 : i32
    return %arg0, %c0_i32 : i32, i32
  }
  func.func @transform_1(%arg0: i32) -> (i32, i32) {
    %c0_i32 = arith.constant 0 : i32
    %c0_i32_0 = arith.constant 0 : i32
    %c0_i32_1 = arith.constant 0 : i32
    return %c0_i32, %c0_i32_0 : i32, i32
  }
  func.func @transform_2(%arg0: i32) -> (i32, i32) {
    %c0_i32 = arith.constant 0 : i32
    %c0_i32_0 = arith.constant 0 : i32
    %c0_i32_1 = arith.constant 0 : i32
    return %c0_i32, %c0_i32_0 : i32, i32
  }
  func.func @transform_3(%arg0: i32) -> (i32, i32) {
    %c0_i32 = arith.constant 0 : i32
    %c0_i32_0 = arith.constant 0 : i32
    return %arg0, %c0_i32 : i32, i32
  }
}

module attributes {stable_mosaic.version = 11 : i64} {
  func.func @_linear_kernel(%arg0: i32, %arg1: memref<16x16xf32, #tpu.memory_space<vmem>>, %arg2: memref<16x64xf32, #tpu.memory_space<vmem>>, %arg3: memref<1x64xf32, #tpu.memory_space<vmem>>, %arg4: memref<16x64xf32, #tpu.memory_space<vmem>>) attributes {dimension_semantics = [#tpu.dimension_semantics<parallel>], iteration_bounds = array<i64: 1>, scalar_prefetch = 0 : i64, scratch_operands = 0 : i64, tpu.core_type = #tpu.core_type<tc>, window_params = [{transform_indices = @transform_0, window_bounds = array<i64: 16, 16>}, {pipeline_mode = #tpu.pipeline_mode<synchronous>, transform_indices = @transform_1, window_bounds = array<i64: 16, 64>}, {pipeline_mode = #tpu.pipeline_mode<synchronous>, transform_indices = @transform_2, window_bounds = array<i64: 1, 64>}, {transform_indices = @transform_3, window_bounds = array<i64: 16, 64>}]} {
    %c0 = arith.constant 0 : index
    %c0_0 = arith.constant 0 : index
    %0 = vector.load %arg1[%c0, %c0_0] : memref<16x16xf32, #tpu.memory_space<vmem>>, vector<16x16xf32>
    %c0_1 = arith.constant 0 : index
    %c0_2 = arith.constant 0 : index
    %1 = vector.load %arg2[%c0_1, %c0_2] : memref<16x64xf32, #tpu.memory_space<vmem>>, vector<16x64xf32>
    %cst = arith.constant dense<0.000000e+00> : vector<16x64xf32>
    %2 = tpu.matmul %0, %1, %cst {dimension_numbers = #tpu.dot_dimension_numbers<[1], [0], [0], [1], [0, 0, 1, 1], [], []>} : vector<16x16xf32>, vector<16x64xf32>, vector<16x64xf32> -> vector<16x64xf32>
    %c0_3 = arith.constant 0 : index
    %c0_4 = arith.constant 0 : index
    %3 = vector.load %arg3[%c0_3, %c0_4] : memref<1x64xf32, #tpu.memory_space<vmem>>, vector<1x64xf32>
    %4 = vector.broadcast %3 : vector<1x64xf32> to vector<16x64xf32>
    %5 = arith.addf %2, %4 : vector<16x64xf32>
    %cst_5 = arith.constant 0.000000e+00 : f32
    %6 = vector.broadcast %cst_5 : f32 to vector<16x64xf32>
    %7 = arith.maximumf %5, %6 : vector<16x64xf32>
    %c0_6 = arith.constant 0 : index
    %c0_7 = arith.constant 0 : index
    %8 = vector.load %arg4[%c0_6, %c0_7] : memref<16x64xf32, #tpu.memory_space<vmem>>, vector<16x64xf32>
    tpu.vector_store %arg4[%c0_6, %c0_7], %7 {strides = array<i32>} : memref<16x64xf32, #tpu.memory_space<vmem>>, vector<16x64xf32>,
    return
  }
  func.func @transform_0(%arg0: i32) -> (i32, i32) {
    %c0_i32 = arith.constant 0 : i32
    %c0_i32_0 = arith.constant 0 : i32
    return %arg0, %c0_i32 : i32, i32
  }
  func.func @transform_1(%arg0: i32) -> (i32, i32) {
    %c0_i32 = arith.constant 0 : i32
    %c0_i32_0 = arith.constant 0 : i32
    %c0_i32_1 = arith.constant 0 : i32
    return %c0_i32, %c0_i32_0 : i32, i32
  }
  func.func @transform_2(%arg0: i32) -> (i32, i32) {
    %c0_i32 = arith.constant 0 : i32
    %c0_i32_0 = arith.constant 0 : i32
    %c0_i32_1 = arith.constant 0 : i32
    return %c0_i32, %c0_i32_0 : i32, i32
  }
  func.func @transform_3(%arg0: i32) -> (i32, i32) {
    %c0_i32 = arith.constant 0 : i32
    %c0_i32_0 = arith.constant 0 : i32
    return %arg0, %c0_i32 : i32, i32
  }
}

module attributes {stable_mosaic.version = 11 : i64} {
  func.func @_mlp2_kernel(%arg0: i32, %arg1: memref<16x16xf32, #tpu.memory_space<vmem>>, %arg2: memref<16x32xf32, #tpu.memory_space<vmem>>, %arg3: memref<1x32xf32, #tpu.memory_space<vmem>>, %arg4: memref<32x32xf32, #tpu.memory_space<vmem>>, %arg5: memref<1x32xf32, #tpu.memory_space<vmem>>, %arg6: memref<16x32xf32, #tpu.memory_space<vmem>>) attributes {dimension_semantics = [#tpu.dimension_semantics<parallel>], iteration_bounds = array<i64: 1>, scalar_prefetch = 0 : i64, scratch_operands = 0 : i64, tpu.core_type = #tpu.core_type<tc>, window_params = [{transform_indices = @transform_0, window_bounds = array<i64: 16, 16>}, {pipeline_mode = #tpu.pipeline_mode<synchronous>, transform_indices = @transform_1, window_bounds = array<i64: 16, 32>}, {pipeline_mode = #tpu.pipeline_mode<synchronous>, transform_indices = @transform_2, window_bounds = array<i64: 1, 32>}, {pipeline_mode = #tpu.pipeline_mode<synchronous>, transform_indices = @transform_3, window_bounds = array<i64: 32, 32>}, {pipeline_mode = #tpu.pipeline_mode<synchronous>, transform_indices = @transform_4, window_bounds = array<i64: 1, 32>}, {transform_indices = @transform_5, window_bounds = array<i64: 16, 32>}]} {
    %c0 = arith.constant 0 : index
    %c0_0 = arith.constant 0 : index
    %0 = vector.load %arg1[%c0, %c0_0] : memref<16x16xf32, #tpu.memory_space<vmem>>, vector<16x16xf32>
    %c0_1 = arith.constant 0 : index
    %c0_2 = arith.constant 0 : index
    %1 = vector.load %arg2[%c0_1, %c0_2] : memref<16x32xf32, #tpu.memory_space<vmem>>, vector<16x32xf32>
    %cst = arith.constant dense<0.000000e+00> : vector<16x32xf32>
    %2 = tpu.matmul %0, %1, %cst {dimension_numbers = #tpu.dot_dimension_numbers<[1], [0], [0], [1], [0, 0, 1, 1], [], []>} : vector<16x16xf32>, vector<16x32xf32>, vector<16x32xf32> -> vector<16x32xf32>
    %c0_3 = arith.constant 0 : index
    %c0_4 = arith.constant 0 : index
    %3 = vector.load %arg3[%c0_3, %c0_4] : memref<1x32xf32, #tpu.memory_space<vmem>>, vector<1x32xf32>
    %4 = vector.broadcast %3 : vector<1x32xf32> to vector<16x32xf32>
    %5 = arith.addf %2, %4 : vector<16x32xf32>
    %cst_5 = arith.constant 0.000000e+00 : f32
    %6 = vector.broadcast %cst_5 : f32 to vector<16x32xf32>
    %7 = arith.maximumf %5, %6 : vector<16x32xf32>
    %c0_6 = arith.constant 0 : index
    %c0_7 = arith.constant 0 : index
    %8 = vector.load %arg4[%c0_6, %c0_7] : memref<32x32xf32, #tpu.memory_space<vmem>>, vector<32x32xf32>
    %cst_8 = arith.constant dense<0.000000e+00> : vector<16x32xf32>
    %9 = tpu.matmul %7, %8, %cst_8 {dimension_numbers = #tpu.dot_dimension_numbers<[1], [0], [0], [1], [0, 0, 1, 1], [], []>} : vector<16x32xf32>, vector<32x32xf32>, vector<16x32xf32> -> vector<16x32xf32>
    %c0_9 = arith.constant 0 : index
    %c0_10 = arith.constant 0 : index
    %10 = vector.load %arg5[%c0_9, %c0_10] : memref<1x32xf32, #tpu.memory_space<vmem>>, vector<1x32xf32>
    %11 = vector.broadcast %10 : vector<1x32xf32> to vector<16x32xf32>
    %12 = arith.addf %9, %11 : vector<16x32xf32>
    %cst_11 = arith.constant 0.000000e+00 : f32
    %13 = vector.broadcast %cst_11 : f32 to vector<16x32xf32>
    %14 = arith.maximumf %12, %13 : vector<16x32xf32>
    %c0_12 = arith.constant 0 : index
    %c0_13 = arith.constant 0 : index
    %15 = vector.load %arg6[%c0_12, %c0_13] : memref<16x32xf32, #tpu.memory_space<vmem>>, vector<16x32xf32>
    tpu.vector_store %arg6[%c0_12, %c0_13], %14 {strides = array<i32>} : memref<16x32xf32, #tpu.memory_space<vmem>>, vector<16x32xf32>,
    return
  }
  func.func @transform_0(%arg0: i32) -> (i32, i32) {
    %c0_i32 = arith.constant 0 : i32
    %c0_i32_0 = arith.constant 0 : i32
    return %arg0, %c0_i32 : i32, i32
  }
  func.func @transform_1(%arg0: i32) -> (i32, i32) {
    %c0_i32 = arith.constant 0 : i32
    %c0_i32_0 = arith.constant 0 : i32
    %c0_i32_1 = arith.constant 0 : i32
    return %c0_i32, %c0_i32_0 : i32, i32
  }
  func.func @transform_2(%arg0: i32) -> (i32, i32) {
    %c0_i32 = arith.constant 0 : i32
    %c0_i32_0 = arith.constant 0 : i32
    %c0_i32_1 = arith.constant 0 : i32
    return %c0_i32, %c0_i32_0 : i32, i32
  }
  func.func @transform_3(%arg0: i32) -> (i32, i32) {
    %c0_i32 = arith.constant 0 : i32
    %c0_i32_0 = arith.constant 0 : i32
    %c0_i32_1 = arith.constant 0 : i32
    return %c0_i32, %c0_i32_0 : i32, i32
  }
  func.func @transform_4(%arg0: i32) -> (i32, i32) {
    %c0_i32 = arith.constant 0 : i32
    %c0_i32_0 = arith.constant 0 : i32
    %c0_i32_1 = arith.constant 0 : i32
    return %c0_i32, %c0_i32_0 : i32, i32
  }
  func.func @transform_5(%arg0: i32) -> (i32, i32) {
    %c0_i32 = arith.constant 0 : i32
    %c0_i32_0 = arith.constant 0 : i32
    return %arg0, %c0_i32 : i32, i32
  }
}

module attributes {stable_mosaic.version = 11 : i64} {
  func.func @_stacked_linear_kernel(%arg0: i32, %arg1: i32, %arg2: memref<16x16xf32, #tpu.memory_space<vmem>>, %arg3: memref<1x16x64xf32, #tpu.memory_space<vmem>>, %arg4: memref<1x1x64xf32, #tpu.memory_space<vmem>>, %arg5: memref<1x16x64xf32, #tpu.memory_space<vmem>>) attributes {dimension_semantics = [#tpu.dimension_semantics<parallel>, #tpu.dimension_semantics<parallel>], iteration_bounds = array<i64: 2, 1>, scalar_prefetch = 0 : i64, scratch_operands = 0 : i64, tpu.core_type = #tpu.core_type<tc>, window_params = [{transform_indices = @transform_0, window_bounds = array<i64: 16, 16>}, {transform_indices = @transform_1, window_bounds = array<i64: 1, 16, 64>}, {transform_indices = @transform_2, window_bounds = array<i64: 1, 1, 64>}, {transform_indices = @transform_3, window_bounds = array<i64: 1, 16, 64>}]} {
    %c0 = arith.constant 0 : index
    %c0_0 = arith.constant 0 : index
    %0 = vector.load %arg2[%c0, %c0_0] : memref<16x16xf32, #tpu.memory_space<vmem>>, vector<16x16xf32>
    %c0_1 = arith.constant 0 : index
    %c0_2 = arith.constant 0 : index
    %c0_3 = arith.constant 0 : index
    %1 = vector.load %arg3[%c0_1, %c0_2, %c0_3] : memref<1x16x64xf32, #tpu.memory_space<vmem>>, vector<1x16x64xf32>
    %2 = vector.shape_cast %1 : vector<1x16x64xf32> to vector<16x64xf32>
    %cst = arith.constant dense<0.000000e+00> : vector<16x64xf32>
    %3 = tpu.matmul %0, %2, %cst {dimension_numbers = #tpu.dot_dimension_numbers<[1], [0], [0], [1], [0, 0, 1, 1], [], []>} : vector<16x16xf32>, vector<16x64xf32>, vector<16x64xf32> -> vector<16x64xf32>
    %c0_4 = arith.constant 0 : index
    %c0_5 = arith.constant 0 : index
    %c0_6 = arith.constant 0 : index
    %4 = vector.load %arg4[%c0_4, %c0_5, %c0_6] : memref<1x1x64xf32, #tpu.memory_space<vmem>>, vector<1x1x64xf32>
    %5 = vector.shape_cast %4 : vector<1x1x64xf32> to vector<1x64xf32>
    %6 = vector.broadcast %5 : vector<1x64xf32> to vector<16x64xf32>
    %7 = arith.addf %3, %6 : vector<16x64xf32>
    %cst_7 = arith.constant 0.000000e+00 : f32
    %8 = vector.broadcast %cst_7 : f32 to vector<16x64xf32>
    %9 = arith.maximumf %7, %8 : vector<16x64xf32>
    %c0_8 = arith.constant 0 : index
    %c0_9 = arith.constant 0 : index
    %c0_10 = arith.constant 0 : index
    %10 = vector.load %arg5[%c0_8, %c0_9, %c0_10] : memref<1x16x64xf32, #tpu.memory_space<vmem>>, vector<1x16x64xf32>
    %11 = vector.shape_cast %10 : vector<1x16x64xf32> to vector<16x64xf32>
    %12 = vector.shape_cast %9 : vector<16x64xf32> to vector<1x16x64xf32>
    tpu.vector_store %arg5[%c0_8, %c0_9, %c0_10], %12 {strides = array<i32>} : memref<1x16x64xf32, #tpu.memory_space<vmem>>, vector<1x16x64xf32>,
    return
  }
  func.func @transform_0(%arg0: i32, %arg1: i32) -> (i32, i32) {
    %c0_i32 = arith.constant 0 : i32
    %c0_i32_0 = arith.constant 0 : i32
    return %arg1, %c0_i32 : i32, i32
  }
  func.func @transform_1(%arg0: i32, %arg1: i32) -> (i32, i32, i32) {
    %c0_i32 = arith.constant 0 : i32
    %c0_i32_0 = arith.constant 0 : i32
    %c0_i32_1 = arith.constant 0 : i32
    return %arg0, %c0_i32, %c0_i32_0 : i32, i32, i32
  }
  func.func @transform_2(%arg0: i32, %arg1: i32) -> (i32, i32, i32) {
    %c0_i32 = arith.constant 0 : i32
    %c0_i32_0 = arith.constant 0 : i32
    %c0_i32_1 = arith.constant 0 : i32
    return %arg0, %c0_i32, %c0_i32_0 : i32, i32, i32
  }
  func.func @transform_3(%arg0: i32, %arg1: i32) -> (i32, i32, i32) {
    %c0_i32 = arith.constant 0 : i32
    %c0_i32_0 = arith.constant 0 : i32
    return %arg0, %arg1, %c0_i32 : i32, i32, i32
  }
}

module attributes {stable_mosaic.version = 11 : i64} {
  func.func @_stacked_linear_kernel(%arg0: i32, %arg1: i32, %arg2: memref<16x16xf32, #tpu.memory_space<vmem>>, %arg3: memref<1x16x64xf32, #tpu.memory_space<vmem>>, %arg4: memref<1x1x64xf32, #tpu.memory_space<vmem>>, %arg5: memref<1x16x64xf32, #tpu.memory_space<vmem>>) attributes {dimension_semantics = [#tpu.dimension_semantics<parallel>, #tpu.dimension_semantics<parallel>], iteration_bounds = array<i64: 2, 1>, scalar_prefetch = 0 : i64, scratch_operands = 0 : i64, tpu.core_type = #tpu.core_type<tc>, window_params = [{transform_indices = @transform_0, window_bounds = array<i64: 16, 16>}, {transform_indices = @transform_1, window_bounds = array<i64: 1, 16, 64>}, {transform_indices = @transform_2, window_bounds = array<i64: 1, 1, 64>}, {transform_indices = @transform_3, window_bounds = array<i64: 1, 16, 64>}]} {
    %c0 = arith.constant 0 : index
    %c0_0 = arith.constant 0 : index
    %0 = vector.load %arg2[%c0, %c0_0] : memref<16x16xf32, #tpu.memory_space<vmem>>, vector<16x16xf32>
    %c0_1 = arith.constant 0 : index
    %c0_2 = arith.constant 0 : index
    %c0_3 = arith.constant 0 : index
    %1 = vector.load %arg3[%c0_1, %c0_2, %c0_3] : memref<1x16x64xf32, #tpu.memory_space<vmem>>, vector<1x16x64xf32>
    %2 = vector.shape_cast %1 : vector<1x16x64xf32> to vector<16x64xf32>
    %cst = arith.constant dense<0.000000e+00> : vector<16x64xf32>
    %3 = tpu.matmul %0, %2, %cst {dimension_numbers = #tpu.dot_dimension_numbers<[1], [0], [0], [1], [0, 0, 1, 1], [], []>} : vector<16x16xf32>, vector<16x64xf32>, vector<16x64xf32> -> vector<16x64xf32>
    %c0_4 = arith.constant 0 : index
    %c0_5 = arith.constant 0 : index
    %c0_6 = arith.constant 0 : index
    %4 = vector.load %arg4[%c0_4, %c0_5, %c0_6] : memref<1x1x64xf32, #tpu.memory_space<vmem>>, vector<1x1x64xf32>
    %5 = vector.shape_cast %4 : vector<1x1x64xf32> to vector<1x64xf32>
    %6 = vector.broadcast %5 : vector<1x64xf32> to vector<16x64xf32>
    %7 = arith.addf %3, %6 : vector<16x64xf32>
    %cst_7 = arith.constant 0.000000e+00 : f32
    %8 = vector.broadcast %cst_7 : f32 to vector<16x64xf32>
    %9 = arith.maximumf %7, %8 : vector<16x64xf32>
    %c0_8 = arith.constant 0 : index
    %c0_9 = arith.constant 0 : index
    %c0_10 = arith.constant 0 : index
    %10 = vector.load %arg5[%c0_8, %c0_9, %c0_10] : memref<1x16x64xf32, #tpu.memory_space<vmem>>, vector<1x16x64xf32>
    %11 = vector.shape_cast %10 : vector<1x16x64xf32> to vector<16x64xf32>
    %12 = vector.shape_cast %9 : vector<16x64xf32> to vector<1x16x64xf32>
    tpu.vector_store %arg5[%c0_8, %c0_9, %c0_10], %12 {strides = array<i32>} : memref<1x16x64xf32, #tpu.memory_space<vmem>>, vector<1x16x64xf32>,
    return
  }
  func.func @transform_0(%arg0: i32, %arg1: i32) -> (i32, i32) {
    %c0_i32 = arith.constant 0 : i32
    %c0_i32_0 = arith.constant 0 : i32
    return %arg1, %c0_i32 : i32, i32
  }
  func.func @transform_1(%arg0: i32, %arg1: i32) -> (i32, i32, i32) {
    %c0_i32 = arith.constant 0 : i32
    %c0_i32_0 = arith.constant 0 : i32
    %c0_i32_1 = arith.constant 0 : i32
    return %arg0, %c0_i32, %c0_i32_0 : i32, i32, i32
  }
  func.func @transform_2(%arg0: i32, %arg1: i32) -> (i32, i32, i32) {
    %c0_i32 = arith.constant 0 : i32
    %c0_i32_0 = arith.constant 0 : i32
    %c0_i32_1 = arith.constant 0 : i32
    return %arg0, %c0_i32, %c0_i32_0 : i32, i32, i32
  }
  func.func @transform_3(%arg0: i32, %arg1: i32) -> (i32, i32, i32) {
    %c0_i32 = arith.constant 0 : i32
    %c0_i32_0 = arith.constant 0 : i32
    return %arg0, %arg1, %c0_i32 : i32, i32, i32
  }
}

module attributes {stable_mosaic.version = 11 : i64} {
  func.func @_tri_att_kernel(%arg0: i32, %arg1: i32, %arg2: memref<1x8x32xf32, #tpu.memory_space<vmem>>, %arg3: memref<1x8x32xf32, #tpu.memory_space<vmem>>, %arg4: memref<1x8x32xf32, #tpu.memory_space<vmem>>, %arg5: memref<1x32x256xf32, #tpu.memory_space<vmem>>, %arg6: memref<64x8xf32, #tpu.memory_space<vmem>>, %arg7: memref<64x8xf32, #tpu.memory_space<vmem>>, %arg8: memref<32x256xf32, #tpu.memory_space<vmem>>, %arg9: memref<32x256xf32, #tpu.memory_space<vmem>>, %arg10: memref<1x1x64x8xf32, #tpu.memory_space<vmem>>, %arg11: memref<64x256xf32, #tpu.memory_space<vmem>>) attributes {dimension_semantics = [#tpu.dimension_semantics<parallel>, #tpu.dimension_semantics<arbitrary>], iteration_bounds = array<i64: 2, 2>, scalar_prefetch = 0 : i64, scratch_operands = 1 : i64, tpu.core_type = #tpu.core_type<tc>, window_params = [{transform_indices = @transform_0, window_bounds = array<i64: 1, 8, 32>}, {transform_indices = @transform_1, window_bounds = array<i64: 1, 8, 32>}, {transform_indices = @transform_2, window_bounds = array<i64: 1, 8, 32>}, {transform_indices = @transform_3, window_bounds = array<i64: 1, 32, 256>}, {pipeline_mode = #tpu.pipeline_mode<synchronous>, transform_indices = @transform_4, window_bounds = array<i64: 64, 8>}, {pipeline_mode = #tpu.pipeline_mode<synchronous>, transform_indices = @transform_5, window_bounds = array<i64: 64, 8>}, {pipeline_mode = #tpu.pipeline_mode<synchronous>, transform_indices = @transform_6, window_bounds = array<i64: 32, 256>}, {pipeline_mode = #tpu.pipeline_mode<synchronous>, transform_indices = @transform_7, window_bounds = array<i64: 32, 256>}, {transform_indices = @transform_8, window_bounds = array<i64: 1, 1, 64, 8>}]} {
    %c0_i32 = arith.constant 0 : i32
    %0 = arith.cmpi eq, %arg1, %c0_i32 : i32
    %1 = arith.extui %0 : i1 to i32
    %c0_i32_0 = arith.constant 0 : i32
    %2 = arith.cmpi ne, %1, %c0_i32_0 : i32
    scf.if %2 {
      %c0_17 = arith.constant 0 : index
      %c0_18 = arith.constant 0 : index
      %26 = vector.load %arg6[%c0_17, %c0_18] : memref<64x8xf32, #tpu.memory_space<vmem>>, vector<64x8xf32>
      %c0_19 = arith.constant 0 : index
      %c0_20 = arith.constant 0 : index
      %c0_21 = arith.constant 0 : index
      %27 = vector.load %arg3[%c0_19, %c0_20, %c0_21] : memref<1x8x32xf32, #tpu.memory_space<vmem>>, vector<1x8x32xf32>
      %28 = vector.shape_cast %27 : vector<1x8x32xf32> to vector<8x32xf32>
      %cst_22 = arith.constant dense<0.000000e+00> : vector<64x32xf32>
      %29 = tpu.matmul %26, %28, %cst_22 {dimension_numbers = #tpu.dot_dimension_numbers<[1], [0], [0], [1], [0, 0, 1, 1], [], []>} : vector<64x8xf32>, vector<8x32xf32>, vector<64x32xf32> -> vector<64x32xf32>
      %c0_23 = arith.constant 0 : index
      %c0_24 = arith.constant 0 : index
      %30 = vector.load %arg8[%c0_23, %c0_24] : memref<32x256xf32, #tpu.memory_space<vmem>>, vector<32x256xf32>
      %cst_25 = arith.constant dense<0.000000e+00> : vector<64x256xf32>
      %31 = tpu.matmul %29, %30, %cst_25 {dimension_numbers = #tpu.dot_dimension_numbers<[1], [0], [0], [1], [0, 0, 1, 1], [], []>} : vector<64x32xf32>, vector<32x256xf32>, vector<64x256xf32> -> vector<64x256xf32>
      %c0_26 = arith.constant 0 : index
      %c0_27 = arith.constant 0 : index
      %32 = vector.load %arg7[%c0_26, %c0_27] : memref<64x8xf32, #tpu.memory_space<vmem>>, vector<64x8xf32>
      %c0_28 = arith.constant 0 : index
      %c0_29 = arith.constant 0 : index
      %c0_30 = arith.constant 0 : index
      %33 = vector.load %arg4[%c0_28, %c0_29, %c0_30] : memref<1x8x32xf32, #tpu.memory_space<vmem>>, vector<1x8x32xf32>
      %34 = vector.shape_cast %33 : vector<1x8x32xf32> to vector<8x32xf32>
      %cst_31 = arith.constant dense<0.000000e+00> : vector<64x32xf32>
      %35 = tpu.matmul %32, %34, %cst_31 {dimension_numbers = #tpu.dot_dimension_numbers<[1], [0], [0], [1], [0, 0, 1, 1], [], []>} : vector<64x8xf32>, vector<8x32xf32>, vector<64x32xf32> -> vector<64x32xf32>
      %c0_32 = arith.constant 0 : index
      %c0_33 = arith.constant 0 : index
      %36 = vector.load %arg9[%c0_32, %c0_33] : memref<32x256xf32, #tpu.memory_space<vmem>>, vector<32x256xf32>
      %cst_34 = arith.constant dense<0.000000e+00> : vector<64x256xf32>
      %37 = tpu.matmul %35, %36, %cst_34 {dimension_numbers = #tpu.dot_dimension_numbers<[1], [0], [0], [1], [0, 0, 1, 1], [], []>} : vector<64x32xf32>, vector<32x256xf32>, vector<64x256xf32> -> vector<64x256xf32>
      %38 = arith.mulf %31, %37 : vector<64x256xf32>
      %c0_35 = arith.constant 0 : index
      %c0_36 = arith.constant 0 : index
      %39 = vector.load %arg11[%c0_35, %c0_36] : memref<64x256xf32, #tpu.memory_space<vmem>>, vector<64x256xf32>
      tpu.vector_store %arg11[%c0_35, %c0_36], %38 {strides = array<i32>} : memref<64x256xf32, #tpu.memory_space<vmem>>, vector<64x256xf32>,
    } else {
    }
    %c0 = arith.constant 0 : index
    %c0_1 = arith.constant 0 : index
    %c0_2 = arith.constant 0 : index
    %3 = vector.load %arg2[%c0, %c0_1, %c0_2] : memref<1x8x32xf32, #tpu.memory_space<vmem>>, vector<1x8x32xf32>
    %4 = vector.shape_cast %3 : vector<1x8x32xf32> to vector<8x32xf32>
    %c0_3 = arith.constant 0 : index
    %c0_4 = arith.constant 0 : index
    %c0_5 = arith.constant 0 : index
    %5 = vector.load %arg5[%c0_3, %c0_4, %c0_5] : memref<1x32x256xf32, #tpu.memory_space<vmem>>, vector<1x32x256xf32>
    %6 = vector.shape_cast %5 : vector<1x32x256xf32> to vector<32x256xf32>
    %cst = arith.constant dense<0.000000e+00> : vector<8x256xf32>
    %7 = tpu.matmul %4, %6, %cst {dimension_numbers = #tpu.dot_dimension_numbers<[1], [0], [0], [1], [0, 0, 1, 1], [], []>} : vector<8x32xf32>, vector<32x256xf32>, vector<8x256xf32> -> vector<8x256xf32>
    %c0_6 = arith.constant 0 : index
    %c0_7 = arith.constant 0 : index
    %8 = vector.load %arg11[%c0_6, %c0_7] : memref<64x256xf32, #tpu.memory_space<vmem>>, vector<64x256xf32>
    %cst_8 = arith.constant dense<0.000000e+00> : vector<64x8xf32>
    %9 = tpu.matmul %8, %7, %cst_8 {dimension_numbers = #tpu.dot_dimension_numbers<[1], [1], [0], [0], [0, 0, 1, 0], [], []>} : vector<64x256xf32>, vector<8x256xf32>, vector<64x8xf32> -> vector<64x8xf32>
    %cst_9 = arith.constant dense<0xFF800000> : vector<64xf32>
    %10 = vector.multi_reduction <maximumf>, %9, %cst_9 [1] : vector<64x8xf32> to vector<64xf32>
    %11 = vector.shape_cast %10 : vector<64xf32> to vector<64x1xf32>
    %cst_10 = arith.constant dense<0xFF800000> : vector<1xf32>
    %12 = vector.multi_reduction <maximumf>, %11, %cst_10 [0] : vector<64x1xf32> to vector<1xf32>
    %13 = vector.shape_cast %12 : vector<1xf32> to vector<1x1xf32>
    %14 = vector.broadcast %13 : vector<1x1xf32> to vector<64x8xf32>
    %15 = arith.subf %9, %14 : vector<64x8xf32>
    %16 = math.exp %15 : vector<64x8xf32>
    %cst_11 = arith.constant dense<0.000000e+00> : vector<64xf32>
    %17 = vector.multi_reduction <add>, %16, %cst_11 [1] : vector<64x8xf32> to vector<64xf32>
    %18 = vector.shape_cast %17 : vector<64xf32> to vector<64x1xf32>
    %cst_12 = arith.constant dense<0.000000e+00> : vector<1xf32>
    %19 = vector.multi_reduction <add>, %18, %cst_12 [0] : vector<64x1xf32> to vector<1xf32>
    %20 = vector.shape_cast %19 : vector<1xf32> to vector<1x1xf32>
    %21 = vector.broadcast %20 : vector<1x1xf32> to vector<64x8xf32>
    %22 = arith.divf %16, %21 : vector<64x8xf32>
    %c0_13 = arith.constant 0 : index
    %c0_14 = arith.constant 0 : index
    %c0_15 = arith.constant 0 : index
    %c0_16 = arith.constant 0 : index
    %23 = vector.load %arg10[%c0_13, %c0_14, %c0_15, %c0_16] : memref<1x1x64x8xf32, #tpu.memory_space<vmem>>, vector<1x1x64x8xf32>
    %24 = vector.shape_cast %23 : vector<1x1x64x8xf32> to vector<64x8xf32>
    %25 = vector.shape_cast %22 : vector<64x8xf32> to vector<1x1x64x8xf32>
    tpu.vector_store %arg10[%c0_13, %c0_14, %c0_15, %c0_16], %25 {strides = array<i32>} : memref<1x1x64x8xf32, #tpu.memory_space<vmem>>, vector<1x1x64x8xf32>,
    return
  }
  func.func @transform_0(%arg0: i32, %arg1: i32) -> (i32, i32, i32) {
    %c0_i32 = arith.constant 0 : i32
    %c0_i32_0 = arith.constant 0 : i32
    %c0_i32_1 = arith.constant 0 : i32
    return %arg0, %c0_i32, %c0_i32_0 : i32, i32, i32
  }
  func.func @transform_1(%arg0: i32, %arg1: i32) -> (i32, i32, i32) {
    %c0_i32 = arith.constant 0 : i32
    %c0_i32_0 = arith.constant 0 : i32
    %c0_i32_1 = arith.constant 0 : i32
    return %arg0, %c0_i32, %c0_i32_0 : i32, i32, i32
  }
  func.func @transform_2(%arg0: i32, %arg1: i32) -> (i32, i32, i32) {
    %c0_i32 = arith.constant 0 : i32
    %c0_i32_0 = arith.constant 0 : i32
    %c0_i32_1 = arith.constant 0 : i32
    return %arg0, %c0_i32, %c0_i32_0 : i32, i32, i32
  }
  func.func @transform_3(%arg0: i32, %arg1: i32) -> (i32, i32, i32) {
    %c0_i32 = arith.constant 0 : i32
    %c0_i32_0 = arith.constant 0 : i32
    %c0_i32_1 = arith.constant 0 : i32
    return %arg1, %c0_i32, %c0_i32_0 : i32, i32, i32
  }
  func.func @transform_4(%arg0: i32, %arg1: i32) -> (i32, i32) {
    %c0_i32 = arith.constant 0 : i32
    %c0_i32_0 = arith.constant 0 : i32
    %c0_i32_1 = arith.constant 0 : i32
    return %c0_i32, %c0_i32_0 : i32, i32
  }
  func.func @transform_5(%arg0: i32, %arg1: i32) -> (i32, i32) {
    %c0_i32 = arith.constant 0 : i32
    %c0_i32_0 = arith.constant 0 : i32
    %c0_i32_1 = arith.constant 0 : i32
    return %c0_i32, %c0_i32_0 : i32, i32
  }
  func.func @transform_6(%arg0: i32, %arg1: i32) -> (i32, i32) {
    %c0_i32 = arith.constant 0 : i32
    %c0_i32_0 = arith.constant 0 : i32
    %c0_i32_1 = arith.constant 0 : i32
    return %c0_i32, %c0_i32_0 : i32, i32
  }
  func.func @transform_7(%arg0: i32, %arg1: i32) -> (i32, i32) {
    %c0_i32 = arith.constant 0 : i32
    %c0_i32_0 = arith.constant 0 : i32
    %c0_i32_1 = arith.constant 0 : i32
    return %c0_i32, %c0_i32_0 : i32, i32
  }
  func.func @transform_8(%arg0: i32, %arg1: i32) -> (i32, i32, i32, i32) {
    %c0_i32 = arith.constant 0 : i32
    %c0_i32_0 = arith.constant 0 : i32
    %c0_i32_1 = arith.constant 0 : i32
    return %arg0, %arg1, %c0_i32, %c0_i32_0 : i32, i32, i32, i32
  }
}

module attributes {stable_mosaic.version = 11 : i64} {
  func.func @_fww_kernel(%arg0: i32, %arg1: i32, %arg2: memref<1x1x64x8xf32, #tpu.memory_space<vmem>>, %arg3: memref<1x8x64xf32, #tpu.memory_space<vmem>>, %arg4: memref<1x8x64xf32, #tpu.memory_space<vmem>>, %arg5: memref<1x8x64xf32, #tpu.memory_space<vmem>>, %arg6: memref<1x1x1x64xf32, #tpu.memory_space<vmem>>) attributes {dimension_semantics = [#tpu.dimension_semantics<parallel>, #tpu.dimension_semantics<parallel>], iteration_bounds = array<i64: 2, 2>, scalar_prefetch = 0 : i64, scratch_operands = 0 : i64, tpu.core_type = #tpu.core_type<tc>, window_params = [{transform_indices = @transform_0, window_bounds = array<i64: 1, 1, 64, 8>}, {transform_indices = @transform_1, window_bounds = array<i64: 1, 8, 64>}, {transform_indices = @transform_2, window_bounds = array<i64: 1, 8, 64>}, {transform_indices = @transform_3, window_bounds = array<i64: 1, 8, 64>}, {transform_indices = @transform_4, window_bounds = array<i64: 1, 1, 1, 64>}]} {
    %c0 = arith.constant 0 : index
    %c0_0 = arith.constant 0 : index
    %c0_1 = arith.constant 0 : index
    %c0_2 = arith.constant 0 : index
    %0 = vector.load %arg2[%c0, %c0_0, %c0_1, %c0_2] : memref<1x1x64x8xf32, #tpu.memory_space<vmem>>, vector<1x1x64x8xf32>
    %1 = vector.shape_cast %0 : vector<1x1x64x8xf32> to vector<64x8xf32>
    %c0_3 = arith.constant 0 : index
    %c0_4 = arith.constant 0 : index
    %c0_5 = arith.constant 0 : index
    %2 = vector.load %arg3[%c0_3, %c0_4, %c0_5] : memref<1x8x64xf32, #tpu.memory_space<vmem>>, vector<1x8x64xf32>
    %3 = vector.shape_cast %2 : vector<1x8x64xf32> to vector<8x64xf32>
    %cst = arith.constant dense<0.000000e+00> : vector<64x64xf32>
    %4 = tpu.matmul %1, %3, %cst {dimension_numbers = #tpu.dot_dimension_numbers<[1], [0], [0], [1], [0, 0, 1, 1], [], []>} : vector<64x8xf32>, vector<8x64xf32>, vector<64x64xf32> -> vector<64x64xf32>
    %5 = vector.shape_cast %4 : vector<64x64xf32> to vector<8x8x64xf32>
    %c0_6 = arith.constant 0 : index
    %c0_7 = arith.constant 0 : index
    %c0_8 = arith.constant 0 : index
    %6 = vector.load %arg5[%c0_6, %c0_7, %c0_8] : memref<1x8x64xf32, #tpu.memory_space<vmem>>, vector<1x8x64xf32>
    %7 = vector.shape_cast %6 : vector<1x8x64xf32> to vector<8x64xf32>
    %8 = vector.shape_cast %7 : vector<8x64xf32> to vector<1x8x64xf32>
    %9 = vector.broadcast %8 : vector<1x8x64xf32> to vector<8x8x64xf32>
    %10 = arith.mulf %5, %9 : vector<8x8x64xf32>
    %cst_9 = arith.constant dense<0.000000e+00> : vector<8x64xf32>
    %11 = vector.multi_reduction <add>, %10, %cst_9 [1] : vector<8x8x64xf32> to vector<8x64xf32>
    %c0_10 = arith.constant 0 : index
    %c0_11 = arith.constant 0 : index
    %c0_12 = arith.constant 0 : index
    %12 = vector.load %arg4[%c0_10, %c0_11, %c0_12] : memref<1x8x64xf32, #tpu.memory_space<vmem>>, vector<1x8x64xf32>
    %13 = vector.shape_cast %12 : vector<1x8x64xf32> to vector<8x64xf32>
    %14 = arith.mulf %11, %13 : vector<8x64xf32>
    %cst_13 = arith.constant dense<0.000000e+00> : vector<64xf32>
    %15 = vector.multi_reduction <add>, %14, %cst_13 [0] : vector<8x64xf32> to vector<64xf32>
    %16 = vector.shape_cast %15 : vector<64xf32> to vector<1x64xf32>
    %c0_14 = arith.constant 0 : index
    %c0_15 = arith.constant 0 : index
    %c0_16 = arith.constant 0 : index
    %c0_17 = arith.constant 0 : index
    %17 = vector.load %arg6[%c0_14, %c0_15, %c0_16, %c0_17] : memref<1x1x1x64xf32, #tpu.memory_space<vmem>>, vector<1x1x1x64xf32>
    %18 = vector.shape_cast %17 : vector<1x1x1x64xf32> to vector<1x64xf32>
    %19 = vector.shape_cast %16 : vector<1x64xf32> to vector<1x1x1x64xf32>
    tpu.vector_store %arg6[%c0_14, %c0_15, %c0_16, %c0_17], %19 {strides = array<i32>} : memref<1x1x1x64xf32, #tpu.memory_space<vmem>>, vector<1x1x1x64xf32>,
    return
  }
  func.func @transform_0(%arg0: i32, %arg1: i32) -> (i32, i32, i32, i32) {
    %c0_i32 = arith.constant 0 : i32
    %c0_i32_0 = arith.constant 0 : i32
    %c0_i32_1 = arith.constant 0 : i32
    return %arg0, %arg1, %c0_i32, %c0_i32_0 : i32, i32, i32, i32
  }
  func.func @transform_1(%arg0: i32, %arg1: i32) -> (i32, i32, i32) {
    %c0_i32 = arith.constant 0 : i32
    %c0_i32_0 = arith.constant 0 : i32
    return %arg1, %arg0, %c0_i32 : i32, i32, i32
  }
  func.func @transform_2(%arg0: i32, %arg1: i32) -> (i32, i32, i32) {
    %c0_i32 = arith.constant 0 : i32
    %c0_i32_0 = arith.constant 0 : i32
    return %arg1, %arg0, %c0_i32 : i32, i32, i32
  }
  func.func @transform_3(%arg0: i32, %arg1: i32) -> (i32, i32, i32) {
    %c0_i32 = arith.constant 0 : i32
    %c0_i32_0 = arith.constant 0 : i32
    return %arg1, %arg0, %c0_i32 : i32, i32, i32
  }
  func.func @transform_4(%arg0: i32, %arg1: i32) -> (i32, i32, i32, i32) {
    %c0_i32 = arith.constant 0 : i32
    %c0_i32_0 = arith.constant 0 : i32
    %c0_i32_1 = arith.constant 0 : i32
    return %arg0, %arg1, %c0_i32, %c0_i32_0 : i32, i32, i32, i32
  }
}

module attributes {stable_mosaic.version = 11 : i64} {
  func.func @_prj_kernel(%arg0: i32, %arg1: memref<2x1x1x64xf32, #tpu.memory_space<vmem>>, %arg2: memref<1x64x128xf32, #tpu.memory_space<vmem>>, %arg3: memref<1x1x128xf32, #tpu.memory_space<vmem>>, %arg4: memref<2x128xf32, #tpu.memory_space<vmem>>) attributes {dimension_semantics = [#tpu.dimension_semantics<arbitrary>], iteration_bounds = array<i64: 2>, scalar_prefetch = 0 : i64, scratch_operands = 0 : i64, tpu.core_type = #tpu.core_type<tc>, window_params = [{transform_indices = @transform_0, window_bounds = array<i64: 2, 1, 1, 64>}, {transform_indices = @transform_1, window_bounds = array<i64: 1, 64, 128>}, {transform_indices = @transform_2, window_bounds = array<i64: 1, 1, 128>}, {pipeline_mode = #tpu.pipeline_mode<synchronous>, transform_indices = @transform_3, window_bounds = array<i64: 2, 128>}]} {
    %c0_i32 = arith.constant 0 : i32
    %0 = arith.cmpi eq, %arg0, %c0_i32 : i32
    %1 = arith.extui %0 : i1 to i32
    %c0_i32_0 = arith.constant 0 : i32
    %2 = arith.cmpi ne, %1, %c0_i32_0 : i32
    scf.if %2 {
      %cst_14 = arith.constant 0.000000e+00 : f32
      %15 = vector.broadcast %cst_14 : f32 to vector<2x128xf32>
      %c0_15 = arith.constant 0 : index
      %c0_16 = arith.constant 0 : index
      %16 = vector.load %arg4[%c0_15, %c0_16] : memref<2x128xf32, #tpu.memory_space<vmem>>, vector<2x128xf32>
      tpu.vector_store %arg4[%c0_15, %c0_16], %15 {strides = array<i32>} : memref<2x128xf32, #tpu.memory_space<vmem>>, vector<2x128xf32>,
    } else {
    }
    %c0 = arith.constant 0 : index
    %c0_1 = arith.constant 0 : index
    %c0_2 = arith.constant 0 : index
    %c0_3 = arith.constant 0 : index
    %3 = vector.load %arg1[%c0, %c0_1, %c0_2, %c0_3] : memref<2x1x1x64xf32, #tpu.memory_space<vmem>>, vector<2x1x1x64xf32>
    %4 = vector.shape_cast %3 : vector<2x1x1x64xf32> to vector<2x64xf32>
    %c0_4 = arith.constant 0 : index
    %c0_5 = arith.constant 0 : index
    %5 = vector.load %arg4[%c0_4, %c0_5] : memref<2x128xf32, #tpu.memory_space<vmem>>, vector<2x128xf32>
    %c0_6 = arith.constant 0 : index
    %c0_7 = arith.constant 0 : index
    %c0_8 = arith.constant 0 : index
    %6 = vector.load %arg2[%c0_6, %c0_7, %c0_8] : memref<1x64x128xf32, #tpu.memory_space<vmem>>, vector<1x64x128xf32>
    %7 = vector.shape_cast %6 : vector<1x64x128xf32> to vector<64x128xf32>
    %cst = arith.constant dense<0.000000e+00> : vector<2x128xf32>
    %8 = tpu.matmul %4, %7, %cst {dimension_numbers = #tpu.dot_dimension_numbers<[1], [0], [0], [1], [0, 0, 1, 1], [], []>} : vector<2x64xf32>, vector<64x128xf32>, vector<2x128xf32> -> vector<2x128xf32>
    %c0_9 = arith.constant 0 : index
    %c0_10 = arith.constant 0 : index
    %c0_11 = arith.constant 0 : index
    %9 = vector.load %arg3[%c0_9, %c0_10, %c0_11] : memref<1x1x128xf32, #tpu.memory_space<vmem>>, vector<1x1x128xf32>
    %10 = vector.shape_cast %9 : vector<1x1x128xf32> to vector<1x128xf32>
    %11 = vector.broadcast %10 : vector<1x128xf32> to vector<2x128xf32>
    %12 = arith.addf %8, %11 : vector<2x128xf32>
    %13 = arith.addf %5, %12 : vector<2x128xf32>
    %c0_12 = arith.constant 0 : index
    %c0_13 = arith.constant 0 : index
    %14 = vector.load %arg4[%c0_12, %c0_13] : memref<2x128xf32, #tpu.memory_space<vmem>>, vector<2x128xf32>
    tpu.vector_store %arg4[%c0_12, %c0_13], %13 {strides = array<i32>} : memref<2x128xf32, #tpu.memory_space<vmem>>, vector<2x128xf32>,
    return
  }
  func.func @transform_0(%arg0: i32) -> (i32, i32, i32, i32) {
    %c0_i32 = arith.constant 0 : i32
    %c0_i32_0 = arith.constant 0 : i32
    %c0_i32_1 = arith.constant 0 : i32
    %c0_i32_2 = arith.constant 0 : i32
    return %c0_i32, %arg0, %c0_i32_0, %c0_i32_1 : i32, i32, i32, i32
  }
  func.func @transform_1(%arg0: i32) -> (i32, i32, i32) {
    %c0_i32 = arith.constant 0 : i32
    %c0_i32_0 = arith.constant 0 : i32
    %c0_i32_1 = arith.constant 0 : i32
    return %arg0, %c0_i32, %c0_i32_0 : i32, i32, i32
  }
  func.func @transform_2(%arg0: i32) -> (i32, i32, i32) {
    %c0_i32 = arith.constant 0 : i32
    %c0_i32_0 = arith.constant 0 : i32
    %c0_i32_1 = arith.constant 0 : i32
    return %arg0, %c0_i32, %c0_i32_0 : i32, i32, i32
  }
  func.func @transform_3(%arg0: i32) -> (i32, i32) {
    %c0_i32 = arith.constant 0 : i32
    %c0_i32_0 = arith.constant 0 : i32
    %c0_i32_1 = arith.constant 0 : i32
    return %c0_i32, %c0_i32_0 : i32, i32
  }
}

</mosaic_0001>

<llo_original>
// kernel: cti_forward.20
$region0: #{cti_forward.20}
  #allocation0 [shape = 'u32[]', space=smem, size = 0x4, offset = 0x4, fixed_abs, tag = 'smem constant byte address 0x4 - core index']
  #allocation1 [shape = 'u32[72,128]{1,0:T(1,128)}', space=vmem, size = 0x9000, scoped, tag = 'internal scratch']
  %s0 = inlined_call_operand.hbm [shape: f32[16,16], index: 0, kind: input, shape index: {}]
  %s1 = inlined_call_operand.hbm [shape: f32[16,64], index: 1, kind: input, shape index: {}]
  %s2 = inlined_call_operand.vmem [shape: f32[1,64], index: 2, kind: input, shape index: {}]
  %s3 = inlined_call_operand.vmem [shape: f32[16,64], index: 3, kind: output, shape index: {}]
  %s4 = sld [smem:[#allocation0]]
  $region30: #{cti_forward.20} parent=0
    _
  %s6 = ssub.s32 1, %s4
  %s7 = scalar_select 0, %s6, %s4
  $region1: #{cti_forward.20} parent=0
    #allocation2 [shape = 'u8[8192]{0}', space=vmem, size = 0x2000, scoped, tag = 'input window, operand 0, single buffered']
    #allocation3 [shape = 's32[1]{0}', space=sflag, size = 0x4, scoped, tag = 'scoped memory for cti_forward.20']
    #allocation4 [shape = 'u8[8192]{0}', space=vmem, size = 0x2000, scoped, tag = 'input window, operand 1, single buffered']
    #allocation5 [shape = 's32[1]{0}', space=sflag, size = 0x4, scoped, tag = 'scoped memory for cti_forward.20']
    %8 = vsyncpa [#allocation3], 0
    %9 = vsyncpa [#allocation5], 0
    // Predicated region
    $region2: #{cti_forward.20} parent=1 // pred_check
      _
    $region3: #{cti_forward.20} parent=1 // pred_check_branch
      %11 = sbr.rel (0) target = $region5
    $region4: #{cti_forward.20} parent=1 // pred_region
      %13 = vsyncadd [#allocation3], 0
      %s14 = sshll.u32 %s0, 4
      %s15 = int_to_ptr.hbm [resolvable:$true] %s14
      %s16 = sshll.u32 [#allocation2], 4
      %s17 = int_to_ptr.vmem [resolvable:$true] %s16
      %22 = dma.hbm_to_vmem [thread:$0]  %s15, 256, %s17, [#allocation3], 128, 128, 8
    $region5: #{cti_forward.20} parent=1 // pred_fallthru
      _
    // Predicated region
    $region6: #{cti_forward.20} parent=1 // pred_check
      _
    $region7: #{cti_forward.20} parent=1 // pred_check_branch
      %24 = sbr.rel (0) target = $region9
    $region8: #{cti_forward.20} parent=1 // pred_region
      %26 = vsyncadd [#allocation5], 0
      %s27 = sshll.u32 %s1, 4
      %s28 = int_to_ptr.hbm [resolvable:$true] %s27
      %s29 = sshll.u32 [#allocation4], 4
      %s30 = int_to_ptr.vmem [resolvable:$true] %s29
      %35 = dma.hbm_to_vmem [thread:$0]  %s28, 256, %s30, [#allocation5], 128, 128, 8
    $region9: #{cti_forward.20} parent=1 // pred_fallthru
      _
    // Predicated region
    $region10: #{cti_forward.20} parent=1 // pred_check
      _
    $region11: #{cti_forward.20} parent=1 // pred_check_branch
      %37 = sbr.rel (0) target = $region13
    $region12: #{cti_forward.20} parent=1 // pred_region
      _
    $region13: #{cti_forward.20} parent=1 // pred_fallthru
      _
    // Predicated region
    $region14: #{cti_forward.20} parent=1 // pred_check
      _
    $region15: #{cti_forward.20} parent=1 // pred_check_branch
      %39 = sbr.rel (0) target = $region17
    $region16: #{cti_forward.20} parent=1 // pred_region
      %41 = dma.done [#allocation3], 256
    $region17: #{cti_forward.20} parent=1 // pred_fallthru
      _
    // Predicated region
    $region18: #{cti_forward.20} parent=1 // pred_check
      _
    $region19: #{cti_forward.20} parent=1 // pred_check_branch
      %43 = sbr.rel (0) target = $region21
    $region20: #{cti_forward.20} parent=1 // pred_region
      %45 = dma.done [#allocation5], 256
    $region21: #{cti_forward.20} parent=1 // pred_fallthru
      _
    %v46 = vld [vmem:[#allocation2] sm:$0xff]
    %v47 = vld [vmem:[#allocation2 + $0x8] sm:$0xff]
    %v48 = vld [vmem:[#allocation4] sm:$0xff]
    %v49 = vld [vmem:[#allocation4 + $0x8] sm:$0xff]
    %v50 = vld [vmem:[%s2] sm:$0x1]
    %v52 = vperm.slane %v50, 0
    %vm54 = vcmask 130048
    %v56 = vsel %vm54, %v46, 0
    %v59 = vsel %vm54, %v47, 0
    %61 = vmatpush.msra.mxu0 0.0
    %62 = vmatpush.msra.mxu0 0.0
    %63 = vmatpush.msra.mxu0 0.0
    %64 = vmatpush.msra.mxu0 0.0
    %65 = vmatpush.msra.mxu0 0.0
    %66 = vmatpush.msra.mxu0 0.0
    %67 = vmatpush.msra.mxu0 0.0
    %68 = vmatpush.msra.mxu0 0.0
    %69 = vmatpush.msra.mxu0 0.0
    %70 = vmatpush.msra.mxu0 0.0
    %71 = vmatpush.msra.mxu0 0.0
    %72 = vmatpush.msra.mxu0 0.0
    %73 = vmatpush.msra.mxu0 0.0
    %74 = vmatpush.msra.mxu0 0.0
    %75 = vmatpush.msra.mxu0 %v49
    %76 = vmatpush.msra.mxu0 %v48
    %77 = vmatmul.f32.gmra.mxu0 %v56
    %v78 = vpop.f32.mrf.mxu0
    %v79 = vadd.f32 %v52, %v78
    %80 = vmatmul.f32.gmra.mxu0 %v59
    %v81 = vpop.f32.mrf.mxu0
    %v82 = vadd.f32 %v52, %v81
    %83 = vdwg.mxu0
    %v84 = vmax.f32 %v79, 0.0
    %v85 = vmax.f32 %v82, 0.0
    %vm86 = vcmask 523264
    %87 = vst.msk [vmem:[%s3] sm:$0xff] %vm86, %v84
    %88 = vst.msk [vmem:[%s3 + $0x8] sm:$0xff] %vm86, %v85
    // Predicated region
    $region22: #{cti_forward.20} parent=1 // pred_check
      _
    $region23: #{cti_forward.20} parent=1 // pred_check_branch
      %90 = sbr.rel (0) target = $region25
    $region24: #{cti_forward.20} parent=1 // pred_region
      _
    $region25: #{cti_forward.20} parent=1 // pred_fallthru
      _
    // Predicated region
    $region26: #{cti_forward.20} parent=1 // pred_check
      _
    $region27: #{cti_forward.20} parent=1 // pred_check_branch
      %92 = sbr.rel (0) target = $region29
    $region28: #{cti_forward.20} parent=1 // pred_region
      _
    $region29: #{cti_forward.20} parent=1 // pred_fallthru
      _
    %93 = vsyncpa [#allocation3], 1
    %94 = vsyncpa [#allocation5], 1

// kernel: cti_forward.13
$region0: #{cti_forward.13}
  #allocation0 [shape = 'u32[]', space=smem, size = 0x4, offset = 0x4, fixed_abs, tag = 'smem constant byte address 0x4 - core index']
  #allocation1 [shape = 'u32[72,128]{1,0:T(1,128)}', space=vmem, size = 0x9000, scoped, tag = 'internal scratch']
  %s0 = inlined_call_operand.hbm [shape: f32[16,16], index: 0, kind: input, shape index: {}]
  %s1 = inlined_call_operand.hbm [shape: f32[16,32], index: 1, kind: input, shape index: {}]
  %s2 = inlined_call_operand.hbm [shape: f32[1,32], index: 2, kind: input, shape index: {}]
  %s3 = inlined_call_operand.hbm [shape: f32[32,32], index: 3, kind: input, shape index: {}]
  %s4 = inlined_call_operand.hbm [shape: f32[1,32], index: 4, kind: input, shape index: {}]
  %s5 = inlined_call_operand.vmem [shape: f32[16,32], index: 5, kind: output, shape index: {}]
  %s6 = sld [smem:[#allocation0]]
  $region50: #{cti_forward.13} parent=0
    _
  %s8 = ssub.s32 1, %s6
  %s9 = scalar_select 0, %s8, %s6
  $region1: #{cti_forward.13} parent=0
    #allocation2 [shape = 'u8[8192]{0}', space=vmem, size = 0x2000, scoped, tag = 'input window, operand 0, single buffered']
    #allocation3 [shape = 's32[1]{0}', space=sflag, size = 0x4, scoped, tag = 'scoped memory for cti_forward.13']
    #allocation4 [shape = 'u8[8192]{0}', space=vmem, size = 0x2000, scoped, tag = 'input window, operand 1, single buffered']
    #allocation5 [shape = 's32[1]{0}', space=sflag, size = 0x4, scoped, tag = 'scoped memory for cti_forward.13']
    #allocation6 [shape = 'u8[512]{0}', space=vmem, size = 0x400, scoped, tag = 'input window, operand 2, single buffered']
    #allocation7 [shape = 'u8[16384]{0}', space=vmem, size = 0x4000, scoped, tag = 'input window, operand 3, single buffered']
    #allocation8 [shape = 's32[1]{0}', space=sflag, size = 0x4, scoped, tag = 'scoped memory for cti_forward.13']
    #allocation9 [shape = 'u8[512]{0}', space=vmem, size = 0x400, scoped, tag = 'input window, operand 4, single buffered']
    %10 = vsyncpa [#allocation3], 0
    %11 = vsyncpa [#allocation5], 0
    %12 = vsyncpa [#allocation8], 0
    // Predicated region
    $region2: #{cti_forward.13} parent=1 // pred_check
      _
    $region3: #{cti_forward.13} parent=1 // pred_check_branch
      %14 = sbr.rel (0) target = $region5
    $region4: #{cti_forward.13} parent=1 // pred_region
      %16 = vsyncadd [#allocation3], 0
      %s17 = sshll.u32 %s0, 4
      %s18 = int_to_ptr.hbm [resolvable:$true] %s17
      %s19 = sshll.u32 [#allocation2], 4
      %s20 = int_to_ptr.vmem [resolvable:$true] %s19
      %25 = dma.hbm_to_vmem [thread:$0]  %s18, 256, %s20, [#allocation3], 128, 128, 8
    $region5: #{cti_forward.13} parent=1 // pred_fallthru
      _
    // Predicated region
    $region6: #{cti_forward.13} parent=1 // pred_check
      _
    $region7: #{cti_forward.13} parent=1 // pred_check_branch
      %27 = sbr.rel (0) target = $region9
    $region8: #{cti_forward.13} parent=1 // pred_region
      %29 = vsyncadd [#allocation5], 0
      %s30 = sshll.u32 %s1, 4
      %s31 = int_to_ptr.hbm [resolvable:$true] %s30
      %s32 = sshll.u32 [#allocation4], 4
      %s33 = int_to_ptr.vmem [resolvable:$true] %s32
      %38 = dma.hbm_to_vmem [thread:$0]  %s31, 256, %s33, [#allocation5], 128, 128, 8
    $region9: #{cti_forward.13} parent=1 // pred_fallthru
      _
    // Predicated region
    $region10: #{cti_forward.13} parent=1 // pred_check
      _
    $region11: #{cti_forward.13} parent=1 // pred_check_branch
      %40 = sbr.rel (0) target = $region13
    $region12: #{cti_forward.13} parent=1 // pred_region
      %42 = vsyncadd [#allocation5], 0
      %s44 = sshll.u32 %s2, 4
      %s45 = int_to_ptr.hbm [resolvable:$true] %s44
      %s46 = sshll.u32 [#allocation6], 4
      %s47 = int_to_ptr.vmem [resolvable:$true] %s46
      %49 = dma.hbm_to_vmem [thread:$0]  %s45, 16, %s47, [#allocation5]
    $region13: #{cti_forward.13} parent=1 // pred_fallthru
      _
    // Predicated region
    $region14: #{cti_forward.13} parent=1 // pred_check
      _
    $region15: #{cti_forward.13} parent=1 // pred_check_branch
      %51 = sbr.rel (0) target = $region17
    $region16: #{cti_forward.13} parent=1 // pred_region
      %53 = vsyncadd [#allocation8], 0
      %s54 = sshll.u32 %s3, 4
      %s55 = int_to_ptr.hbm [resolvable:$true] %s54
      %s56 = sshll.u32 [#allocation7], 4
      %s57 = int_to_ptr.vmem [resolvable:$true] %s56
      %62 = dma.hbm_to_vmem [thread:$0]  %s55, 512, %s57, [#allocation8], 128, 128, 8
    $region17: #{cti_forward.13} parent=1 // pred_fallthru
      _
    // Predicated region
    $region18: #{cti_forward.13} parent=1 // pred_check
      _
    $region19: #{cti_forward.13} parent=1 // pred_check_branch
      %64 = sbr.rel (0) target = $region21
    $region20: #{cti_forward.13} parent=1 // pred_region
      %66 = vsyncadd [#allocation8], 0
      %s68 = sshll.u32 %s4, 4
      %s69 = int_to_ptr.hbm [resolvable:$true] %s68
      %s70 = sshll.u32 [#allocation9], 4
      %s71 = int_to_ptr.vmem [resolvable:$true] %s70
      %73 = dma.hbm_to_vmem [thread:$0]  %s69, 16, %s71, [#allocation8]
    $region21: #{cti_forward.13} parent=1 // pred_fallthru
      _
    // Predicated region
    $region22: #{cti_forward.13} parent=1 // pred_check
      _
    $region23: #{cti_forward.13} parent=1 // pred_check_branch
      %75 = sbr.rel (0) target = $region25
    $region24: #{cti_forward.13} parent=1 // pred_region
      %77 = dma.done [#allocation3], 256
    $region25: #{cti_forward.13} parent=1 // pred_fallthru
      _
    // Predicated region
    $region26: #{cti_forward.13} parent=1 // pred_check
      _
    $region27: #{cti_forward.13} parent=1 // pred_check_branch
      %79 = sbr.rel (0) target = $region29
    $region28: #{cti_forward.13} parent=1 // pred_region
      %81 = dma.done [#allocation5], 256
    $region29: #{cti_forward.13} parent=1 // pred_fallthru
      _
    // Predicated region
    $region30: #{cti_forward.13} parent=1 // pred_check
      _
    $region31: #{cti_forward.13} parent=1 // pred_check_branch
      %83 = sbr.rel (0) target = $region33
    $region32: #{cti_forward.13} parent=1 // pred_region
      %85 = dma.done [#allocation5], 16
    $region33: #{cti_forward.13} parent=1 // pred_fallthru
      _
    // Predicated region
    $region34: #{cti_forward.13} parent=1 // pred_check
      _
    $region35: #{cti_forward.13} parent=1 // pred_check_branch
      %87 = sbr.rel (0) target = $region37
    $region36: #{cti_forward.13} parent=1 // pred_region
      %89 = dma.done [#allocation8], 512
    $region37: #{cti_forward.13} parent=1 // pred_fallthru
      _
    // Predicated region
    $region38: #{cti_forward.13} parent=1 // pred_check
      _
    $region39: #{cti_forward.13} parent=1 // pred_check_branch
      %91 = sbr.rel (0) target = $region41
    $region40: #{cti_forward.13} parent=1 // pred_region
      %93 = dma.done [#allocation8], 16
    $region41: #{cti_forward.13} parent=1 // pred_fallthru
      _
    %v94 = vld [vmem:[#allocation2] sm:$0xff]
    %v95 = vld [vmem:[#allocation2 + $0x8] sm:$0xff]
    %v96 = vld [vmem:[#allocation4] sm:$0xff]
    %v97 = vld [vmem:[#allocation4 + $0x8] sm:$0xff]
    %v98 = vld [vmem:[#allocation6] sm:$0x1]
    %v100 = vperm.slane %v98, 0
    %vm102 = vcmask 130048
    %v104 = vsel %vm102, %v94, 0
    %v107 = vsel %vm102, %v95, 0
    %109 = vmatpush.msra.mxu0 0.0
    %110 = vmatpush.msra.mxu0 0.0
    %111 = vmatpush.msra.mxu0 0.0
    %112 = vmatpush.msra.mxu0 0.0
    %113 = vmatpush.msra.mxu0 0.0
    %114 = vmatpush.msra.mxu0 0.0
    %115 = vmatpush.msra.mxu0 0.0
    %116 = vmatpush.msra.mxu0 0.0
    %117 = vmatpush.msra.mxu0 0.0
    %118 = vmatpush.msra.mxu0 0.0
    %119 = vmatpush.msra.mxu0 0.0
    %120 = vmatpush.msra.mxu0 0.0
    %121 = vmatpush.msra.mxu0 0.0
    %122 = vmatpush.msra.mxu0 0.0
    %123 = vmatpush.msra.mxu0 %v97
    %124 = vmatpush.msra.mxu0 %v96
    %125 = vmatmul.f32.gmra.mxu0 %v104
    %v126 = vpop.f32.mrf.mxu0
    %v127 = vadd.f32 %v100, %v126
    %128 = vmatmul.f32.gmra.mxu0 %v107
    %v129 = vpop.f32.mrf.mxu0
    %v130 = vadd.f32 %v100, %v129
    %131 = vdwg.mxu0
    %v132 = vmax.f32 %v127, 0.0
    %v133 = vmax.f32 %v130, 0.0
    %v134 = vld [vmem:[#allocation7] sm:$0xff]
    %v135 = vld [vmem:[#allocation7 + $0x8] sm:$0xff]
    %v136 = vld [vmem:[#allocation7 + $0x10] sm:$0xff]
    %v137 = vld [vmem:[#allocation7 + $0x18] sm:$0xff]
    %v138 = vld [vmem:[#allocation9] sm:$0x1]
    %v140 = vperm.slane %v138, 0
    %vm142 = vcmask 261120
    %v144 = vsel %vm142, %v132, 0
    %v147 = vsel %vm142, %v133, 0
    %149 = vmatpush.msra.mxu0 0.0
    %150 = vmatpush.msra.mxu0 0.0
    %151 = vmatpush.msra.mxu0 0.0
    %152 = vmatpush.msra.mxu0 0.0
    %153 = vmatpush.msra.mxu0 0.0
    %154 = vmatpush.msra.mxu0 0.0
    %155 = vmatpush.msra.mxu0 0.0
    %156 = vmatpush.msra.mxu0 0.0
    %157 = vmatpush.msra.mxu0 0.0
    %158 = vmatpush.msra.mxu0 0.0
    %159 = vmatpush.msra.mxu0 0.0
    %160 = vmatpush.msra.mxu0 0.0
    %161 = vmatpush.msra.mxu0 %v137
    %162 = vmatpush.msra.mxu0 %v136
    %163 = vmatpush.msra.mxu0 %v135
    %164 = vmatpush.msra.mxu0 %v134
    %165 = vmatmul.f32.gmra.mxu0 %v144
    %v166 = vpop.f32.mrf.mxu0
    %v167 = vadd.f32 %v140, %v166
    %168 = vmatmul.f32.gmra.mxu0 %v147
    %v169 = vpop.f32.mrf.mxu0
    %v170 = vadd.f32 %v140, %v169
    %171 = vdwg.mxu0
    %v172 = vmax.f32 %v167, 0.0
    %v173 = vmax.f32 %v170, 0.0
    %174 = vst.msk [vmem:[%s5] sm:$0xff] %vm142, %v172
    %175 = vst.msk [vmem:[%s5 + $0x8] sm:$0xff] %vm142, %v173
    // Predicated region
    $region42: #{cti_forward.13} parent=1 // pred_check
      _
    $region43: #{cti_forward.13} parent=1 // pred_check_branch
      %177 = sbr.rel (0) target = $region45
    $region44: #{cti_forward.13} parent=1 // pred_region
      _
    $region45: #{cti_forward.13} parent=1 // pred_fallthru
      _
    // Predicated region
    $region46: #{cti_forward.13} parent=1 // pred_check
      _
    $region47: #{cti_forward.13} parent=1 // pred_check_branch
      %179 = sbr.rel (0) target = $region49
    $region48: #{cti_forward.13} parent=1 // pred_region
      _
    $region49: #{cti_forward.13} parent=1 // pred_fallthru
      _
    %180 = vsyncpa [#allocation3], 1
    %181 = vsyncpa [#allocation5], 1
    %182 = vsyncpa [#allocation8], 1

// kernel: cti_forward.21
$region0: #{cti_forward.21}
  #allocation0 [shape = 'u32[]', space=smem, size = 0x4, offset = 0x4, fixed_abs, tag = 'smem constant byte address 0x4 - core index']
  #allocation1 [shape = 'u32[72,128]{1,0:T(1,128)}', space=vmem, size = 0x9000, scoped, tag = 'internal scratch']
  %s0 = inlined_call_operand.hbm [shape: f32[16,16], index: 0, kind: input, shape index: {}]
  %s1 = inlined_call_operand.hbm [shape: f32[16,64], index: 1, kind: input, shape index: {}]
  %s2 = inlined_call_operand.hbm [shape: f32[1,64], index: 2, kind: input, shape index: {}]
  %s3 = inlined_call_operand.vmem [shape: f32[16,64], index: 3, kind: output, shape index: {}]
  %s4 = sld [smem:[#allocation0]]
  $region34: #{cti_forward.21} parent=0
    _
  %s6 = ssub.s32 1, %s4
  %s7 = scalar_select 0, %s6, %s4
  $region1: #{cti_forward.21} parent=0
    #allocation2 [shape = 'u8[8192]{0}', space=vmem, size = 0x2000, scoped, tag = 'input window, operand 0, single buffered']
    #allocation3 [shape = 's32[1]{0}', space=sflag, size = 0x4, scoped, tag = 'scoped memory for cti_forward.21']
    #allocation4 [shape = 'u8[8192]{0}', space=vmem, size = 0x2000, scoped, tag = 'input window, operand 1, single buffered']
    #allocation5 [shape = 's32[1]{0}', space=sflag, size = 0x4, scoped, tag = 'scoped memory for cti_forward.21']
    #allocation6 [shape = 'u8[512]{0}', space=vmem, size = 0x400, scoped, tag = 'input window, operand 2, single buffered']
    %8 = vsyncpa [#allocation3], 0
    %9 = vsyncpa [#allocation5], 0
    // Predicated region
    $region2: #{cti_forward.21} parent=1 // pred_check
      _
    $region3: #{cti_forward.21} parent=1 // pred_check_branch
      %11 = sbr.rel (0) target = $region5
    $region4: #{cti_forward.21} parent=1 // pred_region
      %13 = vsyncadd [#allocation3], 0
      %s14 = sshll.u32 %s0, 4
      %s15 = int_to_ptr.hbm [resolvable:$true] %s14
      %s16 = sshll.u32 [#allocation2], 4
      %s17 = int_to_ptr.vmem [resolvable:$true] %s16
      %22 = dma.hbm_to_vmem [thread:$0]  %s15, 256, %s17, [#allocation3], 128, 128, 8
    $region5: #{cti_forward.21} parent=1 // pred_fallthru
      _
    // Predicated region
    $region6: #{cti_forward.21} parent=1 // pred_check
      _
    $region7: #{cti_forward.21} parent=1 // pred_check_branch
      %24 = sbr.rel (0) target = $region9
    $region8: #{cti_forward.21} parent=1 // pred_region
      %26 = vsyncadd [#allocation5], 0
      %s27 = sshll.u32 %s1, 4
      %s28 = int_to_ptr.hbm [resolvable:$true] %s27
      %s29 = sshll.u32 [#allocation4], 4
      %s30 = int_to_ptr.vmem [resolvable:$true] %s29
      %35 = dma.hbm_to_vmem [thread:$0]  %s28, 256, %s30, [#allocation5], 128, 128, 8
    $region9: #{cti_forward.21} parent=1 // pred_fallthru
      _
    // Predicated region
    $region10: #{cti_forward.21} parent=1 // pred_check
      _
    $region11: #{cti_forward.21} parent=1 // pred_check_branch
      %37 = sbr.rel (0) target = $region13
    $region12: #{cti_forward.21} parent=1 // pred_region
      %39 = vsyncadd [#allocation5], 0
      %s41 = sshll.u32 %s2, 4
      %s42 = int_to_ptr.hbm [resolvable:$true] %s41
      %s43 = sshll.u32 [#allocation6], 4
      %s44 = int_to_ptr.vmem [resolvable:$true] %s43
      %46 = dma.hbm_to_vmem [thread:$0]  %s42, 16, %s44, [#allocation5]
    $region13: #{cti_forward.21} parent=1 // pred_fallthru
      _
    // Predicated region
    $region14: #{cti_forward.21} parent=1 // pred_check
      _
    $region15: #{cti_forward.21} parent=1 // pred_check_branch
      %48 = sbr.rel (0) target = $region17
    $region16: #{cti_forward.21} parent=1 // pred_region
      %50 = dma.done [#allocation3], 256
    $region17: #{cti_forward.21} parent=1 // pred_fallthru
      _
    // Predicated region
    $region18: #{cti_forward.21} parent=1 // pred_check
      _
    $region19: #{cti_forward.21} parent=1 // pred_check_branch
      %52 = sbr.rel (0) target = $region21
    $region20: #{cti_forward.21} parent=1 // pred_region
      %54 = dma.done [#allocation5], 256
    $region21: #{cti_forward.21} parent=1 // pred_fallthru
      _
    // Predicated region
    $region22: #{cti_forward.21} parent=1 // pred_check
      _
    $region23: #{cti_forward.21} parent=1 // pred_check_branch
      %56 = sbr.rel (0) target = $region25
    $region24: #{cti_forward.21} parent=1 // pred_region
      %58 = dma.done [#allocation5], 16
    $region25: #{cti_forward.21} parent=1 // pred_fallthru
      _
    %v59 = vld [vmem:[#allocation2] sm:$0xff]
    %v60 = vld [vmem:[#allocation2 + $0x8] sm:$0xff]
    %v61 = vld [vmem:[#allocation4] sm:$0xff]
    %v62 = vld [vmem:[#allocation4 + $0x8] sm:$0xff]
    %v63 = vld [vmem:[#allocation6] sm:$0x1]
    %v65 = vperm.slane %v63, 0
    %vm67 = vcmask 130048
    %v69 = vsel %vm67, %v59, 0
    %v72 = vsel %vm67, %v60, 0
    %74 = vmatpush.msra.mxu0 0.0
    %75 = vmatpush.msra.mxu0 0.0
    %76 = vmatpush.msra.mxu0 0.0
    %77 = vmatpush.msra.mxu0 0.0
    %78 = vmatpush.msra.mxu0 0.0
    %79 = vmatpush.msra.mxu0 0.0
    %80 = vmatpush.msra.mxu0 0.0
    %81 = vmatpush.msra.mxu0 0.0
    %82 = vmatpush.msra.mxu0 0.0
    %83 = vmatpush.msra.mxu0 0.0
    %84 = vmatpush.msra.mxu0 0.0
    %85 = vmatpush.msra.mxu0 0.0
    %86 = vmatpush.msra.mxu0 0.0
    %87 = vmatpush.msra.mxu0 0.0
    %88 = vmatpush.msra.mxu0 %v62
    %89 = vmatpush.msra.mxu0 %v61
    %90 = vmatmul.f32.gmra.mxu0 %v69
    %v91 = vpop.f32.mrf.mxu0
    %v92 = vadd.f32 %v65, %v91
    %93 = vmatmul.f32.gmra.mxu0 %v72
    %v94 = vpop.f32.mrf.mxu0
    %v95 = vadd.f32 %v65, %v94
    %96 = vdwg.mxu0
    %v97 = vmax.f32 %v92, 0.0
    %v98 = vmax.f32 %v95, 0.0
    %vm99 = vcmask 523264
    %100 = vst.msk [vmem:[%s3] sm:$0xff] %vm99, %v97
    %101 = vst.msk [vmem:[%s3 + $0x8] sm:$0xff] %vm99, %v98
    // Predicated region
    $region26: #{cti_forward.21} parent=1 // pred_check
      _
    $region27: #{cti_forward.21} parent=1 // pred_check_branch
      %103 = sbr.rel (0) target = $region29
    $region28: #{cti_forward.21} parent=1 // pred_region
      _
    $region29: #{cti_forward.21} parent=1 // pred_fallthru
      _
    // Predicated region
    $region30: #{cti_forward.21} parent=1 // pred_check
      _
    $region31: #{cti_forward.21} parent=1 // pred_check_branch
      %105 = sbr.rel (0) target = $region33
    $region32: #{cti_forward.21} parent=1 // pred_region
      _
    $region33: #{cti_forward.21} parent=1 // pred_fallthru
      _
    %106 = vsyncpa [#allocation3], 1
    %107 = vsyncpa [#allocation5], 1

// kernel: cti_forward.17
$region0: #{cti_forward.17}
  #allocation0 [shape = 'u32[]', space=smem, size = 0x4, offset = 0x4, fixed_abs, tag = 'smem constant byte address 0x4 - core index']
  #allocation1 [shape = 'u32[72,128]{1,0:T(1,128)}', space=vmem, size = 0x9000, scoped, tag = 'internal scratch']
  %s0 = inlined_call_operand.vmem [shape: f32[16,16], index: 0, kind: input, shape index: {}]
  %s1 = inlined_call_operand.hbm [shape: f32[2,16,64], index: 1, kind: input, shape index: {}]
  %s2 = inlined_call_operand.vmem [shape: f32[2,1,64], index: 2, kind: input, shape index: {}]
  %s3 = inlined_call_operand.vmem [shape: f32[2,16,64], index: 3, kind: output, shape index: {}]
  %s4 = sld [smem:[#allocation0]]
  $region49: #{cti_forward.17} parent=0
    _
  %s6 = ssub.s32 1, %s4
  %s7 = scalar_select 0, %s6, %s4
  $region1: #{cti_forward.17} parent=0
    #allocation2 [shape = 'u8[16384]{0}', space=vmem, size = 0x4000, scoped, tag = 'input window, operand 1']
    #allocation3 [shape = 's32[2]{0}', space=sflag, size = 0x8, scoped, tag = 'scoped memory for cti_forward.17']
    %8 = vsyncpa [#allocation3], 0
    %s9 = scalar_lea.sflag [#allocation3], 1
    %10 = vsyncpa %s9, 0
    loop: start=0, step=1, limit=4
    $region2: #{cti_forward.17} parent=1 // loop_pre_header
      _
    $region3: #{cti_forward.17} parent=1 // loop_header
      %s12 = sphi 0, %s16
      %p13 = scmp.ge.s32.totalorder %s12, 4
      %s19 = sphi 0, %s31
      %s20 = sphi 0, %s27
      %s21 = sphi 0, %s19
      %s22 = sphi 0, %s20
      %s23 = sphi 0, %s21
      %s24 = sphi 0, %s22
      %s34 = sphi 0, %s36
      %s37 = sphi 0, %s34
      %s38 = sphi 0, %s37
      %s54 = sphi 0, %s38
      %s60 = sphi 0, %s62
      %s63 = sphi 0, %s60
      %s64 = sphi 0, %s63
      %s80 = sphi 0, %s64
      %s86 = sphi 0, %s88
      %s89 = sphi 0, %s86
      %s90 = sphi 0, %s89
      %s106 = sphi 0, %s90
      %s114 = sphi 0, %s116
      %s117 = sphi 0, %s114
      %s118 = sphi 0, %s117
      %s134 = sphi 0, %s118
    $region4: #{cti_forward.17} parent=1 // loop_header_branch
      %15 = sbr.rel (%p13) target = $region8
    $region5: #{cti_forward.17} parent=1 // loop_body
      %s17 = ssub.s32 %s12, 1
      %s18 = ssub.s32 %s12, 2
      %s25 = sadd.s32 1, %s20
      %p26 = scmp.ge.s32.totalorder %s25, 1
      %s27 = scalar_select %p26, 0, %s25
      %s28 = sadd.s32 1, %s19
      %s29 = scalar_select %p26, %s28, %s19
      %p30 = scmp.ge.s32.totalorder %s29, 2
      %s31 = scalar_select %p30, 0, %s29
      %s32 = ssub.s32 %s20, %s27
      %p33 = scmp.eq.s32.totalorder %s32, 0
      %s35 = sadd.s32 %s34, 1
      %s36 = scalar_select %p33, %s34, %s35
      %p39 = pneg %p33
      %p40 = scmp.eq.s32.totalorder %s12, 1
      %p41 = por %p39, %p40
      %p42 = scmp.ne.s32.totalorder %s34, %s37
      %p43 = scmp.eq.s32.totalorder %s12, 0
      %p44 = por %p42, %p43
      %p45 = scmp.ne.s32.totalorder %s34, %s37
      %p46 = scmp.eq.s32.totalorder %s17, 1
      %p47 = por %p45, %p46
      %p48 = scmp.ne.s32.totalorder %s37, %s38
      %p49 = scmp.eq.s32.totalorder %s17, 0
      %p50 = por %p48, %p49
      %p51 = scmp.ne.s32.totalorder %s37, %s38
      %p52 = scmp.eq.s32.totalorder %s18, 1
      %p53 = por %p51, %p52
      %p55 = scmp.ne.s32.totalorder %s38, %s54
      %p56 = scmp.eq.s32.totalorder %s18, 0
      %p57 = por %p55, %p56
      %s58 = ssub.s32 %s19, %s31
      %p59 = scmp.eq.s32.totalorder %s58, 0
      %s61 = sadd.s32 %s60, 1
      %s62 = scalar_select %p59, %s60, %s61
      %p65 = pneg %p59
      %p66 = scmp.eq.s32.totalorder %s12, 1
      %p67 = por %p65, %p66
      %p68 = scmp.ne.s32.totalorder %s60, %s63
      %p69 = scmp.eq.s32.totalorder %s12, 0
      %p70 = por %p68, %p69
      %p71 = scmp.ne.s32.totalorder %s60, %s63
      %p72 = scmp.eq.s32.totalorder %s17, 1
      %p73 = por %p71, %p72
      %p74 = scmp.ne.s32.totalorder %s63, %s64
      %p75 = scmp.eq.s32.totalorder %s17, 0
      %p76 = por %p74, %p75
      %p77 = scmp.ne.s32.totalorder %s63, %s64
      %p78 = scmp.eq.s32.totalorder %s18, 1
      %p79 = por %p77, %p78
      %p81 = scmp.ne.s32.totalorder %s64, %s80
      %p82 = scmp.eq.s32.totalorder %s18, 0
      %p83 = por %p81, %p82
      %s84 = ssub.s32 %s19, %s31
      %p85 = scmp.eq.s32.totalorder %s84, 0
      %s87 = sadd.s32 %s86, 1
      %s88 = scalar_select %p85, %s86, %s87
      %p91 = pneg %p85
      %p92 = scmp.eq.s32.totalorder %s12, 1
      %p93 = por %p91, %p92
      %p94 = scmp.ne.s32.totalorder %s86, %s89
      %p95 = scmp.eq.s32.totalorder %s12, 0
      %p96 = por %p94, %p95
      %p97 = scmp.ne.s32.totalorder %s86, %s89
      %p98 = scmp.eq.s32.totalorder %s17, 1
      %p99 = por %p97, %p98
      %p100 = scmp.ne.s32.totalorder %s89, %s90
      %p101 = scmp.eq.s32.totalorder %s17, 0
      %p102 = por %p100, %p101
      %p103 = scmp.ne.s32.totalorder %s89, %s90
      %p104 = scmp.eq.s32.totalorder %s18, 1
      %p105 = por %p103, %p104
      %p107 = scmp.ne.s32.totalorder %s90, %s106
      %p108 = scmp.eq.s32.totalorder %s18, 0
      %p109 = por %p107, %p108
      %s110 = ssub.s32 %s19, %s31
      %s111 = ssub.s32 %s20, %s27
      %s112 = sor.u32 %s110, %s111
      %p113 = scmp.eq.s32.totalorder %s112, 0
      %s115 = sadd.s32 %s114, 1
      %s116 = scalar_select %p113, %s114, %s115
      %p119 = pneg %p113
      %p120 = scmp.eq.s32.totalorder %s12, 1
      %p121 = por %p119, %p120
      %p122 = scmp.ne.s32.totalorder %s114, %s117
      %p123 = scmp.eq.s32.totalorder %s12, 0
      %p124 = por %p122, %p123
      %p125 = scmp.ne.s32.totalorder %s114, %s117
      %p126 = scmp.eq.s32.totalorder %s17, 1
      %p127 = por %p125, %p126
      %p128 = scmp.ne.s32.totalorder %s117, %s118
      %p129 = scmp.eq.s32.totalorder %s17, 0
      %p130 = por %p128, %p129
      %p131 = scmp.ne.s32.totalorder %s117, %s118
      %p132 = scmp.eq.s32.totalorder %s18, 1
      %p133 = por %p131, %p132
      %p135 = scmp.ne.s32.totalorder %s118, %s134
      %p136 = scmp.eq.s32.totalorder %s18, 0
      %p137 = por %p135, %p136
      %p138 = scmp.le.s32.totalorder 1, %s12
      %p139 = scmp.lt.s32.totalorder %s12, 3
      %p140 = pnand %p138, %p139
      %p141 = pneg %p140
      // Predicated region
      $region9: #{cti_forward.17} parent=5 // pred_check
        _
      $region10: #{cti_forward.17} parent=5 // pred_check_branch
        %143 = sbr.rel (%p140) target = $region12
      $region11: #{cti_forward.17} parent=5 // pred_region
        %s144 = ssub.s32 %s12, 1
        // Predicated region
        $region13: #{cti_forward.17} parent=11 // pred_check
          %p145 = pneg %p50
        $region14: #{cti_forward.17} parent=11 // pred_check_branch
          %147 = sbr.rel (%p145) target = $region16
        $region15: #{cti_forward.17} parent=11 // pred_region
          %s148 = smul.u32 2, %s22
          %p149 = scmp.lt.s32.totalorder %s148, 1
          %s150 = scalar_select %p149, %s148, 1
          %s151 = smul.addr %s150, 8
          %s152 = scalar_lea.vmem %s0, %s151
          %s153 = smul.u32 2, %s22
        $region16: #{cti_forward.17} parent=11 // pred_fallthru
          _
      $region12: #{cti_forward.17} parent=5 // pred_fallthru
        _
      %p154 = scmp.lt.s32.totalorder %s12, 2
      // Predicated region
      $region17: #{cti_forward.17} parent=5 // pred_check
        %p155 = pneg %p154
      $region18: #{cti_forward.17} parent=5 // pred_check_branch
        %157 = sbr.rel (%p155) target = $region20
      $region19: #{cti_forward.17} parent=5 // pred_region
        // Predicated region
        $region21: #{cti_forward.17} parent=19 // pred_check
          %p158 = pneg %p70
        $region22: #{cti_forward.17} parent=19 // pred_check_branch
          %160 = sbr.rel (%p158) target = $region24
        $region23: #{cti_forward.17} parent=19 // pred_region
          %s161 = sand.u32 %s60, 1
          %s162 = scalar_lea.sflag [#allocation3], %s161
          %s163 = sand.u32 %s60, 1
          %s164 = smul.addr %s163, 16
          %s165 = scalar_lea.vmem [#allocation2], %s164
          %167 = vsyncadd %s162, 0
          %s168 = smul.addr %s19, 2
          %s169 = smul.addr %s168, 8
          %s170 = scalar_lea.hbm %s1, %s169
          %s171 = sshll.u32 %s170, 4
          %s172 = int_to_ptr.hbm [resolvable:$true] %s171
          %s173 = sshll.u32 %s165, 4
          %s174 = int_to_ptr.vmem [resolvable:$true] %s173
          %179 = dma.hbm_to_vmem [thread:$0]  %s172, 256, %s174, %s162, 128, 128, 8
        $region24: #{cti_forward.17} parent=19 // pred_fallthru
          _
        // Predicated region
        $region25: #{cti_forward.17} parent=19 // pred_check
          %p180 = pneg %p96
        $region26: #{cti_forward.17} parent=19 // pred_check_branch
          %182 = sbr.rel (%p180) target = $region28
        $region27: #{cti_forward.17} parent=19 // pred_region
          %p183 = scmp.lt.s32.totalorder %s19, 1
          %s184 = scalar_select %p183, %s19, 1
          %s185 = scalar_lea.vmem %s2, %s184
        $region28: #{cti_forward.17} parent=19 // pred_fallthru
          _
      $region20: #{cti_forward.17} parent=5 // pred_fallthru
        _
      %p186 = scmp.le.s32.totalorder 1, %s12
      %p187 = scmp.lt.s32.totalorder %s12, 3
      %p188 = pnand %p186, %p187
      %p189 = pneg %p188
      // Predicated region
      $region29: #{cti_forward.17} parent=5 // pred_check
        _
      $region30: #{cti_forward.17} parent=5 // pred_check_branch
        %191 = sbr.rel (%p188) target = $region32
      $region31: #{cti_forward.17} parent=5 // pred_region
        %s192 = ssub.s32 %s12, 1
        %s193 = sand.u32 %s63, 1
        %s194 = scalar_lea.sflag [#allocation3], %s193
        %s195 = sand.u32 %s63, 1
        %s196 = smul.addr %s195, 16
        %s197 = scalar_lea.vmem [#allocation2], %s196
        // Predicated region
        $region33: #{cti_forward.17} parent=31 // pred_check
          %p198 = pneg %p76
        $region34: #{cti_forward.17} parent=31 // pred_check_branch
          %200 = sbr.rel (%p198) target = $region36
        $region35: #{cti_forward.17} parent=31 // pred_region
          %202 = dma.done %s194, 256
        $region36: #{cti_forward.17} parent=31 // pred_fallthru
          _
        %s203 = smul.u32 2, %s22
        %p204 = scmp.lt.s32.totalorder %s203, 1
        %s205 = scalar_select %p204, %s203, 1
        %s206 = smul.addr %s205, 8
        %s207 = scalar_lea.vmem %s0, %s206
        %p208 = pneg %p50
        %p209 = pneg %p47
        %s210 = sand.u32 %s63, 1
        %s211 = scalar_lea.sflag [#allocation3], %s210
        %s212 = sand.u32 %s63, 1
        %s213 = smul.addr %s212, 16
        %s214 = scalar_lea.vmem [#allocation2], %s213
        %p215 = pneg %p76
        %p216 = pneg %p73
        %p217 = scmp.lt.s32.totalorder %s21, 1
        %s218 = scalar_select %p217, %s21, 1
        %s219 = scalar_lea.vmem %s2, %s218
        %p220 = pneg %p102
        %p221 = pneg %p99
        %p222 = pneg %p130
        %p223 = pneg %p127
        %s224 = smul.u32 2, %s22
        %p225 = scmp.lt.s32.totalorder %s21, 1
        %s226 = scalar_select %p225, %s21, 1
        %p227 = scmp.lt.s32.totalorder %s224, 1
        %s228 = scalar_select %p227, %s224, 1
        %s229 = smul.addr %s226, 2
        %s230 = sadd.s32 %s228, %s229
        %s231 = smul.addr %s230, 8
        %s232 = scalar_lea.vmem %s3, %s231
        %s233 = smul.u32 2, %s22
        %p234 = scmp.lt.s32.totalorder %s233, 1
        %s235 = scalar_select %p234, %s233, 1
        %s236 = smul.addr %s235, 8
        %s237 = scalar_lea.vmem %s0, %s236
        %s238 = smul.u32 2, %s22
        %p239 = scmp.lt.s32.totalorder %s21, 1
        %s240 = scalar_select %p239, %s21, 1
        %s241 = scalar_lea.vmem %s2, %s240
        %s242 = smul.u32 2, %s22
        %p243 = scmp.lt.s32.totalorder %s21, 1
        %s244 = scalar_select %p243, %s21, 1
        %p245 = scmp.lt.s32.totalorder %s242, 1
        %s246 = scalar_select %p245, %s242, 1
        %s247 = smul.addr %s244, 2
        %s248 = sadd.s32 %s246, %s247
        %s249 = smul.addr %s248, 8
        %s250 = scalar_lea.vmem %s3, %s249
        %s251 = smul.u32 2, %s22
        %v252 = vld [vmem:[%s237] sm:$0xff]
        %v253 = vld [vmem:[%s237 + $0x8] sm:$0xff]
        %v254 = vld [vmem:[%s197] sm:$0xff]
        %v255 = vld [vmem:[%s197 + $0x8] sm:$0xff]
        %v256 = vld [vmem:[%s241] sm:$0x1]
        %v258 = vperm.slane %v256, 0
        %vm260 = vcmask 130048
        %v262 = vsel %vm260, %v252, 0
        %v265 = vsel %vm260, %v253, 0
        %267 = vmatpush.msra.mxu0 0.0
        %268 = vmatpush.msra.mxu0 0.0
        %269 = vmatpush.msra.mxu0 0.0
        %270 = vmatpush.msra.mxu0 0.0
        %271 = vmatpush.msra.mxu0 0.0
        %272 = vmatpush.msra.mxu0 0.0
        %273 = vmatpush.msra.mxu0 0.0
        %274 = vmatpush.msra.mxu0 0.0
        %275 = vmatpush.msra.mxu0 0.0
        %276 = vmatpush.msra.mxu0 0.0
        %277 = vmatpush.msra.mxu0 0.0
        %278 = vmatpush.msra.mxu0 0.0
        %279 = vmatpush.msra.mxu0 0.0
        %280 = vmatpush.msra.mxu0 0.0
        %281 = vmatpush.msra.mxu0 %v255
        %282 = vmatpush.msra.mxu0 %v254
        %283 = vmatmul.f32.gmra.mxu0 %v262
        %v284 = vpop.f32.mrf.mxu0
        %v285 = vadd.f32 %v258, %v284
        %286 = vmatmul.f32.gmra.mxu0 %v265
        %v287 = vpop.f32.mrf.mxu0
        %v288 = vadd.f32 %v258, %v287
        %289 = vdwg.mxu0
        %v290 = vmax.f32 %v285, 0.0
        %v291 = vmax.f32 %v288, 0.0
        %vm292 = vcmask 523264
        %293 = vst.msk [vmem:[%s250] sm:$0xff] %vm292, %v290
        %294 = vst.msk [vmem:[%s250 + $0x8] sm:$0xff] %vm292, %v291
        %s295 = smul.u32 2, %s22
        %p296 = scmp.lt.s32.totalorder %s21, 1
        %s297 = scalar_select %p296, %s21, 1
        %p298 = scmp.lt.s32.totalorder %s295, 1
        %s299 = scalar_select %p298, %s295, 1
        %s300 = smul.addr %s297, 2
        %s301 = sadd.s32 %s299, %s300
        %s302 = smul.addr %s301, 8
        %s303 = scalar_lea.vmem %s3, %s302
        // Predicated region
        $region37: #{cti_forward.17} parent=31 // pred_check
          %p304 = pneg %p127
        $region38: #{cti_forward.17} parent=31 // pred_check_branch
          %306 = sbr.rel (%p304) target = $region40
        $region39: #{cti_forward.17} parent=31 // pred_region
          %s307 = smul.u32 2, %s22
        $region40: #{cti_forward.17} parent=31 // pred_fallthru
          _
      $region32: #{cti_forward.17} parent=5 // pred_fallthru
        _
      %p308 = scmp.le.s32.totalorder 2, %s12
      // Predicated region
      $region41: #{cti_forward.17} parent=5 // pred_check
        %p309 = pneg %p308
      $region42: #{cti_forward.17} parent=5 // pred_check_branch
        %311 = sbr.rel (%p309) target = $region44
      $region43: #{cti_forward.17} parent=5 // pred_region
        %s312 = ssub.s32 %s12, 2
        // Predicated region
        $region45: #{cti_forward.17} parent=43 // pred_check
          %p313 = pneg %p133
        $region46: #{cti_forward.17} parent=43 // pred_check_branch
          %315 = sbr.rel (%p313) target = $region48
        $region47: #{cti_forward.17} parent=43 // pred_region
          %s316 = smul.u32 2, %s24
          %p317 = scmp.lt.s32.totalorder %s23, 1
          %s318 = scalar_select %p317, %s23, 1
          %p319 = scmp.lt.s32.totalorder %s316, 1
          %s320 = scalar_select %p319, %s316, 1
          %s321 = smul.addr %s318, 2
          %s322 = sadd.s32 %s320, %s321
          %s323 = smul.addr %s322, 8
          %s324 = scalar_lea.vmem %s3, %s323
        $region48: #{cti_forward.17} parent=43 // pred_fallthru
          _
      $region44: #{cti_forward.17} parent=5 // pred_fallthru
        _
    $region6: #{cti_forward.17} parent=1 // loop_footer
      %s16 = sadd.s32 1, %s12
    $region7: #{cti_forward.17} parent=1 // loop_footer_branch
      %11 = sbr.rel target = $region3
    $region8: #{cti_forward.17} parent=1 // loop_exit
      _
    %325 = vsyncpa [#allocation3], 1
    %s326 = scalar_lea.sflag [#allocation3], 1
    %327 = vsyncpa %s326, 1

// kernel: cti_forward.16
$region0: #{cti_forward.16}
  #allocation0 [shape = 'u32[]', space=smem, size = 0x4, offset = 0x4, fixed_abs, tag = 'smem constant byte address 0x4 - core index']
  #allocation1 [shape = 'u32[72,128]{1,0:T(1,128)}', space=vmem, size = 0x9000, scoped, tag = 'internal scratch']
  %s0 = inlined_call_operand.hbm [shape: f32[16,16], index: 0, kind: input, shape index: {}]
  %s1 = inlined_call_operand.hbm [shape: f32[2,16,64], index: 1, kind: input, shape index: {}]
  %s2 = inlined_call_operand.vmem [shape: f32[2,1,64], index: 2, kind: input, shape index: {}]
  %s3 = inlined_call_operand.vmem [shape: f32[2,16,64], index: 3, kind: output, shape index: {}]
  %s4 = sld [smem:[#allocation0]]
  $region53: #{cti_forward.16} parent=0
    _
  %s6 = ssub.s32 1, %s4
  %s7 = scalar_select 0, %s6, %s4
  $region1: #{cti_forward.16} parent=0
    #allocation2 [shape = 'u8[8192]{0}', space=vmem, size = 0x2000, scoped, tag = 'input window, operand 0, single buffered']
    #allocation3 [shape = 's32[2]{0}', space=sflag, size = 0x8, scoped, tag = 'scoped memory for cti_forward.16']
    #allocation4 [shape = 'u8[16384]{0}', space=vmem, size = 0x4000, scoped, tag = 'input window, operand 1']
    #allocation5 [shape = 's32[2]{0}', space=sflag, size = 0x8, scoped, tag = 'scoped memory for cti_forward.16']
    %8 = vsyncpa [#allocation3], 0
    %9 = vsyncpa [#allocation5], 0
    %s10 = scalar_lea.sflag [#allocation5], 1
    %11 = vsyncpa %s10, 0
    loop: start=0, step=1, limit=4
    $region2: #{cti_forward.16} parent=1 // loop_pre_header
      _
    $region3: #{cti_forward.16} parent=1 // loop_header
      %s13 = sphi 0, %s17
      %p14 = scmp.ge.s32.totalorder %s13, 4
      %s20 = sphi 0, %s32
      %s21 = sphi 0, %s28
      %s22 = sphi 0, %s20
      %s23 = sphi 0, %s21
      %s24 = sphi 0, %s22
      %s25 = sphi 0, %s23
      %s35 = sphi 0, %s37
      %s38 = sphi 0, %s35
      %s39 = sphi 0, %s38
      %s55 = sphi 0, %s39
      %s61 = sphi 0, %s63
      %s64 = sphi 0, %s61
      %s65 = sphi 0, %s64
      %s81 = sphi 0, %s65
      %s87 = sphi 0, %s89
      %s90 = sphi 0, %s87
      %s91 = sphi 0, %s90
      %s107 = sphi 0, %s91
      %s115 = sphi 0, %s117
      %s118 = sphi 0, %s115
      %s119 = sphi 0, %s118
      %s135 = sphi 0, %s119
    $region4: #{cti_forward.16} parent=1 // loop_header_branch
      %16 = sbr.rel (%p14) target = $region8
    $region5: #{cti_forward.16} parent=1 // loop_body
      %s18 = ssub.s32 %s13, 1
      %s19 = ssub.s32 %s13, 2
      %s26 = sadd.s32 1, %s21
      %p27 = scmp.ge.s32.totalorder %s26, 1
      %s28 = scalar_select %p27, 0, %s26
      %s29 = sadd.s32 1, %s20
      %s30 = scalar_select %p27, %s29, %s20
      %p31 = scmp.ge.s32.totalorder %s30, 2
      %s32 = scalar_select %p31, 0, %s30
      %s33 = ssub.s32 %s21, %s28
      %p34 = scmp.eq.s32.totalorder %s33, 0
      %s36 = sadd.s32 %s35, 1
      %s37 = scalar_select %p34, %s35, %s36
      %p40 = pneg %p34
      %p41 = scmp.eq.s32.totalorder %s13, 1
      %p42 = por %p40, %p41
      %p43 = scmp.ne.s32.totalorder %s35, %s38
      %p44 = scmp.eq.s32.totalorder %s13, 0
      %p45 = por %p43, %p44
      %p46 = scmp.ne.s32.totalorder %s35, %s38
      %p47 = scmp.eq.s32.totalorder %s18, 1
      %p48 = por %p46, %p47
      %p49 = scmp.ne.s32.totalorder %s38, %s39
      %p50 = scmp.eq.s32.totalorder %s18, 0
      %p51 = por %p49, %p50
      %p52 = scmp.ne.s32.totalorder %s38, %s39
      %p53 = scmp.eq.s32.totalorder %s19, 1
      %p54 = por %p52, %p53
      %p56 = scmp.ne.s32.totalorder %s39, %s55
      %p57 = scmp.eq.s32.totalorder %s19, 0
      %p58 = por %p56, %p57
      %s59 = ssub.s32 %s20, %s32
      %p60 = scmp.eq.s32.totalorder %s59, 0
      %s62 = sadd.s32 %s61, 1
      %s63 = scalar_select %p60, %s61, %s62
      %p66 = pneg %p60
      %p67 = scmp.eq.s32.totalorder %s13, 1
      %p68 = por %p66, %p67
      %p69 = scmp.ne.s32.totalorder %s61, %s64
      %p70 = scmp.eq.s32.totalorder %s13, 0
      %p71 = por %p69, %p70
      %p72 = scmp.ne.s32.totalorder %s61, %s64
      %p73 = scmp.eq.s32.totalorder %s18, 1
      %p74 = por %p72, %p73
      %p75 = scmp.ne.s32.totalorder %s64, %s65
      %p76 = scmp.eq.s32.totalorder %s18, 0
      %p77 = por %p75, %p76
      %p78 = scmp.ne.s32.totalorder %s64, %s65
      %p79 = scmp.eq.s32.totalorder %s19, 1
      %p80 = por %p78, %p79
      %p82 = scmp.ne.s32.totalorder %s65, %s81
      %p83 = scmp.eq.s32.totalorder %s19, 0
      %p84 = por %p82, %p83
      %s85 = ssub.s32 %s20, %s32
      %p86 = scmp.eq.s32.totalorder %s85, 0
      %s88 = sadd.s32 %s87, 1
      %s89 = scalar_select %p86, %s87, %s88
      %p92 = pneg %p86
      %p93 = scmp.eq.s32.totalorder %s13, 1
      %p94 = por %p92, %p93
      %p95 = scmp.ne.s32.totalorder %s87, %s90
      %p96 = scmp.eq.s32.totalorder %s13, 0
      %p97 = por %p95, %p96
      %p98 = scmp.ne.s32.totalorder %s87, %s90
      %p99 = scmp.eq.s32.totalorder %s18, 1
      %p100 = por %p98, %p99
      %p101 = scmp.ne.s32.totalorder %s90, %s91
      %p102 = scmp.eq.s32.totalorder %s18, 0
      %p103 = por %p101, %p102
      %p104 = scmp.ne.s32.totalorder %s90, %s91
      %p105 = scmp.eq.s32.totalorder %s19, 1
      %p106 = por %p104, %p105
      %p108 = scmp.ne.s32.totalorder %s91, %s107
      %p109 = scmp.eq.s32.totalorder %s19, 0
      %p110 = por %p108, %p109
      %s111 = ssub.s32 %s20, %s32
      %s112 = ssub.s32 %s21, %s28
      %s113 = sor.u32 %s111, %s112
      %p114 = scmp.eq.s32.totalorder %s113, 0
      %s116 = sadd.s32 %s115, 1
      %s117 = scalar_select %p114, %s115, %s116
      %p120 = pneg %p114
      %p121 = scmp.eq.s32.totalorder %s13, 1
      %p122 = por %p120, %p121
      %p123 = scmp.ne.s32.totalorder %s115, %s118
      %p124 = scmp.eq.s32.totalorder %s13, 0
      %p125 = por %p123, %p124
      %p126 = scmp.ne.s32.totalorder %s115, %s118
      %p127 = scmp.eq.s32.totalorder %s18, 1
      %p128 = por %p126, %p127
      %p129 = scmp.ne.s32.totalorder %s118, %s119
      %p130 = scmp.eq.s32.totalorder %s18, 0
      %p131 = por %p129, %p130
      %p132 = scmp.ne.s32.totalorder %s118, %s119
      %p133 = scmp.eq.s32.totalorder %s19, 1
      %p134 = por %p132, %p133
      %p136 = scmp.ne.s32.totalorder %s119, %s135
      %p137 = scmp.eq.s32.totalorder %s19, 0
      %p138 = por %p136, %p137
      %p139 = scmp.le.s32.totalorder 1, %s13
      %p140 = scmp.lt.s32.totalorder %s13, 3
      %p141 = pnand %p139, %p140
      %p142 = pneg %p141
      // Predicated region
      $region9: #{cti_forward.16} parent=5 // pred_check
        _
      $region10: #{cti_forward.16} parent=5 // pred_check_branch
        %144 = sbr.rel (%p141) target = $region12
      $region11: #{cti_forward.16} parent=5 // pred_region
        %s145 = ssub.s32 %s13, 1
        // Predicated region
        $region13: #{cti_forward.16} parent=11 // pred_check
          %p146 = pneg %p51
        $region14: #{cti_forward.16} parent=11 // pred_check_branch
          %148 = sbr.rel (%p146) target = $region16
        $region15: #{cti_forward.16} parent=11 // pred_region
          %s149 = smul.u32 2, %s23
          %151 = vsyncadd [#allocation3], 0
          %s152 = smul.addr %s149, 8
          %s153 = scalar_lea.hbm %s0, %s152
          %s154 = sshll.u32 %s153, 4
          %s155 = int_to_ptr.hbm [resolvable:$true] %s154
          %s156 = sshll.u32 [#allocation2], 4
          %s157 = int_to_ptr.vmem [resolvable:$true] %s156
          %162 = dma.hbm_to_vmem [thread:$0]  %s155, 256, %s157, [#allocation3], 128, 128, 8
        $region16: #{cti_forward.16} parent=11 // pred_fallthru
          _
      $region12: #{cti_forward.16} parent=5 // pred_fallthru
        _
      %p163 = scmp.lt.s32.totalorder %s13, 2
      // Predicated region
      $region17: #{cti_forward.16} parent=5 // pred_check
        %p164 = pneg %p163
      $region18: #{cti_forward.16} parent=5 // pred_check_branch
        %166 = sbr.rel (%p164) target = $region20
      $region19: #{cti_forward.16} parent=5 // pred_region
        // Predicated region
        $region21: #{cti_forward.16} parent=19 // pred_check
          %p167 = pneg %p71
        $region22: #{cti_forward.16} parent=19 // pred_check_branch
          %169 = sbr.rel (%p167) target = $region24
        $region23: #{cti_forward.16} parent=19 // pred_region
          %s170 = sand.u32 %s61, 1
          %s171 = scalar_lea.sflag [#allocation5], %s170
          %s172 = sand.u32 %s61, 1
          %s173 = smul.addr %s172, 16
          %s174 = scalar_lea.vmem [#allocation4], %s173
          %176 = vsyncadd %s171, 0
          %s177 = smul.addr %s20, 2
          %s178 = smul.addr %s177, 8
          %s179 = scalar_lea.hbm %s1, %s178
          %s180 = sshll.u32 %s179, 4
          %s181 = int_to_ptr.hbm [resolvable:$true] %s180
          %s182 = sshll.u32 %s174, 4
          %s183 = int_to_ptr.vmem [resolvable:$true] %s182
          %188 = dma.hbm_to_vmem [thread:$0]  %s181, 256, %s183, %s171, 128, 128, 8
        $region24: #{cti_forward.16} parent=19 // pred_fallthru
          _
        // Predicated region
        $region25: #{cti_forward.16} parent=19 // pred_check
          %p189 = pneg %p97
        $region26: #{cti_forward.16} parent=19 // pred_check_branch
          %191 = sbr.rel (%p189) target = $region28
        $region27: #{cti_forward.16} parent=19 // pred_region
          %p192 = scmp.lt.s32.totalorder %s20, 1
          %s193 = scalar_select %p192, %s20, 1
          %s194 = scalar_lea.vmem %s2, %s193
        $region28: #{cti_forward.16} parent=19 // pred_fallthru
          _
      $region20: #{cti_forward.16} parent=5 // pred_fallthru
        _
      %p195 = scmp.le.s32.totalorder 1, %s13
      %p196 = scmp.lt.s32.totalorder %s13, 3
      %p197 = pnand %p195, %p196
      %p198 = pneg %p197
      // Predicated region
      $region29: #{cti_forward.16} parent=5 // pred_check
        _
      $region30: #{cti_forward.16} parent=5 // pred_check_branch
        %200 = sbr.rel (%p197) target = $region32
      $region31: #{cti_forward.16} parent=5 // pred_region
        %s201 = ssub.s32 %s13, 1
        // Predicated region
        $region33: #{cti_forward.16} parent=31 // pred_check
          %p202 = pneg %p51
        $region34: #{cti_forward.16} parent=31 // pred_check_branch
          %204 = sbr.rel (%p202) target = $region36
        $region35: #{cti_forward.16} parent=31 // pred_region
          %206 = dma.done [#allocation3], 256
        $region36: #{cti_forward.16} parent=31 // pred_fallthru
          _
        %s207 = sand.u32 %s64, 1
        %s208 = scalar_lea.sflag [#allocation5], %s207
        %s209 = sand.u32 %s64, 1
        %s210 = smul.addr %s209, 16
        %s211 = scalar_lea.vmem [#allocation4], %s210
        // Predicated region
        $region37: #{cti_forward.16} parent=31 // pred_check
          %p212 = pneg %p77
        $region38: #{cti_forward.16} parent=31 // pred_check_branch
          %214 = sbr.rel (%p212) target = $region40
        $region39: #{cti_forward.16} parent=31 // pred_region
          %216 = dma.done %s208, 256
        $region40: #{cti_forward.16} parent=31 // pred_fallthru
          _
        %p217 = pneg %p51
        %p218 = pneg %p48
        %s219 = sand.u32 %s64, 1
        %s220 = scalar_lea.sflag [#allocation5], %s219
        %s221 = sand.u32 %s64, 1
        %s222 = smul.addr %s221, 16
        %s223 = scalar_lea.vmem [#allocation4], %s222
        %p224 = pneg %p77
        %p225 = pneg %p74
        %p226 = scmp.lt.s32.totalorder %s22, 1
        %s227 = scalar_select %p226, %s22, 1
        %s228 = scalar_lea.vmem %s2, %s227
        %p229 = pneg %p103
        %p230 = pneg %p100
        %p231 = pneg %p131
        %p232 = pneg %p128
        %s233 = smul.u32 2, %s23
        %p234 = scmp.lt.s32.totalorder %s22, 1
        %s235 = scalar_select %p234, %s22, 1
        %p236 = scmp.lt.s32.totalorder %s233, 1
        %s237 = scalar_select %p236, %s233, 1
        %s238 = smul.addr %s235, 2
        %s239 = sadd.s32 %s237, %s238
        %s240 = smul.addr %s239, 8
        %s241 = scalar_lea.vmem %s3, %s240
        %s242 = smul.u32 2, %s23
        %p243 = scmp.lt.s32.totalorder %s22, 1
        %s244 = scalar_select %p243, %s22, 1
        %s245 = scalar_lea.vmem %s2, %s244
        %s246 = smul.u32 2, %s23
        %p247 = scmp.lt.s32.totalorder %s22, 1
        %s248 = scalar_select %p247, %s22, 1
        %p249 = scmp.lt.s32.totalorder %s246, 1
        %s250 = scalar_select %p249, %s246, 1
        %s251 = smul.addr %s248, 2
        %s252 = sadd.s32 %s250, %s251
        %s253 = smul.addr %s252, 8
        %s254 = scalar_lea.vmem %s3, %s253
        %s255 = smul.u32 2, %s23
        %v256 = vld [vmem:[#allocation2] sm:$0xff]
        %v257 = vld [vmem:[#allocation2 + $0x8] sm:$0xff]
        %v258 = vld [vmem:[%s211] sm:$0xff]
        %v259 = vld [vmem:[%s211 + $0x8] sm:$0xff]
        %v260 = vld [vmem:[%s245] sm:$0x1]
        %v262 = vperm.slane %v260, 0
        %vm264 = vcmask 130048
        %v266 = vsel %vm264, %v256, 0
        %v269 = vsel %vm264, %v257, 0
        %271 = vmatpush.msra.mxu0 0.0
        %272 = vmatpush.msra.mxu0 0.0
        %273 = vmatpush.msra.mxu0 0.0
        %274 = vmatpush.msra.mxu0 0.0
        %275 = vmatpush.msra.mxu0 0.0
        %276 = vmatpush.msra.mxu0 0.0
        %277 = vmatpush.msra.mxu0 0.0
        %278 = vmatpush.msra.mxu0 0.0
        %279 = vmatpush.msra.mxu0 0.0
        %280 = vmatpush.msra.mxu0 0.0
        %281 = vmatpush.msra.mxu0 0.0
        %282 = vmatpush.msra.mxu0 0.0
        %283 = vmatpush.msra.mxu0 0.0
        %284 = vmatpush.msra.mxu0 0.0
        %285 = vmatpush.msra.mxu0 %v259
        %286 = vmatpush.msra.mxu0 %v258
        %287 = vmatmul.f32.gmra.mxu0 %v266
        %v288 = vpop.f32.mrf.mxu0
        %v289 = vadd.f32 %v262, %v288
        %290 = vmatmul.f32.gmra.mxu0 %v269
        %v291 = vpop.f32.mrf.mxu0
        %v292 = vadd.f32 %v262, %v291
        %293 = vdwg.mxu0
        %v294 = vmax.f32 %v289, 0.0
        %v295 = vmax.f32 %v292, 0.0
        %vm296 = vcmask 523264
        %297 = vst.msk [vmem:[%s254] sm:$0xff] %vm296, %v294
        %298 = vst.msk [vmem:[%s254 + $0x8] sm:$0xff] %vm296, %v295
        %s299 = smul.u32 2, %s23
        %p300 = scmp.lt.s32.totalorder %s22, 1
        %s301 = scalar_select %p300, %s22, 1
        %p302 = scmp.lt.s32.totalorder %s299, 1
        %s303 = scalar_select %p302, %s299, 1
        %s304 = smul.addr %s301, 2
        %s305 = sadd.s32 %s303, %s304
        %s306 = smul.addr %s305, 8
        %s307 = scalar_lea.vmem %s3, %s306
        // Predicated region
        $region41: #{cti_forward.16} parent=31 // pred_check
          %p308 = pneg %p128
        $region42: #{cti_forward.16} parent=31 // pred_check_branch
          %310 = sbr.rel (%p308) target = $region44
        $region43: #{cti_forward.16} parent=31 // pred_region
          %s311 = smul.u32 2, %s23
        $region44: #{cti_forward.16} parent=31 // pred_fallthru
          _
      $region32: #{cti_forward.16} parent=5 // pred_fallthru
        _
      %p312 = scmp.le.s32.totalorder 2, %s13
      // Predicated region
      $region45: #{cti_forward.16} parent=5 // pred_check
        %p313 = pneg %p312
      $region46: #{cti_forward.16} parent=5 // pred_check_branch
        %315 = sbr.rel (%p313) target = $region48
      $region47: #{cti_forward.16} parent=5 // pred_region
        %s316 = ssub.s32 %s13, 2
        // Predicated region
        $region49: #{cti_forward.16} parent=47 // pred_check
          %p317 = pneg %p134
        $region50: #{cti_forward.16} parent=47 // pred_check_branch
          %319 = sbr.rel (%p317) target = $region52
        $region51: #{cti_forward.16} parent=47 // pred_region
          %s320 = smul.u32 2, %s25
          %p321 = scmp.lt.s32.totalorder %s24, 1
          %s322 = scalar_select %p321, %s24, 1
          %p323 = scmp.lt.s32.totalorder %s320, 1
          %s324 = scalar_select %p323, %s320, 1
          %s325 = smul.addr %s322, 2
          %s326 = sadd.s32 %s324, %s325
          %s327 = smul.addr %s326, 8
          %s328 = scalar_lea.vmem %s3, %s327
        $region52: #{cti_forward.16} parent=47 // pred_fallthru
          _
      $region48: #{cti_forward.16} parent=5 // pred_fallthru
        _
    $region6: #{cti_forward.16} parent=1 // loop_footer
      %s17 = sadd.s32 1, %s13
    $region7: #{cti_forward.16} parent=1 // loop_footer_branch
      %12 = sbr.rel target = $region3
    $region8: #{cti_forward.16} parent=1 // loop_exit
      _
    %329 = vsyncpa [#allocation3], 1
    %s330 = scalar_lea.sflag [#allocation3], 1
    %331 = vsyncpa %s330, 1
    %332 = vsyncpa [#allocation5], 1
    %s333 = scalar_lea.sflag [#allocation5], 1
    %334 = vsyncpa %s333, 1

// kernel: cti_forward.14
$region0: #{cti_forward.14}
  #allocation0 [shape = 'u32[]', space=smem, size = 0x4, offset = 0x4, fixed_abs, tag = 'smem constant byte address 0x4 - core index']
  #allocation1 [shape = 'u32[72,128]{1,0:T(1,128)}', space=vmem, size = 0x9000, scoped, tag = 'internal scratch']
  #allocation2 [shape = 'f32[64,256]{1,0:T(8,128)}', space=vmem, size = 0x10000, scoped, tag = 'scratch operand']
  %s0 = inlined_call_operand.vmem [shape: f32[2,8,32], index: 0, kind: input, shape index: {}]
  %s1 = inlined_call_operand.vmem [shape: f32[2,8,32], index: 1, kind: input, shape index: {}]
  %s2 = inlined_call_operand.vmem [shape: f32[2,8,32], index: 2, kind: input, shape index: {}]
  %s3 = inlined_call_operand.hbm [shape: f32[2,32,256], index: 3, kind: input, shape index: {}]
  %s4 = inlined_call_operand.hbm [shape: f32[64,8], index: 4, kind: input, shape index: {}]
  %s5 = inlined_call_operand.hbm [shape: f32[64,8], index: 5, kind: input, shape index: {}]
  %s6 = inlined_call_operand.hbm [shape: f32[32,256], index: 6, kind: input, shape index: {}]
  %s7 = inlined_call_operand.vmem [shape: f32[32,256], index: 7, kind: input, shape index: {}]
  %s8 = inlined_call_operand.vmem [shape: f32[2,2,64,8], index: 8, kind: output, shape index: {}]
  %s9 = sld [smem:[#allocation0]]
  $region85: #{cti_forward.14} parent=0
    _
  %s11 = ssub.s32 1, %s9
  %s12 = scalar_select 0, %s11, %s9
  $region1: #{cti_forward.14} parent=0
    #allocation3 [shape = 'u8[65536]{0}', space=vmem, size = 0x10000, scoped, tag = 'input window, operand 3']
    #allocation4 [shape = 's32[2]{0}', space=sflag, size = 0x8, scoped, tag = 'scoped memory for cti_forward.14']
    #allocation5 [shape = 'u8[32768]{0}', space=vmem, size = 0x8000, scoped, tag = 'input window, operand 4, single buffered']
    #allocation6 [shape = 's32[1]{0}', space=sflag, size = 0x4, scoped, tag = 'scoped memory for cti_forward.14']
    #allocation7 [shape = 'u8[32768]{0}', space=vmem, size = 0x8000, scoped, tag = 'input window, operand 5, single buffered']
    #allocation8 [shape = 'u8[32768]{0}', space=vmem, size = 0x8000, scoped, tag = 'input window, operand 6, single buffered']
    #allocation9 [shape = 's32[1]{0}', space=sflag, size = 0x4, scoped, tag = 'scoped memory for cti_forward.14']
    %13 = vsyncpa [#allocation4], 0
    %s14 = scalar_lea.sflag [#allocation4], 1
    %15 = vsyncpa %s14, 0
    %16 = vsyncpa [#allocation6], 0
    %17 = vsyncpa [#allocation9], 0
    loop: start=0, step=1, limit=6
    $region2: #{cti_forward.14} parent=1 // loop_pre_header
      _
    $region3: #{cti_forward.14} parent=1 // loop_header
      %s19 = sphi 0, %s23
      %p20 = scmp.ge.s32.totalorder %s19, 6
      %s26 = sphi 0, %s38
      %s27 = sphi 0, %s34
      %s28 = sphi 0, %s26
      %s29 = sphi 0, %s27
      %s30 = sphi 0, %s28
      %s31 = sphi 0, %s29
      %s41 = sphi 0, %s43
      %s44 = sphi 0, %s41
      %s45 = sphi 0, %s44
      %s61 = sphi 0, %s45
      %s67 = sphi 0, %s69
      %s70 = sphi 0, %s67
      %s71 = sphi 0, %s70
      %s87 = sphi 0, %s71
      %s93 = sphi 0, %s95
      %s96 = sphi 0, %s93
      %s97 = sphi 0, %s96
      %s113 = sphi 0, %s97
      %s119 = sphi 0, %s121
      %s122 = sphi 0, %s119
      %s123 = sphi 0, %s122
      %s139 = sphi 0, %s123
      %s143 = sphi 0, %s143
      %s145 = sphi 0, %s143
      %s146 = sphi 0, %s145
      %s160 = sphi 0, %s146
      %s164 = sphi 0, %s164
      %s166 = sphi 0, %s164
      %s167 = sphi 0, %s166
      %s181 = sphi 0, %s167
      %s185 = sphi 0, %s185
      %s187 = sphi 0, %s185
      %s188 = sphi 0, %s187
      %s202 = sphi 0, %s188
      %s206 = sphi 0, %s206
      %s208 = sphi 0, %s206
      %s209 = sphi 0, %s208
      %s223 = sphi 0, %s209
      %s231 = sphi 0, %s233
      %s234 = sphi 0, %s231
      %s235 = sphi 0, %s234
      %s251 = sphi 0, %s235
    $region4: #{cti_forward.14} parent=1 // loop_header_branch
      %22 = sbr.rel (%p20) target = $region8
    $region5: #{cti_forward.14} parent=1 // loop_body
      %s24 = ssub.s32 %s19, 1
      %s25 = ssub.s32 %s19, 2
      %s32 = sadd.s32 1, %s27
      %p33 = scmp.ge.s32.totalorder %s32, 2
      %s34 = scalar_select %p33, 0, %s32
      %s35 = sadd.s32 1, %s26
      %s36 = scalar_select %p33, %s35, %s26
      %p37 = scmp.ge.s32.totalorder %s36, 2
      %s38 = scalar_select %p37, 0, %s36
      %s39 = ssub.s32 %s26, %s38
      %p40 = scmp.eq.s32.totalorder %s39, 0
      %s42 = sadd.s32 %s41, 1
      %s43 = scalar_select %p40, %s41, %s42
      %p46 = pneg %p40
      %p47 = scmp.eq.s32.totalorder %s19, 3
      %p48 = por %p46, %p47
      %p49 = scmp.ne.s32.totalorder %s41, %s44
      %p50 = scmp.eq.s32.totalorder %s19, 0
      %p51 = por %p49, %p50
      %p52 = scmp.ne.s32.totalorder %s41, %s44
      %p53 = scmp.eq.s32.totalorder %s24, 3
      %p54 = por %p52, %p53
      %p55 = scmp.ne.s32.totalorder %s44, %s45
      %p56 = scmp.eq.s32.totalorder %s24, 0
      %p57 = por %p55, %p56
      %p58 = scmp.ne.s32.totalorder %s44, %s45
      %p59 = scmp.eq.s32.totalorder %s25, 3
      %p60 = por %p58, %p59
      %p62 = scmp.ne.s32.totalorder %s45, %s61
      %p63 = scmp.eq.s32.totalorder %s25, 0
      %p64 = por %p62, %p63
      %s65 = ssub.s32 %s26, %s38
      %p66 = scmp.eq.s32.totalorder %s65, 0
      %s68 = sadd.s32 %s67, 1
      %s69 = scalar_select %p66, %s67, %s68
      %p72 = pneg %p66
      %p73 = scmp.eq.s32.totalorder %s19, 3
      %p74 = por %p72, %p73
      %p75 = scmp.ne.s32.totalorder %s67, %s70
      %p76 = scmp.eq.s32.totalorder %s19, 0
      %p77 = por %p75, %p76
      %p78 = scmp.ne.s32.totalorder %s67, %s70
      %p79 = scmp.eq.s32.totalorder %s24, 3
      %p80 = por %p78, %p79
      %p81 = scmp.ne.s32.totalorder %s70, %s71
      %p82 = scmp.eq.s32.totalorder %s24, 0
      %p83 = por %p81, %p82
      %p84 = scmp.ne.s32.totalorder %s70, %s71
      %p85 = scmp.eq.s32.totalorder %s25, 3
      %p86 = por %p84, %p85
      %p88 = scmp.ne.s32.totalorder %s71, %s87
      %p89 = scmp.eq.s32.totalorder %s25, 0
      %p90 = por %p88, %p89
      %s91 = ssub.s32 %s26, %s38
      %p92 = scmp.eq.s32.totalorder %s91, 0
      %s94 = sadd.s32 %s93, 1
      %s95 = scalar_select %p92, %s93, %s94
      %p98 = pneg %p92
      %p99 = scmp.eq.s32.totalorder %s19, 3
      %p100 = por %p98, %p99
      %p101 = scmp.ne.s32.totalorder %s93, %s96
      %p102 = scmp.eq.s32.totalorder %s19, 0
      %p103 = por %p101, %p102
      %p104 = scmp.ne.s32.totalorder %s93, %s96
      %p105 = scmp.eq.s32.totalorder %s24, 3
      %p106 = por %p104, %p105
      %p107 = scmp.ne.s32.totalorder %s96, %s97
      %p108 = scmp.eq.s32.totalorder %s24, 0
      %p109 = por %p107, %p108
      %p110 = scmp.ne.s32.totalorder %s96, %s97
      %p111 = scmp.eq.s32.totalorder %s25, 3
      %p112 = por %p110, %p111
      %p114 = scmp.ne.s32.totalorder %s97, %s113
      %p115 = scmp.eq.s32.totalorder %s25, 0
      %p116 = por %p114, %p115
      %s117 = ssub.s32 %s27, %s34
      %p118 = scmp.eq.s32.totalorder %s117, 0
      %s120 = sadd.s32 %s119, 1
      %s121 = scalar_select %p118, %s119, %s120
      %p124 = pneg %p118
      %p125 = scmp.eq.s32.totalorder %s19, 3
      %p126 = por %p124, %p125
      %p127 = scmp.ne.s32.totalorder %s119, %s122
      %p128 = scmp.eq.s32.totalorder %s19, 0
      %p129 = por %p127, %p128
      %p130 = scmp.ne.s32.totalorder %s119, %s122
      %p131 = scmp.eq.s32.totalorder %s24, 3
      %p132 = por %p130, %p131
      %p133 = scmp.ne.s32.totalorder %s122, %s123
      %p134 = scmp.eq.s32.totalorder %s24, 0
      %p135 = por %p133, %p134
      %p136 = scmp.ne.s32.totalorder %s122, %s123
      %p137 = scmp.eq.s32.totalorder %s25, 3
      %p138 = por %p136, %p137
      %p140 = scmp.ne.s32.totalorder %s123, %s139
      %p141 = scmp.eq.s32.totalorder %s25, 0
      %p142 = por %p140, %p141
      %s144 = sadd.s32 %s143, 1
      %p147 = scmp.eq.s32.totalorder %s19, 3
      %p148 = scmp.ne.s32.totalorder %s143, %s145
      %p149 = scmp.eq.s32.totalorder %s19, 0
      %p150 = por %p148, %p149
      %p151 = scmp.ne.s32.totalorder %s143, %s145
      %p152 = scmp.eq.s32.totalorder %s24, 3
      %p153 = por %p151, %p152
      %p154 = scmp.ne.s32.totalorder %s145, %s146
      %p155 = scmp.eq.s32.totalorder %s24, 0
      %p156 = por %p154, %p155
      %p157 = scmp.ne.s32.totalorder %s145, %s146
      %p158 = scmp.eq.s32.totalorder %s25, 3
      %p159 = por %p157, %p158
      %p161 = scmp.ne.s32.totalorder %s146, %s160
      %p162 = scmp.eq.s32.totalorder %s25, 0
      %p163 = por %p161, %p162
      %s165 = sadd.s32 %s164, 1
      %p168 = scmp.eq.s32.totalorder %s19, 3
      %p169 = scmp.ne.s32.totalorder %s164, %s166
      %p170 = scmp.eq.s32.totalorder %s19, 0
      %p171 = por %p169, %p170
      %p172 = scmp.ne.s32.totalorder %s164, %s166
      %p173 = scmp.eq.s32.totalorder %s24, 3
      %p174 = por %p172, %p173
      %p175 = scmp.ne.s32.totalorder %s166, %s167
      %p176 = scmp.eq.s32.totalorder %s24, 0
      %p177 = por %p175, %p176
      %p178 = scmp.ne.s32.totalorder %s166, %s167
      %p179 = scmp.eq.s32.totalorder %s25, 3
      %p180 = por %p178, %p179
      %p182 = scmp.ne.s32.totalorder %s167, %s181
      %p183 = scmp.eq.s32.totalorder %s25, 0
      %p184 = por %p182, %p183
      %s186 = sadd.s32 %s185, 1
      %p189 = scmp.eq.s32.totalorder %s19, 3
      %p190 = scmp.ne.s32.totalorder %s185, %s187
      %p191 = scmp.eq.s32.totalorder %s19, 0
      %p192 = por %p190, %p191
      %p193 = scmp.ne.s32.totalorder %s185, %s187
      %p194 = scmp.eq.s32.totalorder %s24, 3
      %p195 = por %p193, %p194
      %p196 = scmp.ne.s32.totalorder %s187, %s188
      %p197 = scmp.eq.s32.totalorder %s24, 0
      %p198 = por %p196, %p197
      %p199 = scmp.ne.s32.totalorder %s187, %s188
      %p200 = scmp.eq.s32.totalorder %s25, 3
      %p201 = por %p199, %p200
      %p203 = scmp.ne.s32.totalorder %s188, %s202
      %p204 = scmp.eq.s32.totalorder %s25, 0
      %p205 = por %p203, %p204
      %s207 = sadd.s32 %s206, 1
      %p210 = scmp.eq.s32.totalorder %s19, 3
      %p211 = scmp.ne.s32.totalorder %s206, %s208
      %p212 = scmp.eq.s32.totalorder %s19, 0
      %p213 = por %p211, %p212
      %p214 = scmp.ne.s32.totalorder %s206, %s208
      %p215 = scmp.eq.s32.totalorder %s24, 3
      %p216 = por %p214, %p215
      %p217 = scmp.ne.s32.totalorder %s208, %s209
      %p218 = scmp.eq.s32.totalorder %s24, 0
      %p219 = por %p217, %p218
      %p220 = scmp.ne.s32.totalorder %s208, %s209
      %p221 = scmp.eq.s32.totalorder %s25, 3
      %p222 = por %p220, %p221
      %p224 = scmp.ne.s32.totalorder %s209, %s223
      %p225 = scmp.eq.s32.totalorder %s25, 0
      %p226 = por %p224, %p225
      %s227 = ssub.s32 %s26, %s38
      %s228 = ssub.s32 %s27, %s34
      %s229 = sor.u32 %s227, %s228
      %p230 = scmp.eq.s32.totalorder %s229, 0
      %s232 = sadd.s32 %s231, 1
      %s233 = scalar_select %p230, %s231, %s232
      %p236 = pneg %p230
      %p237 = scmp.eq.s32.totalorder %s19, 3
      %p238 = por %p236, %p237
      %p239 = scmp.ne.s32.totalorder %s231, %s234
      %p240 = scmp.eq.s32.totalorder %s19, 0
      %p241 = por %p239, %p240
      %p242 = scmp.ne.s32.totalorder %s231, %s234
      %p243 = scmp.eq.s32.totalorder %s24, 3
      %p244 = por %p242, %p243
      %p245 = scmp.ne.s32.totalorder %s234, %s235
      %p246 = scmp.eq.s32.totalorder %s24, 0
      %p247 = por %p245, %p246
      %p248 = scmp.ne.s32.totalorder %s234, %s235
      %p249 = scmp.eq.s32.totalorder %s25, 3
      %p250 = por %p248, %p249
      %p252 = scmp.ne.s32.totalorder %s235, %s251
      %p253 = scmp.eq.s32.totalorder %s25, 0
      %p254 = por %p252, %p253
      %p255 = scmp.le.s32.totalorder 1, %s19
      %p256 = scmp.lt.s32.totalorder %s19, 5
      %p257 = pnand %p255, %p256
      %p258 = pneg %p257
      // Predicated region
      $region9: #{cti_forward.14} parent=5 // pred_check
        _
      $region10: #{cti_forward.14} parent=5 // pred_check_branch
        %260 = sbr.rel (%p257) target = $region12
      $region11: #{cti_forward.14} parent=5 // pred_region
        %s261 = ssub.s32 %s19, 1
        // Predicated region
        $region13: #{cti_forward.14} parent=11 // pred_check
          %p262 = pneg %p156
        $region14: #{cti_forward.14} parent=11 // pred_check_branch
          %264 = sbr.rel (%p262) target = $region16
        $region15: #{cti_forward.14} parent=11 // pred_region
          %266 = vsyncadd [#allocation6], 0
          %s267 = sshll.u32 %s4, 4
          %s268 = int_to_ptr.hbm [resolvable:$true] %s267
          %s269 = sshll.u32 [#allocation5], 4
          %s270 = int_to_ptr.vmem [resolvable:$true] %s269
          %275 = dma.hbm_to_vmem [thread:$0]  %s268, 1024, %s270, [#allocation6], 128, 128, 8
        $region16: #{cti_forward.14} parent=11 // pred_fallthru
          _
        // Predicated region
        $region17: #{cti_forward.14} parent=11 // pred_check
          %p276 = pneg %p177
        $region18: #{cti_forward.14} parent=11 // pred_check_branch
          %278 = sbr.rel (%p276) target = $region20
        $region19: #{cti_forward.14} parent=11 // pred_region
          %280 = vsyncadd [#allocation6], 0
          %s281 = sshll.u32 %s5, 4
          %s282 = int_to_ptr.hbm [resolvable:$true] %s281
          %s283 = sshll.u32 [#allocation7], 4
          %s284 = int_to_ptr.vmem [resolvable:$true] %s283
          %289 = dma.hbm_to_vmem [thread:$0]  %s282, 1024, %s284, [#allocation6], 128, 128, 8
        $region20: #{cti_forward.14} parent=11 // pred_fallthru
          _
        // Predicated region
        $region21: #{cti_forward.14} parent=11 // pred_check
          %p290 = pneg %p198
        $region22: #{cti_forward.14} parent=11 // pred_check_branch
          %292 = sbr.rel (%p290) target = $region24
        $region23: #{cti_forward.14} parent=11 // pred_region
          %294 = vsyncadd [#allocation9], 0
          %s295 = sshll.u32 %s6, 4
          %s296 = int_to_ptr.hbm [resolvable:$true] %s295
          %s297 = sshll.u32 [#allocation8], 4
          %s298 = int_to_ptr.vmem [resolvable:$true] %s297
          %303 = dma.hbm_to_vmem [thread:$0]  %s296, 1024, %s298, [#allocation9], 256, 256, 16
        $region24: #{cti_forward.14} parent=11 // pred_fallthru
          _
        // Predicated region
        $region25: #{cti_forward.14} parent=11 // pred_check
          %p304 = pneg %p219
        $region26: #{cti_forward.14} parent=11 // pred_check_branch
          %306 = sbr.rel (%p304) target = $region28
        $region27: #{cti_forward.14} parent=11 // pred_region
          _
        $region28: #{cti_forward.14} parent=11 // pred_fallthru
          _
      $region12: #{cti_forward.14} parent=5 // pred_fallthru
        _
      %p307 = scmp.lt.s32.totalorder %s19, 4
      // Predicated region
      $region29: #{cti_forward.14} parent=5 // pred_check
        %p308 = pneg %p307
      $region30: #{cti_forward.14} parent=5 // pred_check_branch
        %310 = sbr.rel (%p308) target = $region32
      $region31: #{cti_forward.14} parent=5 // pred_region
        // Predicated region
        $region33: #{cti_forward.14} parent=31 // pred_check
          %p311 = pneg %p51
        $region34: #{cti_forward.14} parent=31 // pred_check_branch
          %313 = sbr.rel (%p311) target = $region36
        $region35: #{cti_forward.14} parent=31 // pred_region
          %p314 = scmp.lt.s32.totalorder %s26, 1
          %s315 = scalar_select %p314, %s26, 1
          %s316 = smul.addr %s315, 8
          %s317 = scalar_lea.vmem %s0, %s316
        $region36: #{cti_forward.14} parent=31 // pred_fallthru
          _
        // Predicated region
        $region37: #{cti_forward.14} parent=31 // pred_check
          %p318 = pneg %p77
        $region38: #{cti_forward.14} parent=31 // pred_check_branch
          %320 = sbr.rel (%p318) target = $region40
        $region39: #{cti_forward.14} parent=31 // pred_region
          %p321 = scmp.lt.s32.totalorder %s26, 1
          %s322 = scalar_select %p321, %s26, 1
          %s323 = smul.addr %s322, 8
          %s324 = scalar_lea.vmem %s1, %s323
        $region40: #{cti_forward.14} parent=31 // pred_fallthru
          _
        // Predicated region
        $region41: #{cti_forward.14} parent=31 // pred_check
          %p325 = pneg %p103
        $region42: #{cti_forward.14} parent=31 // pred_check_branch
          %327 = sbr.rel (%p325) target = $region44
        $region43: #{cti_forward.14} parent=31 // pred_region
          %p328 = scmp.lt.s32.totalorder %s26, 1
          %s329 = scalar_select %p328, %s26, 1
          %s330 = smul.addr %s329, 8
          %s331 = scalar_lea.vmem %s2, %s330
        $region44: #{cti_forward.14} parent=31 // pred_fallthru
          _
        // Predicated region
        $region45: #{cti_forward.14} parent=31 // pred_check
          %p332 = pneg %p129
        $region46: #{cti_forward.14} parent=31 // pred_check_branch
          %334 = sbr.rel (%p332) target = $region48
        $region47: #{cti_forward.14} parent=31 // pred_region
          %s335 = sand.u32 %s119, 1
          %s336 = scalar_lea.sflag [#allocation4], %s335
          %s337 = sand.u32 %s119, 1
          %s338 = smul.addr %s337, 64
          %s339 = scalar_lea.vmem [#allocation3], %s338
          %341 = vsyncadd %s336, 0
          %s342 = smul.addr %s27, 8
          %s343 = smul.addr %s342, 8
          %s344 = scalar_lea.hbm %s3, %s343
          %s345 = sshll.u32 %s344, 4
          %s346 = int_to_ptr.hbm [resolvable:$true] %s345
          %s347 = sshll.u32 %s339, 4
          %s348 = int_to_ptr.vmem [resolvable:$true] %s347
          %353 = dma.hbm_to_vmem [thread:$0]  %s346, 1024, %s348, %s336, 256, 256, 16
        $region48: #{cti_forward.14} parent=31 // pred_fallthru
          _
      $region32: #{cti_forward.14} parent=5 // pred_fallthru
        _
      %p354 = scmp.le.s32.totalorder 1, %s19
      %p355 = scmp.lt.s32.totalorder %s19, 5
      %p356 = pnand %p354, %p355
      %p357 = pneg %p356
      // Predicated region
      $region49: #{cti_forward.14} parent=5 // pred_check
        _
      $region50: #{cti_forward.14} parent=5 // pred_check_branch
        %359 = sbr.rel (%p356) target = $region52
      $region51: #{cti_forward.14} parent=5 // pred_region
        %s360 = ssub.s32 %s19, 1
        %s361 = sand.u32 %s122, 1
        %s362 = scalar_lea.sflag [#allocation4], %s361
        %s363 = sand.u32 %s122, 1
        %s364 = smul.addr %s363, 64
        %s365 = scalar_lea.vmem [#allocation3], %s364
        // Predicated region
        $region53: #{cti_forward.14} parent=51 // pred_check
          %p366 = pneg %p135
        $region54: #{cti_forward.14} parent=51 // pred_check_branch
          %368 = sbr.rel (%p366) target = $region56
        $region55: #{cti_forward.14} parent=51 // pred_region
          %370 = dma.done %s362, 1024
        $region56: #{cti_forward.14} parent=51 // pred_fallthru
          _
        // Predicated region
        $region57: #{cti_forward.14} parent=51 // pred_check
          %p371 = pneg %p156
        $region58: #{cti_forward.14} parent=51 // pred_check_branch
          %373 = sbr.rel (%p371) target = $region60
        $region59: #{cti_forward.14} parent=51 // pred_region
          %375 = dma.done [#allocation6], 1024
        $region60: #{cti_forward.14} parent=51 // pred_fallthru
          _
        // Predicated region
        $region61: #{cti_forward.14} parent=51 // pred_check
          %p376 = pneg %p177
        $region62: #{cti_forward.14} parent=51 // pred_check_branch
          %378 = sbr.rel (%p376) target = $region64
        $region63: #{cti_forward.14} parent=51 // pred_region
          %380 = dma.done [#allocation6], 1024
        $region64: #{cti_forward.14} parent=51 // pred_fallthru
          _
        // Predicated region
        $region65: #{cti_forward.14} parent=51 // pred_check
          %p381 = pneg %p198
        $region66: #{cti_forward.14} parent=51 // pred_check_branch
          %383 = sbr.rel (%p381) target = $region68
        $region67: #{cti_forward.14} parent=51 // pred_region
          %385 = dma.done [#allocation9], 1024
        $region68: #{cti_forward.14} parent=51 // pred_fallthru
          _
        %p386 = scmp.lt.s32.totalorder %s28, 1
        %s387 = scalar_select %p386, %s28, 1
        %s388 = smul.addr %s387, 8
        %s389 = scalar_lea.vmem %s0, %s388
        %p390 = pneg %p57
        %p391 = pneg %p54
        %p392 = scmp.lt.s32.totalorder %s28, 1
        %s393 = scalar_select %p392, %s28, 1
        %s394 = smul.addr %s393, 8
        %s395 = scalar_lea.vmem %s1, %s394
        %p396 = pneg %p83
        %p397 = pneg %p80
        %p398 = scmp.lt.s32.totalorder %s28, 1
        %s399 = scalar_select %p398, %s28, 1
        %s400 = smul.addr %s399, 8
        %s401 = scalar_lea.vmem %s2, %s400
        %p402 = pneg %p109
        %p403 = pneg %p106
        %s404 = sand.u32 %s122, 1
        %s405 = scalar_lea.sflag [#allocation4], %s404
        %s406 = sand.u32 %s122, 1
        %s407 = smul.addr %s406, 64
        %s408 = scalar_lea.vmem [#allocation3], %s407
        %p409 = pneg %p135
        %p410 = pneg %p132
        %p411 = pneg %p156
        %p412 = pneg %p153
        %p413 = pneg %p177
        %p414 = pneg %p174
        %p415 = pneg %p198
        %p416 = pneg %p195
        %p417 = pneg %p219
        %p418 = pneg %p216
        %p419 = pneg %p247
        %p420 = pneg %p244
        %p421 = scmp.lt.s32.totalorder %s28, 1
        %s422 = scalar_select %p421, %s28, 1
        %p423 = scmp.lt.s32.totalorder %s29, 1
        %s424 = scalar_select %p423, %s29, 1
        %s425 = smul.addr %s424, 8
        %s426 = smul.addr %s422, 16
        %s427 = sadd.s32 %s425, %s426
        %s428 = smul.addr %s427, 8
        %s429 = scalar_lea.vmem %s8, %s428
        %p430 = scmp.lt.s32.totalorder %s28, 1
        %s431 = scalar_select %p430, %s28, 1
        %s432 = smul.addr %s431, 8
        %s433 = scalar_lea.vmem %s0, %s432
        %p434 = scmp.lt.s32.totalorder %s28, 1
        %s435 = scalar_select %p434, %s28, 1
        %s436 = smul.addr %s435, 8
        %s437 = scalar_lea.vmem %s1, %s436
        %p438 = scmp.lt.s32.totalorder %s28, 1
        %s439 = scalar_select %p438, %s28, 1
        %s440 = smul.addr %s439, 8
        %s441 = scalar_lea.vmem %s2, %s440
        %p442 = scmp.lt.s32.totalorder %s28, 1
        %s443 = scalar_select %p442, %s28, 1
        %p444 = scmp.lt.s32.totalorder %s29, 1
        %s445 = scalar_select %p444, %s29, 1
        %s446 = smul.addr %s445, 8
        %s447 = smul.addr %s443, 16
        %s448 = sadd.s32 %s446, %s447
        %s449 = smul.addr %s448, 8
        %s450 = scalar_lea.vmem %s8, %s449
        %p451 = scmp.eq.s32.totalorder %s29, 0
        // Predicated region
        $region69: #{cti_forward.14} parent=51 // pred_check
          %p452 = pneg %p451
        $region70: #{cti_forward.14} parent=51 // pred_check_branch
          %454 = sbr.rel (%p452) target = $region72
        $region71: #{cti_forward.14} parent=51 // pred_region
          %v455 = vld [vmem:[#allocation5] sm:$0xff]
          %v456 = vld [vmem:[#allocation5 + $0x8] sm:$0xff]
          %v457 = vld [vmem:[#allocation5 + $0x10] sm:$0xff]
          %v458 = vld [vmem:[#allocation5 + $0x18] sm:$0xff]
          %v459 = vld [vmem:[#allocation5 + $0x20] sm:$0xff]
          %v460 = vld [vmem:[#allocation5 + $0x28] sm:$0xff]
          %v461 = vld [vmem:[#allocation5 + $0x30] sm:$0xff]
          %v462 = vld [vmem:[#allocation5 + $0x38] sm:$0xff]
          %v463 = vld [vmem:[%s437] sm:$0xff]
          %vm464 = vcmask 64512
          %v466 = vsel %vm464, %v455, 0
          %v469 = vsel %vm464, %v456, 0
          %v472 = vsel %vm464, %v457, 0
          %v475 = vsel %vm464, %v458, 0
          %v478 = vsel %vm464, %v459, 0
          %v481 = vsel %vm464, %v460, 0
          %v484 = vsel %vm464, %v461, 0
          %v487 = vsel %vm464, %v462, 0
          %489 = vmatpush.msra.mxu0 0.0
          %490 = vmatpush.msra.mxu0 0.0
          %491 = vmatpush.msra.mxu0 0.0
          %492 = vmatpush.msra.mxu0 0.0
          %493 = vmatpush.msra.mxu0 0.0
          %494 = vmatpush.msra.mxu0 0.0
          %495 = vmatpush.msra.mxu0 0.0
          %496 = vmatpush.msra.mxu0 0.0
          %497 = vmatpush.msra.mxu0 0.0
          %498 = vmatpush.msra.mxu0 0.0
          %499 = vmatpush.msra.mxu0 0.0
          %500 = vmatpush.msra.mxu0 0.0
          %501 = vmatpush.msra.mxu0 0.0
          %502 = vmatpush.msra.mxu0 0.0
          %503 = vmatpush.msra.mxu0 0.0
          %504 = vmatpush.msra.mxu0 %v463
          %505 = vmatmul.f32.gmra.mxu0 %v466
          %v506 = vpop.f32.mrf.mxu0
          %v507 = vadd.f32 0.0, %v506
          %508 = vmatmul.f32.gmra.mxu0 %v469
          %v509 = vpop.f32.mrf.mxu0
          %v510 = vadd.f32 0.0, %v509
          %511 = vmatmul.f32.gmra.mxu0 %v472
          %v512 = vpop.f32.mrf.mxu0
          %v513 = vadd.f32 0.0, %v512
          %514 = vmatmul.f32.gmra.mxu0 %v475
          %v515 = vpop.f32.mrf.mxu0
          %v516 = vadd.f32 0.0, %v515
          %517 = vmatmul.f32.gmra.mxu0 %v478
          %v518 = vpop.f32.mrf.mxu0
          %v519 = vadd.f32 0.0, %v518
          %520 = vmatmul.f32.gmra.mxu0 %v481
          %v521 = vpop.f32.mrf.mxu0
          %v522 = vadd.f32 0.0, %v521
          %523 = vmatmul.f32.gmra.mxu0 %v484
          %v524 = vpop.f32.mrf.mxu0
          %v525 = vadd.f32 0.0, %v524
          %526 = vmatmul.f32.gmra.mxu0 %v487
          %v527 = vpop.f32.mrf.mxu0
          %v528 = vadd.f32 0.0, %v527
          %529 = vdwg.mxu0
          %v530 = vld [vmem:[#allocation8] sm:$0xff]
          %v531 = vld [vmem:[#allocation8 + $0x8] sm:$0xff]
          %v532 = vld [vmem:[#allocation8 + $0x10] sm:$0xff]
          %v533 = vld [vmem:[#allocation8 + $0x18] sm:$0xff]
          %v534 = vld [vmem:[#allocation8 + $0x20] sm:$0xff]
          %v535 = vld [vmem:[#allocation8 + $0x28] sm:$0xff]
          %v536 = vld [vmem:[#allocation8 + $0x30] sm:$0xff]
          %v537 = vld [vmem:[#allocation8 + $0x38] sm:$0xff]
          %vm538 = vcmask 261120
          %v540 = vsel %vm538, %v507, 0
          %v543 = vsel %vm538, %v510, 0
          %v546 = vsel %vm538, %v513, 0
          %v549 = vsel %vm538, %v516, 0
          %v552 = vsel %vm538, %v519, 0
          %v555 = vsel %vm538, %v522, 0
          %v558 = vsel %vm538, %v525, 0
          %v561 = vsel %vm538, %v528, 0
          %563 = vmatpush.msra.mxu0 0.0
          %564 = vmatpush.msra.mxu0 0.0
          %565 = vmatpush.msra.mxu0 0.0
          %566 = vmatpush.msra.mxu0 0.0
          %567 = vmatpush.msra.mxu0 0.0
          %568 = vmatpush.msra.mxu0 0.0
          %569 = vmatpush.msra.mxu0 0.0
          %570 = vmatpush.msra.mxu0 0.0
          %571 = vmatpush.msra.mxu0 0.0
          %572 = vmatpush.msra.mxu0 0.0
          %573 = vmatpush.msra.mxu0 0.0
          %574 = vmatpush.msra.mxu0 0.0
          %575 = vmatpush.msra.mxu0 %v536
          %576 = vmatpush.msra.mxu0 %v534
          %577 = vmatpush.msra.mxu0 %v532
          %578 = vmatpush.msra.mxu0 %v530
          %579 = vmatmul.f32.gmra.mxu0 %v540
          %v580 = vpop.f32.mrf.mxu0
          %v581 = vadd.f32 0.0, %v580
          %582 = vmatmul.f32.gmra.mxu0 %v543
          %v583 = vpop.f32.mrf.mxu0
          %v584 = vadd.f32 0.0, %v583
          %585 = vmatmul.f32.gmra.mxu0 %v546
          %v586 = vpop.f32.mrf.mxu0
          %v587 = vadd.f32 0.0, %v586
          %588 = vmatmul.f32.gmra.mxu0 %v549
          %v589 = vpop.f32.mrf.mxu0
          %v590 = vadd.f32 0.0, %v589
          %591 = vmatmul.f32.gmra.mxu0 %v552
          %v592 = vpop.f32.mrf.mxu0
          %v593 = vadd.f32 0.0, %v592
          %594 = vmatmul.f32.gmra.mxu0 %v555
          %v595 = vpop.f32.mrf.mxu0
          %v596 = vadd.f32 0.0, %v595
          %597 = vmatmul.f32.gmra.mxu0 %v558
          %v598 = vpop.f32.mrf.mxu0
          %v599 = vadd.f32 0.0, %v598
          %600 = vmatmul.f32.gmra.mxu0 %v561
          %v601 = vpop.f32.mrf.mxu0
          %v602 = vadd.f32 0.0, %v601
          %603 = vdwg.mxu0
          %604 = vmatpush.msra.mxu0 0.0
          %605 = vmatpush.msra.mxu0 0.0
          %606 = vmatpush.msra.mxu0 0.0
          %607 = vmatpush.msra.mxu0 0.0
          %608 = vmatpush.msra.mxu0 0.0
          %609 = vmatpush.msra.mxu0 0.0
          %610 = vmatpush.msra.mxu0 0.0
          %611 = vmatpush.msra.mxu0 0.0
          %612 = vmatpush.msra.mxu0 0.0
          %613 = vmatpush.msra.mxu0 0.0
          %614 = vmatpush.msra.mxu0 0.0
          %615 = vmatpush.msra.mxu0 0.0
          %616 = vmatpush.msra.mxu0 %v537
          %617 = vmatpush.msra.mxu0 %v535
          %618 = vmatpush.msra.mxu0 %v533
          %619 = vmatpush.msra.mxu0 %v531
          %620 = vmatmul.f32.gmra.mxu0 %v540
          %v621 = vpop.f32.mrf.mxu0
          %v622 = vadd.f32 0.0, %v621
          %623 = vmatmul.f32.gmra.mxu0 %v543
          %v624 = vpop.f32.mrf.mxu0
          %v625 = vadd.f32 0.0, %v624
          %626 = vmatmul.f32.gmra.mxu0 %v546
          %v627 = vpop.f32.mrf.mxu0
          %v628 = vadd.f32 0.0, %v627
          %629 = vmatmul.f32.gmra.mxu0 %v549
          %v630 = vpop.f32.mrf.mxu0
          %v631 = vadd.f32 0.0, %v630
          %632 = vmatmul.f32.gmra.mxu0 %v552
          %v633 = vpop.f32.mrf.mxu0
          %v634 = vadd.f32 0.0, %v633
          %635 = vmatmul.f32.gmra.mxu0 %v555
          %v636 = vpop.f32.mrf.mxu0
          %v637 = vadd.f32 0.0, %v636
          %638 = vmatmul.f32.gmra.mxu0 %v558
          %v639 = vpop.f32.mrf.mxu0
          %v640 = vadd.f32 0.0, %v639
          %641 = vmatmul.f32.gmra.mxu0 %v561
          %v642 = vpop.f32.mrf.mxu0
          %v643 = vadd.f32 0.0, %v642
          %644 = vdwg.mxu0
          %v645 = vld [vmem:[#allocation7] sm:$0xff]
          %v646 = vld [vmem:[#allocation7 + $0x8] sm:$0xff]
          %v647 = vld [vmem:[#allocation7 + $0x10] sm:$0xff]
          %v648 = vld [vmem:[#allocation7 + $0x18] sm:$0xff]
          %v649 = vld [vmem:[#allocation7 + $0x20] sm:$0xff]
          %v650 = vld [vmem:[#allocation7 + $0x28] sm:$0xff]
          %v651 = vld [vmem:[#allocation7 + $0x30] sm:$0xff]
          %v652 = vld [vmem:[#allocation7 + $0x38] sm:$0xff]
          %v653 = vld [vmem:[%s441] sm:$0xff]
          %v655 = vsel %vm464, %v645, 0
          %v658 = vsel %vm464, %v646, 0
          %v661 = vsel %vm464, %v647, 0
          %v664 = vsel %vm464, %v648, 0
          %v667 = vsel %vm464, %v649, 0
          %v670 = vsel %vm464, %v650, 0
          %v673 = vsel %vm464, %v651, 0
          %v676 = vsel %vm464, %v652, 0
          %678 = vmatpush.msra.mxu0 0.0
          %679 = vmatpush.msra.mxu0 0.0
          %680 = vmatpush.msra.mxu0 0.0
          %681 = vmatpush.msra.mxu0 0.0
          %682 = vmatpush.msra.mxu0 0.0
          %683 = vmatpush.msra.mxu0 0.0
          %684 = vmatpush.msra.mxu0 0.0
          %685 = vmatpush.msra.mxu0 0.0
          %686 = vmatpush.msra.mxu0 0.0
          %687 = vmatpush.msra.mxu0 0.0
          %688 = vmatpush.msra.mxu0 0.0
          %689 = vmatpush.msra.mxu0 0.0
          %690 = vmatpush.msra.mxu0 0.0
          %691 = vmatpush.msra.mxu0 0.0
          %692 = vmatpush.msra.mxu0 0.0
          %693 = vmatpush.msra.mxu0 %v653
          %694 = vmatmul.f32.gmra.mxu0 %v655
          %v695 = vpop.f32.mrf.mxu0
          %v696 = vadd.f32 0.0, %v695
          %697 = vmatmul.f32.gmra.mxu0 %v658
          %v698 = vpop.f32.mrf.mxu0
          %v699 = vadd.f32 0.0, %v698
          %700 = vmatmul.f32.gmra.mxu0 %v661
          %v701 = vpop.f32.mrf.mxu0
          %v702 = vadd.f32 0.0, %v701
          %703 = vmatmul.f32.gmra.mxu0 %v664
          %v704 = vpop.f32.mrf.mxu0
          %v705 = vadd.f32 0.0, %v704
          %706 = vmatmul.f32.gmra.mxu0 %v667
          %v707 = vpop.f32.mrf.mxu0
          %v708 = vadd.f32 0.0, %v707
          %709 = vmatmul.f32.gmra.mxu0 %v670
          %v710 = vpop.f32.mrf.mxu0
          %v711 = vadd.f32 0.0, %v710
          %712 = vmatmul.f32.gmra.mxu0 %v673
          %v713 = vpop.f32.mrf.mxu0
          %v714 = vadd.f32 0.0, %v713
          %715 = vmatmul.f32.gmra.mxu0 %v676
          %v716 = vpop.f32.mrf.mxu0
          %v717 = vadd.f32 0.0, %v716
          %718 = vdwg.mxu0
          %v719 = vld [vmem:[%s7] sm:$0xff]
          %v720 = vld [vmem:[%s7 + $0x8] sm:$0xff]
          %v721 = vld [vmem:[%s7 + $0x10] sm:$0xff]
          %v722 = vld [vmem:[%s7 + $0x18] sm:$0xff]
          %v723 = vld [vmem:[%s7 + $0x20] sm:$0xff]
          %v724 = vld [vmem:[%s7 + $0x28] sm:$0xff]
          %v725 = vld [vmem:[%s7 + $0x30] sm:$0xff]
          %v726 = vld [vmem:[%s7 + $0x38] sm:$0xff]
          %v728 = vsel %vm538, %v696, 0
          %v731 = vsel %vm538, %v699, 0
          %v734 = vsel %vm538, %v702, 0
          %v737 = vsel %vm538, %v705, 0
          %v740 = vsel %vm538, %v708, 0
          %v743 = vsel %vm538, %v711, 0
          %v746 = vsel %vm538, %v714, 0
          %v749 = vsel %vm538, %v717, 0
          %751 = vmatpush.msra.mxu0 0.0
          %752 = vmatpush.msra.mxu0 0.0
          %753 = vmatpush.msra.mxu0 0.0
          %754 = vmatpush.msra.mxu0 0.0
          %755 = vmatpush.msra.mxu0 0.0
          %756 = vmatpush.msra.mxu0 0.0
          %757 = vmatpush.msra.mxu0 0.0
          %758 = vmatpush.msra.mxu0 0.0
          %759 = vmatpush.msra.mxu0 0.0
          %760 = vmatpush.msra.mxu0 0.0
          %761 = vmatpush.msra.mxu0 0.0
          %762 = vmatpush.msra.mxu0 0.0
          %763 = vmatpush.msra.mxu0 %v725
          %764 = vmatpush.msra.mxu0 %v723
          %765 = vmatpush.msra.mxu0 %v721
          %766 = vmatpush.msra.mxu0 %v719
          %767 = vmatmul.f32.gmra.mxu0 %v728
          %v768 = vpop.f32.mrf.mxu0
          %v769 = vadd.f32 0.0, %v768
          %770 = vmatmul.f32.gmra.mxu0 %v731
          %v771 = vpop.f32.mrf.mxu0
          %v772 = vadd.f32 0.0, %v771
          %773 = vmatmul.f32.gmra.mxu0 %v734
          %v774 = vpop.f32.mrf.mxu0
          %v775 = vadd.f32 0.0, %v774
          %776 = vmatmul.f32.gmra.mxu0 %v737
          %v777 = vpop.f32.mrf.mxu0
          %v778 = vadd.f32 0.0, %v777
          %779 = vmatmul.f32.gmra.mxu0 %v740
          %v780 = vpop.f32.mrf.mxu0
          %v781 = vadd.f32 0.0, %v780
          %782 = vmatmul.f32.gmra.mxu0 %v743
          %v783 = vpop.f32.mrf.mxu0
          %v784 = vadd.f32 0.0, %v783
          %785 = vmatmul.f32.gmra.mxu0 %v746
          %v786 = vpop.f32.mrf.mxu0
          %v787 = vadd.f32 0.0, %v786
          %788 = vmatmul.f32.gmra.mxu0 %v749
          %v789 = vpop.f32.mrf.mxu0
          %v790 = vadd.f32 0.0, %v789
          %791 = vdwg.mxu0
          %792 = vmatpush.msra.mxu0 0.0
          %793 = vmatpush.msra.mxu0 0.0
          %794 = vmatpush.msra.mxu0 0.0
          %795 = vmatpush.msra.mxu0 0.0
          %796 = vmatpush.msra.mxu0 0.0
          %797 = vmatpush.msra.mxu0 0.0
          %798 = vmatpush.msra.mxu0 0.0
          %799 = vmatpush.msra.mxu0 0.0
          %800 = vmatpush.msra.mxu0 0.0
          %801 = vmatpush.msra.mxu0 0.0
          %802 = vmatpush.msra.mxu0 0.0
          %803 = vmatpush.msra.mxu0 0.0
          %804 = vmatpush.msra.mxu0 %v726
          %805 = vmatpush.msra.mxu0 %v724
          %806 = vmatpush.msra.mxu0 %v722
          %807 = vmatpush.msra.mxu0 %v720
          %808 = vmatmul.f32.gmra.mxu0 %v728
          %v809 = vpop.f32.mrf.mxu0
          %v810 = vadd.f32 0.0, %v809
          %811 = vmatmul.f32.gmra.mxu0 %v731
          %v812 = vpop.f32.mrf.mxu0
          %v813 = vadd.f32 0.0, %v812
          %814 = vmatmul.f32.gmra.mxu0 %v734
          %v815 = vpop.f32.mrf.mxu0
          %v816 = vadd.f32 0.0, %v815
          %817 = vmatmul.f32.gmra.mxu0 %v737
          %v818 = vpop.f32.mrf.mxu0
          %v819 = vadd.f32 0.0, %v818
          %820 = vmatmul.f32.gmra.mxu0 %v740
          %v821 = vpop.f32.mrf.mxu0
          %v822 = vadd.f32 0.0, %v821
          %823 = vmatmul.f32.gmra.mxu0 %v743
          %v824 = vpop.f32.mrf.mxu0
          %v825 = vadd.f32 0.0, %v824
          %826 = vmatmul.f32.gmra.mxu0 %v746
          %v827 = vpop.f32.mrf.mxu0
          %v828 = vadd.f32 0.0, %v827
          %829 = vmatmul.f32.gmra.mxu0 %v749
          %v830 = vpop.f32.mrf.mxu0
          %v831 = vadd.f32 0.0, %v830
          %832 = vdwg.mxu0
          %v833 = vmul.f32 %v581, %v769
          %v834 = vmul.f32 %v622, %v810
          %v835 = vmul.f32 %v584, %v772
          %v836 = vmul.f32 %v625, %v813
          %v837 = vmul.f32 %v587, %v775
          %v838 = vmul.f32 %v628, %v816
          %v839 = vmul.f32 %v590, %v778
          %v840 = vmul.f32 %v631, %v819
          %v841 = vmul.f32 %v593, %v781
          %v842 = vmul.f32 %v634, %v822
          %v843 = vmul.f32 %v596, %v784
          %v844 = vmul.f32 %v637, %v825
          %v845 = vmul.f32 %v599, %v787
          %v846 = vmul.f32 %v640, %v828
          %v847 = vmul.f32 %v602, %v790
          %v848 = vmul.f32 %v643, %v831
          %849 = vst [vmem:[#allocation2] sm:$0xff] %v833
          %850 = vst [vmem:[#allocation2 + $0x8] sm:$0xff] %v834
          %851 = vst [vmem:[#allocation2 + $0x10] sm:$0xff] %v835
          %852 = vst [vmem:[#allocation2 + $0x18] sm:$0xff] %v836
          %853 = vst [vmem:[#allocation2 + $0x20] sm:$0xff] %v837
          %854 = vst [vmem:[#allocation2 + $0x28] sm:$0xff] %v838
          %855 = vst [vmem:[#allocation2 + $0x30] sm:$0xff] %v839
          %856 = vst [vmem:[#allocation2 + $0x38] sm:$0xff] %v840
          %857 = vst [vmem:[#allocation2 + $0x40] sm:$0xff] %v841
          %858 = vst [vmem:[#allocation2 + $0x48] sm:$0xff] %v842
          %859 = vst [vmem:[#allocation2 + $0x50] sm:$0xff] %v843
          %860 = vst [vmem:[#allocation2 + $0x58] sm:$0xff] %v844
          %861 = vst [vmem:[#allocation2 + $0x60] sm:$0xff] %v845
          %862 = vst [vmem:[#allocation2 + $0x68] sm:$0xff] %v846
          %863 = vst [vmem:[#allocation2 + $0x70] sm:$0xff] %v847
          %864 = vst [vmem:[#allocation2 + $0x78] sm:$0xff] %v848
        $region72: #{cti_forward.14} parent=51 // pred_fallthru
          _
        %v865 = vld [vmem:[%s433] sm:$0xff]
        %v866 = vld [vmem:[%s365] sm:$0xff]
        %v867 = vld [vmem:[%s365 + $0x8] sm:$0xff]
        %v868 = vld [vmem:[%s365 + $0x10] sm:$0xff]
        %v869 = vld [vmem:[%s365 + $0x18] sm:$0xff]
        %v870 = vld [vmem:[%s365 + $0x20] sm:$0xff]
        %v871 = vld [vmem:[%s365 + $0x28] sm:$0xff]
        %v872 = vld [vmem:[%s365 + $0x30] sm:$0xff]
        %v873 = vld [vmem:[%s365 + $0x38] sm:$0xff]
        %vm874 = vcmask 261120
        %v876 = vsel %vm874, %v865, 0
        %878 = vmatpush.msra.mxu0 0.0
        %879 = vmatpush.msra.mxu0 0.0
        %880 = vmatpush.msra.mxu0 0.0
        %881 = vmatpush.msra.mxu0 0.0
        %882 = vmatpush.msra.mxu0 0.0
        %883 = vmatpush.msra.mxu0 0.0
        %884 = vmatpush.msra.mxu0 0.0
        %885 = vmatpush.msra.mxu0 0.0
        %886 = vmatpush.msra.mxu0 0.0
        %887 = vmatpush.msra.mxu0 0.0
        %888 = vmatpush.msra.mxu0 0.0
        %889 = vmatpush.msra.mxu0 0.0
        %890 = vmatpush.msra.mxu0 %v872
        %891 = vmatpush.msra.mxu0 %v870
        %892 = vmatpush.msra.mxu0 %v868
        %893 = vmatpush.msra.mxu0 %v866
        %894 = vmatmul.f32.gmra.mxu0 %v876
        %v895 = vpop.f32.mrf.mxu0
        %v896 = vadd.f32 0.0, %v895
        %897 = vdwg.mxu0
        %898 = vmatpush.msra.mxu0 0.0
        %899 = vmatpush.msra.mxu0 0.0
        %900 = vmatpush.msra.mxu0 0.0
        %901 = vmatpush.msra.mxu0 0.0
        %902 = vmatpush.msra.mxu0 0.0
        %903 = vmatpush.msra.mxu0 0.0
        %904 = vmatpush.msra.mxu0 0.0
        %905 = vmatpush.msra.mxu0 0.0
        %906 = vmatpush.msra.mxu0 0.0
        %907 = vmatpush.msra.mxu0 0.0
        %908 = vmatpush.msra.mxu0 0.0
        %909 = vmatpush.msra.mxu0 0.0
        %910 = vmatpush.msra.mxu0 %v873
        %911 = vmatpush.msra.mxu0 %v871
        %912 = vmatpush.msra.mxu0 %v869
        %913 = vmatpush.msra.mxu0 %v867
        %914 = vmatmul.f32.gmra.mxu0 %v876
        %v915 = vpop.f32.mrf.mxu0
        %v916 = vadd.f32 0.0, %v915
        %917 = vdwg.mxu0
        %v918 = vld [vmem:[#allocation2] sm:$0xff]
        %v919 = vld [vmem:[#allocation2 + $0x8] sm:$0xff]
        %v920 = vld [vmem:[#allocation2 + $0x10] sm:$0xff]
        %v921 = vld [vmem:[#allocation2 + $0x18] sm:$0xff]
        %v922 = vld [vmem:[#allocation2 + $0x20] sm:$0xff]
        %v923 = vld [vmem:[#allocation2 + $0x28] sm:$0xff]
        %v924 = vld [vmem:[#allocation2 + $0x30] sm:$0xff]
        %v925 = vld [vmem:[#allocation2 + $0x38] sm:$0xff]
        %v926 = vld [vmem:[#allocation2 + $0x40] sm:$0xff]
        %v927 = vld [vmem:[#allocation2 + $0x48] sm:$0xff]
        %v928 = vld [vmem:[#allocation2 + $0x50] sm:$0xff]
        %v929 = vld [vmem:[#allocation2 + $0x58] sm:$0xff]
        %v930 = vld [vmem:[#allocation2 + $0x60] sm:$0xff]
        %v931 = vld [vmem:[#allocation2 + $0x68] sm:$0xff]
        %v932 = vld [vmem:[#allocation2 + $0x70] sm:$0xff]
        %v933 = vld [vmem:[#allocation2 + $0x78] sm:$0xff]
        %934 = vmatpush.xpose.msra.mxu0 0.0
        %935 = vmatpush.xpose.msra.mxu0 0.0
        %936 = vmatpush.xpose.msra.mxu0 0.0
        %937 = vmatpush.xpose.msra.mxu0 0.0
        %938 = vmatpush.xpose.msra.mxu0 0.0
        %939 = vmatpush.xpose.msra.mxu0 0.0
        %940 = vmatpush.xpose.msra.mxu0 0.0
        %941 = vmatpush.xpose.msra.mxu0 0.0
        %942 = vmatpush.xpose.msra.mxu0 0.0
        %943 = vmatpush.xpose.msra.mxu0 0.0
        %944 = vmatpush.xpose.msra.mxu0 0.0
        %945 = vmatpush.xpose.msra.mxu0 0.0
        %946 = vmatpush.xpose.msra.mxu0 0.0
        %947 = vmatpush.xpose.msra.mxu0 0.0
        %948 = vmatpush.xpose.msra.mxu0 0.0
        %949 = vmatpush.xpose.msra.mxu0 %v896
        %950 = vmatmul.f32.gmra.mxu0 %v918
        %v951 = vpop.f32.mrf.mxu0
        %v952 = vadd.f32 0.0, %v951
        %953 = vmatmul.f32.gmra.mxu0 %v920
        %v954 = vpop.f32.mrf.mxu0
        %v955 = vadd.f32 0.0, %v954
        %956 = vmatmul.f32.gmra.mxu0 %v922
        %v957 = vpop.f32.mrf.mxu0
        %v958 = vadd.f32 0.0, %v957
        %959 = vmatmul.f32.gmra.mxu0 %v924
        %v960 = vpop.f32.mrf.mxu0
        %v961 = vadd.f32 0.0, %v960
        %962 = vmatmul.f32.gmra.mxu0 %v926
        %v963 = vpop.f32.mrf.mxu0
        %v964 = vadd.f32 0.0, %v963
        %965 = vmatmul.f32.gmra.mxu0 %v928
        %v966 = vpop.f32.mrf.mxu0
        %v967 = vadd.f32 0.0, %v966
        %968 = vmatmul.f32.gmra.mxu0 %v930
        %v969 = vpop.f32.mrf.mxu0
        %v970 = vadd.f32 0.0, %v969
        %971 = vmatmul.f32.gmra.mxu0 %v932
        %v972 = vpop.f32.mrf.mxu0
        %v973 = vadd.f32 0.0, %v972
        %974 = vdwg.mxu0
        %975 = vmatpush.xpose.msra.mxu0 0.0
        %976 = vmatpush.xpose.msra.mxu0 0.0
        %977 = vmatpush.xpose.msra.mxu0 0.0
        %978 = vmatpush.xpose.msra.mxu0 0.0
        %979 = vmatpush.xpose.msra.mxu0 0.0
        %980 = vmatpush.xpose.msra.mxu0 0.0
        %981 = vmatpush.xpose.msra.mxu0 0.0
        %982 = vmatpush.xpose.msra.mxu0 0.0
        %983 = vmatpush.xpose.msra.mxu0 0.0
        %984 = vmatpush.xpose.msra.mxu0 0.0
        %985 = vmatpush.xpose.msra.mxu0 0.0
        %986 = vmatpush.xpose.msra.mxu0 0.0
        %987 = vmatpush.xpose.msra.mxu0 0.0
        %988 = vmatpush.xpose.msra.mxu0 0.0
        %989 = vmatpush.xpose.msra.mxu0 0.0
        %990 = vmatpush.xpose.msra.mxu0 %v916
        %991 = vmatmul.f32.gmra.mxu0 %v919
        %v992 = vpop.f32.mrf.mxu0
        %v993 = vadd.f32 %v952, %v992
        %994 = vmatmul.f32.gmra.mxu0 %v921
        %v995 = vpop.f32.mrf.mxu0
        %v996 = vadd.f32 %v955, %v995
        %997 = vmatmul.f32.gmra.mxu0 %v923
        %v998 = vpop.f32.mrf.mxu0
        %v999 = vadd.f32 %v958, %v998
        %1000 = vmatmul.f32.gmra.mxu0 %v925
        %v1001 = vpop.f32.mrf.mxu0
        %v1002 = vadd.f32 %v961, %v1001
        %1003 = vmatmul.f32.gmra.mxu0 %v927
        %v1004 = vpop.f32.mrf.mxu0
        %v1005 = vadd.f32 %v964, %v1004
        %1006 = vmatmul.f32.gmra.mxu0 %v929
        %v1007 = vpop.f32.mrf.mxu0
        %v1008 = vadd.f32 %v967, %v1007
        %1009 = vmatmul.f32.gmra.mxu0 %v931
        %v1010 = vpop.f32.mrf.mxu0
        %v1011 = vadd.f32 %v970, %v1010
        %1012 = vmatmul.f32.gmra.mxu0 %v933
        %v1013 = vpop.f32.mrf.mxu0
        %v1014 = vadd.f32 %v973, %v1013
        %1015 = vdwg.mxu0
        %vm1016 = vcmask 64512
        %v1017 = vsel %vm1016, %v993, -inf
        %1018 = vmax.xlane.f32.xlu0 %v1017
        %v1019 = vpop.xlane.xlu0 %1018
        %v1020 = vsel %vm1016, %v996, -inf
        %1021 = vmax.xlane.f32.xlu0 %v1020
        %v1022 = vpop.xlane.xlu0 %1021
        %v1023 = vsel %vm1016, %v999, -inf
        %1024 = vmax.xlane.f32.xlu0 %v1023
        %v1025 = vpop.xlane.xlu0 %1024
        %v1026 = vsel %vm1016, %v1002, -inf
        %1027 = vmax.xlane.f32.xlu0 %v1026
        %v1028 = vpop.xlane.xlu0 %1027
        %v1029 = vsel %vm1016, %v1005, -inf
        %1030 = vmax.xlane.f32.xlu0 %v1029
        %v1031 = vpop.xlane.xlu0 %1030
        %v1032 = vsel %vm1016, %v1008, -inf
        %1033 = vmax.xlane.f32.xlu0 %v1032
        %v1034 = vpop.xlane.xlu0 %1033
        %v1035 = vsel %vm1016, %v1011, -inf
        %1036 = vmax.xlane.f32.xlu0 %v1035
        %v1037 = vpop.xlane.xlu0 %1036
        %v1038 = vsel %vm1016, %v1014, -inf
        %1039 = vmax.xlane.f32.xlu0 %v1038
        %v1040 = vpop.xlane.xlu0 %1039
        %v1041 = vmax.f32 %v1019, %v1031
        %v1042 = vmax.f32 %v1022, %v1034
        %v1043 = vmax.f32 %v1025, %v1037
        %v1044 = vmax.f32 %v1028, %v1040
        %v1045 = vmax.f32 %v1041, %v1042
        %v1046 = vmax.f32 %v1043, %v1044
        %v1047 = vmax.f32 %v1045, %v1046
        %v1048 = vrot.slane %v1047, 4
        %v1049 = vmax.f32 %v1047, %v1048
        %v1050 = vrot.slane %v1049, 2
        %v1051 = vmax.f32 %v1049, %v1050
        %v1052 = vrot.slane %v1051, 1
        %v1053 = vmax.f32 %v1051, %v1052
        %v1054 = vsub.f32 %v993, %v1053
        %v1055 = vsub.f32 %v996, %v1053
        %v1056 = vsub.f32 %v999, %v1053
        %v1057 = vsub.f32 %v1002, %v1053
        %v1058 = vsub.f32 %v1005, %v1053
        %v1059 = vsub.f32 %v1008, %v1053
        %v1060 = vsub.f32 %v1011, %v1053
        %v1061 = vsub.f32 %v1014, %v1053
        %v1062 = vmul.f32 %v1054, 1.442695
        %v1063 = vpow.pop %v1062
        %v1064 = vmul.f32 %v1055, 1.442695
        %v1065 = vpow.pop %v1064
        %v1066 = vmul.f32 %v1056, 1.442695
        %v1067 = vpow.pop %v1066
        %v1068 = vmul.f32 %v1057, 1.442695
        %v1069 = vpow.pop %v1068
        %v1070 = vmul.f32 %v1058, 1.442695
        %v1071 = vpow.pop %v1070
        %v1072 = vmul.f32 %v1059, 1.442695
        %v1073 = vpow.pop %v1072
        %v1074 = vmul.f32 %v1060, 1.442695
        %v1075 = vpow.pop %v1074
        %v1076 = vmul.f32 %v1061, 1.442695
        %v1077 = vpow.pop %v1076
        %v1078 = vsel %vm1016, %v1063, 0.0
        %1079 = vadd.xlane.f32.xlu0 %v1078
        %v1080 = vpop.xlane.xlu0 %1079
        %v1081 = vsel %vm1016, %v1065, 0.0
        %1082 = vadd.xlane.f32.xlu0 %v1081
        %v1083 = vpop.xlane.xlu0 %1082
        %v1084 = vsel %vm1016, %v1067, 0.0
        %1085 = vadd.xlane.f32.xlu0 %v1084
        %v1086 = vpop.xlane.xlu0 %1085
        %v1087 = vsel %vm1016, %v1069, 0.0
        %1088 = vadd.xlane.f32.xlu0 %v1087
        %v1089 = vpop.xlane.xlu0 %1088
        %v1090 = vsel %vm1016, %v1071, 0.0
        %1091 = vadd.xlane.f32.xlu0 %v1090
        %v1092 = vpop.xlane.xlu0 %1091
        %v1093 = vsel %vm1016, %v1073, 0.0
        %1094 = vadd.xlane.f32.xlu0 %v1093
        %v1095 = vpop.xlane.xlu0 %1094
        %v1096 = vsel %vm1016, %v1075, 0.0
        %1097 = vadd.xlane.f32.xlu0 %v1096
        %v1098 = vpop.xlane.xlu0 %1097
        %v1099 = vsel %vm1016, %v1077, 0.0
        %1100 = vadd.xlane.f32.xlu0 %v1099
        %v1101 = vpop.xlane.xlu0 %1100
        %v1102 = vadd.f32 %v1080, %v1083
        %v1103 = vadd.f32 %v1102, %v1086
        %v1104 = vadd.f32 %v1103, %v1089
        %v1105 = vadd.f32 %v1104, %v1092
        %v1106 = vadd.f32 %v1105, %v1095
        %v1107 = vadd.f32 %v1106, %v1098
        %v1108 = vadd.f32 %v1107, %v1101
        %v1109 = vrot.slane %v1108, 4
        %v1110 = vadd.f32 %v1108, %v1109
        %v1111 = vrot.slane %v1110, 2
        %v1112 = vadd.f32 %v1110, %v1111
        %v1113 = vrot.slane %v1112, 1
        %v1114 = vadd.f32 %v1112, %v1113
        %v1115 = vrcp.pop %v1114
        %v1116 = vmul.f32 %v1114, %v1115
        %v1117 = vsub.f32 1.0, %v1116
        %v1118 = vmul.f32 %v1115, %v1117
        %v1119 = vadd.f32 %v1115, %v1118
        %vm1120 = vweird.f32 %v1114
        %vm1121 = vweird.f32 %v1115
        %vm1122 = vmor %vm1120, %vm1121
        %v1123 = vsel %vm1122, %v1115, %v1119
        %v1124 = vand.u32 2147483647, %v1114
        %vm1125 = vcmp.eq.f32.partialorder %v1124, 8.507059e+37
        %v1126 = vand.u32 %v1114, 2147483648
        %v1127 = vor.u32 1.1754944e-38, %v1126
        %v1128 = vsel %vm1125, %v1127, %v1123
        %v1129 = vmul.f32 %v1063, %v1128
        %v1130 = vmul.f32 %v1065, %v1128
        %v1131 = vmul.f32 %v1067, %v1128
        %v1132 = vmul.f32 %v1069, %v1128
        %v1133 = vmul.f32 %v1071, %v1128
        %v1134 = vmul.f32 %v1073, %v1128
        %v1135 = vmul.f32 %v1075, %v1128
        %v1136 = vmul.f32 %v1077, %v1128
        %1137 = vst.msk [vmem:[%s450] sm:$0xff] %vm1016, %v1129
        %1138 = vst.msk [vmem:[%s450 + $0x8] sm:$0xff] %vm1016, %v1130
        %1139 = vst.msk [vmem:[%s450 + $0x10] sm:$0xff] %vm1016, %v1131
        %1140 = vst.msk [vmem:[%s450 + $0x18] sm:$0xff] %vm1016, %v1132
        %1141 = vst.msk [vmem:[%s450 + $0x20] sm:$0xff] %vm1016, %v1133
        %1142 = vst.msk [vmem:[%s450 + $0x28] sm:$0xff] %vm1016, %v1134
        %1143 = vst.msk [vmem:[%s450 + $0x30] sm:$0xff] %vm1016, %v1135
        %1144 = vst.msk [vmem:[%s450 + $0x38] sm:$0xff] %vm1016, %v1136
        %p1145 = scmp.lt.s32.totalorder %s28, 1
        %s1146 = scalar_select %p1145, %s28, 1
        %p1147 = scmp.lt.s32.totalorder %s29, 1
        %s1148 = scalar_select %p1147, %s29, 1
        %s1149 = smul.addr %s1148, 8
        %s1150 = smul.addr %s1146, 16
        %s1151 = sadd.s32 %s1149, %s1150
        %s1152 = smul.addr %s1151, 8
        %s1153 = scalar_lea.vmem %s8, %s1152
        // Predicated region
        $region73: #{cti_forward.14} parent=51 // pred_check
          %p1154 = pneg %p244
        $region74: #{cti_forward.14} parent=51 // pred_check_branch
          %1156 = sbr.rel (%p1154) target = $region76
        $region75: #{cti_forward.14} parent=51 // pred_region
          _
        $region76: #{cti_forward.14} parent=51 // pred_fallthru
          _
      $region52: #{cti_forward.14} parent=5 // pred_fallthru
        _
      %p1157 = scmp.le.s32.totalorder 2, %s19
      // Predicated region
      $region77: #{cti_forward.14} parent=5 // pred_check
        %p1158 = pneg %p1157
      $region78: #{cti_forward.14} parent=5 // pred_check_branch
        %1160 = sbr.rel (%p1158) target = $region80
      $region79: #{cti_forward.14} parent=5 // pred_region
        %s1161 = ssub.s32 %s19, 2
        // Predicated region
        $region81: #{cti_forward.14} parent=79 // pred_check
          %p1162 = pneg %p250
        $region82: #{cti_forward.14} parent=79 // pred_check_branch
          %1164 = sbr.rel (%p1162) target = $region84
        $region83: #{cti_forward.14} parent=79 // pred_region
          %p1165 = scmp.lt.s32.totalorder %s30, 1
          %s1166 = scalar_select %p1165, %s30, 1
          %p1167 = scmp.lt.s32.totalorder %s31, 1
          %s1168 = scalar_select %p1167, %s31, 1
          %s1169 = smul.addr %s1168, 8
          %s1170 = smul.addr %s1166, 16
          %s1171 = sadd.s32 %s1169, %s1170
          %s1172 = smul.addr %s1171, 8
          %s1173 = scalar_lea.vmem %s8, %s1172
        $region84: #{cti_forward.14} parent=79 // pred_fallthru
          _
      $region80: #{cti_forward.14} parent=5 // pred_fallthru
        _
    $region6: #{cti_forward.14} parent=1 // loop_footer
      %s23 = sadd.s32 1, %s19
    $region7: #{cti_forward.14} parent=1 // loop_footer_branch
      %18 = sbr.rel target = $region3
    $region8: #{cti_forward.14} parent=1 // loop_exit
      _
    %1174 = vsyncpa [#allocation4], 1
    %s1175 = scalar_lea.sflag [#allocation4], 1
    %1176 = vsyncpa %s1175, 1
    %1177 = vsyncpa [#allocation6], 1
    %1178 = vsyncpa [#allocation9], 1

// kernel: cti_forward.19
$region0: #{cti_forward.19}
  #allocation0 [shape = 'u32[]', space=smem, size = 0x4, offset = 0x4, fixed_abs, tag = 'smem constant byte address 0x4 - core index']
  #allocation1 [shape = 'u32[72,128]{1,0:T(1,128)}', space=vmem, size = 0x9000, scoped, tag = 'internal scratch']
  %s0 = inlined_call_operand.vmem [shape: f32[2,2,1,64], index: 0, kind: input, shape index: {}]
  %s1 = inlined_call_operand.hbm [shape: f32[2,64,128], index: 1, kind: input, shape index: {}]
  %s2 = inlined_call_operand.vmem [shape: f32[2,1,128], index: 2, kind: input, shape index: {}]
  %s3 = inlined_call_operand.vmem [shape: f32[2,128], index: 3, kind: output, shape index: {}]
  %s4 = sld [smem:[#allocation0]]
  $region87: #{cti_forward.19} parent=0
    _
  %s6 = ssub.s32 1, %s4
  %s7 = scalar_select 0, %s6, %s4
  $region1: #{cti_forward.19} parent=0
    #allocation2 [shape = 'u8[2048]{0}', space=vmem, size = 0x800, scoped, tag = 'input window, operand 0']
    #allocation3 [shape = 'u8[65536]{0}', space=vmem, size = 0x10000, scoped, tag = 'input window, operand 1']
    #allocation4 [shape = 's32[2]{0}', space=sflag, size = 0x8, scoped, tag = 'scoped memory for cti_forward.19']
    %8 = vsyncpa [#allocation4], 0
    %s9 = scalar_lea.sflag [#allocation4], 1
    %10 = vsyncpa %s9, 0
    loop: start=0, step=1, limit=4
    $region2: #{cti_forward.19} parent=1 // loop_pre_header
      _
    $region3: #{cti_forward.19} parent=1 // loop_header
      %s12 = sphi 0, %s16
      %p13 = scmp.ge.s32.totalorder %s12, 4
      %s22 = sphi 0, %s24
      %s25 = sphi 0, %s22
      %s26 = sphi 0, %s25
      %s42 = sphi 0, %s26
      %s48 = sphi 0, %s50
      %s51 = sphi 0, %s48
      %s52 = sphi 0, %s51
      %s68 = sphi 0, %s52
      %s74 = sphi 0, %s76
      %s77 = sphi 0, %s74
      %s78 = sphi 0, %s77
      %s94 = sphi 0, %s78
      %s98 = sphi 0, %s98
      %s100 = sphi 0, %s98
      %s101 = sphi 0, %s100
      %s115 = sphi 0, %s101
    $region4: #{cti_forward.19} parent=1 // loop_header_branch
      %15 = sbr.rel (%p13) target = $region8
    $region5: #{cti_forward.19} parent=1 // loop_body
      %s17 = ssub.s32 %s12, 1
      %s18 = ssub.s32 %s12, 2
      %s19 = sadd.s32 %s12, 1
      %s20 = ssub.s32 %s12, %s19
      %p21 = scmp.eq.s32.totalorder %s20, 0
      %s23 = sadd.s32 %s22, 1
      %s24 = scalar_select %p21, %s22, %s23
      %p27 = pneg %p21
      %p28 = scmp.eq.s32.totalorder %s12, 1
      %p29 = por %p27, %p28
      %p30 = scmp.ne.s32.totalorder %s22, %s25
      %p31 = scmp.eq.s32.totalorder %s12, 0
      %p32 = por %p30, %p31
      %p33 = scmp.ne.s32.totalorder %s22, %s25
      %p34 = scmp.eq.s32.totalorder %s17, 1
      %p35 = por %p33, %p34
      %p36 = scmp.ne.s32.totalorder %s25, %s26
      %p37 = scmp.eq.s32.totalorder %s17, 0
      %p38 = por %p36, %p37
      %p39 = scmp.ne.s32.totalorder %s25, %s26
      %p40 = scmp.eq.s32.totalorder %s18, 1
      %p41 = por %p39, %p40
      %p43 = scmp.ne.s32.totalorder %s26, %s42
      %p44 = scmp.eq.s32.totalorder %s18, 0
      %p45 = por %p43, %p44
      %s46 = ssub.s32 %s12, %s19
      %p47 = scmp.eq.s32.totalorder %s46, 0
      %s49 = sadd.s32 %s48, 1
      %s50 = scalar_select %p47, %s48, %s49
      %p53 = pneg %p47
      %p54 = scmp.eq.s32.totalorder %s12, 1
      %p55 = por %p53, %p54
      %p56 = scmp.ne.s32.totalorder %s48, %s51
      %p57 = scmp.eq.s32.totalorder %s12, 0
      %p58 = por %p56, %p57
      %p59 = scmp.ne.s32.totalorder %s48, %s51
      %p60 = scmp.eq.s32.totalorder %s17, 1
      %p61 = por %p59, %p60
      %p62 = scmp.ne.s32.totalorder %s51, %s52
      %p63 = scmp.eq.s32.totalorder %s17, 0
      %p64 = por %p62, %p63
      %p65 = scmp.ne.s32.totalorder %s51, %s52
      %p66 = scmp.eq.s32.totalorder %s18, 1
      %p67 = por %p65, %p66
      %p69 = scmp.ne.s32.totalorder %s52, %s68
      %p70 = scmp.eq.s32.totalorder %s18, 0
      %p71 = por %p69, %p70
      %s72 = ssub.s32 %s12, %s19
      %p73 = scmp.eq.s32.totalorder %s72, 0
      %s75 = sadd.s32 %s74, 1
      %s76 = scalar_select %p73, %s74, %s75
      %p79 = pneg %p73
      %p80 = scmp.eq.s32.totalorder %s12, 1
      %p81 = por %p79, %p80
      %p82 = scmp.ne.s32.totalorder %s74, %s77
      %p83 = scmp.eq.s32.totalorder %s12, 0
      %p84 = por %p82, %p83
      %p85 = scmp.ne.s32.totalorder %s74, %s77
      %p86 = scmp.eq.s32.totalorder %s17, 1
      %p87 = por %p85, %p86
      %p88 = scmp.ne.s32.totalorder %s77, %s78
      %p89 = scmp.eq.s32.totalorder %s17, 0
      %p90 = por %p88, %p89
      %p91 = scmp.ne.s32.totalorder %s77, %s78
      %p92 = scmp.eq.s32.totalorder %s18, 1
      %p93 = por %p91, %p92
      %p95 = scmp.ne.s32.totalorder %s78, %s94
      %p96 = scmp.eq.s32.totalorder %s18, 0
      %p97 = por %p95, %p96
      %s99 = sadd.s32 %s98, 1
      %p102 = scmp.eq.s32.totalorder %s12, 1
      %p103 = scmp.ne.s32.totalorder %s98, %s100
      %p104 = scmp.eq.s32.totalorder %s12, 0
      %p105 = por %p103, %p104
      %p106 = scmp.ne.s32.totalorder %s98, %s100
      %p107 = scmp.eq.s32.totalorder %s17, 1
      %p108 = por %p106, %p107
      %p109 = scmp.ne.s32.totalorder %s100, %s101
      %p110 = scmp.eq.s32.totalorder %s17, 0
      %p111 = por %p109, %p110
      %p112 = scmp.ne.s32.totalorder %s100, %s101
      %p113 = scmp.eq.s32.totalorder %s18, 1
      %p114 = por %p112, %p113
      %p116 = scmp.ne.s32.totalorder %s101, %s115
      %p117 = scmp.eq.s32.totalorder %s18, 0
      %p118 = por %p116, %p117
      %p119 = scmp.le.s32.totalorder 1, %s12
      %p120 = scmp.lt.s32.totalorder %s12, 3
      %p121 = pnand %p119, %p120
      %p122 = pneg %p121
      // Predicated region
      $region9: #{cti_forward.19} parent=5 // pred_check
        _
      $region10: #{cti_forward.19} parent=5 // pred_check_branch
        %124 = sbr.rel (%p121) target = $region12
      $region11: #{cti_forward.19} parent=5 // pred_region
        %s125 = ssub.s32 %s12, 1
      $region12: #{cti_forward.19} parent=5 // pred_fallthru
        _
      %p126 = scmp.lt.s32.totalorder %s12, 2
      // Predicated region
      $region13: #{cti_forward.19} parent=5 // pred_check
        %p127 = pneg %p126
      $region14: #{cti_forward.19} parent=5 // pred_check_branch
        %129 = sbr.rel (%p127) target = $region16
      $region15: #{cti_forward.19} parent=5 // pred_region
        // Predicated region
        $region17: #{cti_forward.19} parent=15 // pred_check
          %p130 = pneg %p32
        $region18: #{cti_forward.19} parent=15 // pred_check_branch
          %132 = sbr.rel (%p130) target = $region20
        $region19: #{cti_forward.19} parent=15 // pred_region
          %s133 = sand.u32 %s22, 1
          %s134 = sand.u32 %s22, 1
          %s135 = smul.addr %s134, 2
          %s136 = scalar_lea.vmem [#allocation2], %s135
          %s137 = scalar_lea.vmem %s0, %s12
          // Predicated region
          $region21: #{cti_forward.19} parent=19 // pred_check
            _
          $region22: #{cti_forward.19} parent=19 // pred_check_branch
            %139 = sbr.rel (0) target = $region24
          $region23: #{cti_forward.19} parent=19 // pred_region
            // Predicated region
            $region25: #{cti_forward.19} parent=23 // pred_check
              _
            $region26: #{cti_forward.19} parent=23 // pred_check_branch
              %141 = sbr.rel target = $region28
            $region27: #{cti_forward.19} parent=23 // pred_region
              // Predicated region
              $region40: #{cti_forward.19} parent=27 // pred_check
                _
              $region41: #{cti_forward.19} parent=27 // pred_check_branch
                %159 = sbr.rel (0) target = $region43
              $region42: #{cti_forward.19} parent=27 // pred_region
                %s161 = ssub.s32 2, 1
                loop: start=0, step=1, limit=1
                $region44: #{cti_forward.19} parent=42 // loop_pre_header
                  _
                $region45: #{cti_forward.19} parent=42 // loop_header
                  %s163 = sphi 0, %s167
                  %p164 = scmp.ge.s32.totalorder %s163, 1
                  %s168 = sphi %s137, %s137
                  %s169 = sphi %s136, %s136
                $region46: #{cti_forward.19} parent=42 // loop_header_branch
                  %166 = sbr.rel (%p164) target = $region50
                $region47: #{cti_forward.19} parent=42 // loop_body
                  %v170 = vld [vmem:[%s168] sm:%s161]
                  %171 = vst [vmem:[%s169] sm:%s161] %v170
                  %v172 = vld [vmem:[%s168 + $0x2] sm:%s161]
                  %173 = vst [vmem:[%s169 + $0x1] sm:%s161] %v172
                $region48: #{cti_forward.19} parent=42 // loop_footer
                  %s167 = sadd.s32 1, %s163
                $region49: #{cti_forward.19} parent=42 // loop_footer_branch
                  %162 = sbr.rel target = $region45
                $region50: #{cti_forward.19} parent=42 // loop_exit
                  _
              $region43: #{cti_forward.19} parent=27 // pred_fallthru
                _
            $region28: #{cti_forward.19} parent=23 // pred_fallthru
              _
            // Predicated region
            $region29: #{cti_forward.19} parent=23 // pred_check
              _
            $region30: #{cti_forward.19} parent=23 // pred_check_branch
              %143 = sbr.rel (0) target = $region32
            $region31: #{cti_forward.19} parent=23 // pred_region
              %s145 = ssub.s32 2, 1
              loop: start=0, step=1, limit=1
              $region33: #{cti_forward.19} parent=31 // loop_pre_header
                _
              $region34: #{cti_forward.19} parent=31 // loop_header
                %s147 = sphi 0, %s151
                %p148 = scmp.ge.s32.totalorder %s147, 1
                %s152 = sphi %s137, %s137
                %s153 = sphi %s136, %s136
              $region35: #{cti_forward.19} parent=31 // loop_header_branch
                %150 = sbr.rel (%p148) target = $region39
              $region36: #{cti_forward.19} parent=31 // loop_body
                %v154 = vld [vmem:[%s152] sm:%s145]
                %155 = vst [vmem:[%s153] sm:%s145] %v154
                %v156 = vld [vmem:[%s152 + $0x2] sm:%s145]
                %157 = vst [vmem:[%s153 + $0x1] sm:%s145] %v156
              $region37: #{cti_forward.19} parent=31 // loop_footer
                %s151 = sadd.s32 1, %s147
              $region38: #{cti_forward.19} parent=31 // loop_footer_branch
                %146 = sbr.rel target = $region34
              $region39: #{cti_forward.19} parent=31 // loop_exit
                _
            $region32: #{cti_forward.19} parent=23 // pred_fallthru
              _
          $region24: #{cti_forward.19} parent=19 // pred_fallthru
            _
          %174 = vnop
        $region20: #{cti_forward.19} parent=15 // pred_fallthru
          _
        // Predicated region
        $region51: #{cti_forward.19} parent=15 // pred_check
          %p175 = pneg %p58
        $region52: #{cti_forward.19} parent=15 // pred_check_branch
          %177 = sbr.rel (%p175) target = $region54
        $region53: #{cti_forward.19} parent=15 // pred_region
          %s178 = sand.u32 %s48, 1
          %s179 = scalar_lea.sflag [#allocation4], %s178
          %s180 = sand.u32 %s48, 1
          %s181 = smul.addr %s180, 64
          %s182 = scalar_lea.vmem [#allocation3], %s181
          %184 = vsyncadd %s179, 0
          %s185 = smul.addr %s12, 8
          %s186 = smul.addr %s185, 8
          %s187 = scalar_lea.hbm %s1, %s186
          %s188 = sshll.u32 %s187, 4
          %s189 = int_to_ptr.hbm [resolvable:$true] %s188
          %s190 = sshll.u32 %s182, 4
          %s191 = int_to_ptr.vmem [resolvable:$true] %s190
          %196 = dma.hbm_to_vmem [thread:$0]  %s189, 1024, %s191, %s179, 128, 128, 8
        $region54: #{cti_forward.19} parent=15 // pred_fallthru
          _
        // Predicated region
        $region55: #{cti_forward.19} parent=15 // pred_check
          %p197 = pneg %p84
        $region56: #{cti_forward.19} parent=15 // pred_check_branch
          %199 = sbr.rel (%p197) target = $region58
        $region57: #{cti_forward.19} parent=15 // pred_region
          %p200 = scmp.lt.s32.totalorder %s12, 1
          %s201 = scalar_select %p200, %s12, 1
          %s202 = scalar_lea.vmem %s2, %s201
        $region58: #{cti_forward.19} parent=15 // pred_fallthru
          _
      $region16: #{cti_forward.19} parent=5 // pred_fallthru
        _
      %p203 = scmp.le.s32.totalorder 1, %s12
      %p204 = scmp.lt.s32.totalorder %s12, 3
      %p205 = pnand %p203, %p204
      %p206 = pneg %p205
      // Predicated region
      $region59: #{cti_forward.19} parent=5 // pred_check
        _
      $region60: #{cti_forward.19} parent=5 // pred_check_branch
        %208 = sbr.rel (%p205) target = $region62
      $region61: #{cti_forward.19} parent=5 // pred_region
        %s209 = ssub.s32 %s12, 1
        %s210 = sand.u32 %s25, 1
        %s211 = sand.u32 %s25, 1
        %s212 = smul.addr %s211, 2
        %s213 = scalar_lea.vmem [#allocation2], %s212
        // Predicated region
        $region63: #{cti_forward.19} parent=61 // pred_check
          %p214 = pneg %p38
        $region64: #{cti_forward.19} parent=61 // pred_check_branch
          %216 = sbr.rel (%p214) target = $region66
        $region65: #{cti_forward.19} parent=61 // pred_region
          _
        $region66: #{cti_forward.19} parent=61 // pred_fallthru
          _
        %s217 = sand.u32 %s51, 1
        %s218 = scalar_lea.sflag [#allocation4], %s217
        %s219 = sand.u32 %s51, 1
        %s220 = smul.addr %s219, 64
        %s221 = scalar_lea.vmem [#allocation3], %s220
        // Predicated region
        $region67: #{cti_forward.19} parent=61 // pred_check
          %p222 = pneg %p64
        $region68: #{cti_forward.19} parent=61 // pred_check_branch
          %224 = sbr.rel (%p222) target = $region70
        $region69: #{cti_forward.19} parent=61 // pred_region
          %226 = dma.done %s218, 1024
        $region70: #{cti_forward.19} parent=61 // pred_fallthru
          _
        %s227 = sand.u32 %s25, 1
        %s228 = sand.u32 %s25, 1
        %s229 = smul.addr %s228, 2
        %s230 = scalar_lea.vmem [#allocation2], %s229
        %p231 = pneg %p38
        %p232 = pneg %p35
        %s233 = sand.u32 %s51, 1
        %s234 = scalar_lea.sflag [#allocation4], %s233
        %s235 = sand.u32 %s51, 1
        %s236 = smul.addr %s235, 64
        %s237 = scalar_lea.vmem [#allocation3], %s236
        %p238 = pneg %p64
        %p239 = pneg %p61
        %p240 = scmp.lt.s32.totalorder %s17, 1
        %s241 = scalar_select %p240, %s17, 1
        %s242 = scalar_lea.vmem %s2, %s241
        %p243 = pneg %p90
        %p244 = pneg %p87
        %p245 = pneg %p111
        %p246 = pneg %p108
        %p247 = scmp.lt.s32.totalorder %s17, 1
        %s248 = scalar_select %p247, %s17, 1
        %s249 = scalar_lea.vmem %s2, %s248
        %p250 = scmp.eq.s32.totalorder %s17, 0
        // Predicated region
        $region71: #{cti_forward.19} parent=61 // pred_check
          %p251 = pneg %p250
        $region72: #{cti_forward.19} parent=61 // pred_check_branch
          %253 = sbr.rel (%p251) target = $region74
        $region73: #{cti_forward.19} parent=61 // pred_region
          %254 = vst [vmem:[%s3] sm:$0x3] 0.0
        $region74: #{cti_forward.19} parent=61 // pred_fallthru
          _
        %v255 = vld [vmem:[%s213] sm:$0x1]
        %v256 = vld [vmem:[%s213 + $0x1] sm:$0x1]
        %v257 = vld [vmem:[%s3] sm:$0x3]
        %v258 = vld [vmem:[%s221] sm:$0xff]
        %v259 = vld [vmem:[%s221 + $0x8] sm:$0xff]
        %v260 = vld [vmem:[%s221 + $0x10] sm:$0xff]
        %v261 = vld [vmem:[%s221 + $0x18] sm:$0xff]
        %v262 = vld [vmem:[%s221 + $0x20] sm:$0xff]
        %v263 = vld [vmem:[%s221 + $0x28] sm:$0xff]
        %v264 = vld [vmem:[%s221 + $0x30] sm:$0xff]
        %v265 = vld [vmem:[%s221 + $0x38] sm:$0xff]
        %v266 = vld [vmem:[%s249] sm:$0x1]
        %v268 = vperm.slane %v266, 0
        %272 = vst [vmem:[#allocation1] ss:$9 sm:$0xff] %v255
        %s273 = scalar_lea.vmem [#allocation1], 1
        %274 = vst [vmem:[%s273] ss:$9 sm:$0xff] %v256
        %v275 = vld [vmem:[#allocation1] sm:$0xff]
        %vm276 = vcmask 523264
        %v277 = vsel %vm276, %v275, 0
        %279 = vmatpush.msra.mxu0 0.0
        %280 = vmatpush.msra.mxu0 0.0
        %281 = vmatpush.msra.mxu0 0.0
        %282 = vmatpush.msra.mxu0 0.0
        %283 = vmatpush.msra.mxu0 0.0
        %284 = vmatpush.msra.mxu0 0.0
        %285 = vmatpush.msra.mxu0 0.0
        %286 = vmatpush.msra.mxu0 0.0
        %287 = vmatpush.msra.mxu0 %v265
        %288 = vmatpush.msra.mxu0 %v264
        %289 = vmatpush.msra.mxu0 %v263
        %290 = vmatpush.msra.mxu0 %v262
        %291 = vmatpush.msra.mxu0 %v261
        %292 = vmatpush.msra.mxu0 %v260
        %293 = vmatpush.msra.mxu0 %v259
        %294 = vmatpush.msra.mxu0 %v258
        %295 = vmatmul.f32.gmra.mxu0 %v277
        %v296 = vpop.f32.mrf.mxu0
        %v297 = vadd.f32 %v268, %v296
        %298 = vdwg.mxu0
        %v299 = vadd.f32 %v257, %v297
        %300 = vst [vmem:[%s3] sm:$0x3] %v299
        // Predicated region
        $region75: #{cti_forward.19} parent=61 // pred_check
          %p301 = pneg %p108
        $region76: #{cti_forward.19} parent=61 // pred_check_branch
          %303 = sbr.rel (%p301) target = $region78
        $region77: #{cti_forward.19} parent=61 // pred_region
          _
        $region78: #{cti_forward.19} parent=61 // pred_fallthru
          _
        // Predicated region
        $region79: #{cti_forward.19} parent=61 // pred_check
          %p304 = pneg %p108
        $region80: #{cti_forward.19} parent=61 // pred_check_branch
          %306 = sbr.rel (%p304) target = $region82
        $region81: #{cti_forward.19} parent=61 // pred_region
          _
        $region82: #{cti_forward.19} parent=61 // pred_fallthru
          _
      $region62: #{cti_forward.19} parent=5 // pred_fallthru
        _
      %p307 = scmp.le.s32.totalorder 2, %s12
      // Predicated region
      $region83: #{cti_forward.19} parent=5 // pred_check
        %p308 = pneg %p307
      $region84: #{cti_forward.19} parent=5 // pred_check_branch
        %310 = sbr.rel (%p308) target = $region86
      $region85: #{cti_forward.19} parent=5 // pred_region
        %s311 = ssub.s32 %s12, 2
      $region86: #{cti_forward.19} parent=5 // pred_fallthru
        _
    $region6: #{cti_forward.19} parent=1 // loop_footer
      %s16 = sadd.s32 1, %s12
    $region7: #{cti_forward.19} parent=1 // loop_footer_branch
      %11 = sbr.rel target = $region3
    $region8: #{cti_forward.19} parent=1 // loop_exit
      _
    %312 = vsyncpa [#allocation4], 1
    %s313 = scalar_lea.sflag [#allocation4], 1
    %314 = vsyncpa %s313, 1

// kernel: cti_forward.18
$region0: #{cti_forward.18}
  #allocation0 [shape = 'u32[]', space=smem, size = 0x4, offset = 0x4, fixed_abs, tag = 'smem constant byte address 0x4 - core index']
  #allocation1 [shape = 'u32[72,128]{1,0:T(1,128)}', space=vmem, size = 0x9000, scoped, tag = 'internal scratch']
  %s0 = inlined_call_operand.vmem [shape: f32[2,2,64,8], index: 0, kind: input, shape index: {}]
  %s1 = inlined_call_operand.vmem [shape: f32[2,16,64], index: 1, kind: input, shape index: {}]
  %s2 = inlined_call_operand.vmem [shape: f32[2,16,64], index: 2, kind: input, shape index: {}]
  %s3 = inlined_call_operand.vmem [shape: f32[2,16,64], index: 3, kind: input, shape index: {}]
  %s4 = inlined_call_operand.vmem [shape: f32[2,2,1,64], index: 4, kind: output, shape index: {}]
  %s5 = sld [smem:[#allocation0]]
  $region49: #{cti_forward.18} parent=0
    _
  %s7 = ssub.s32 1, %s5
  %s8 = scalar_select 0, %s7, %s5
  loop: start=0, step=1, limit=6
  $region2: #{cti_forward.18} parent=0 // loop_pre_header
    _
  $region3: #{cti_forward.18} parent=0 // loop_header
    %s10 = sphi 0, %s14
    %p11 = scmp.ge.s32.totalorder %s10, 6
    %s17 = sphi 0, %s29
    %s18 = sphi 0, %s25
    %s19 = sphi 0, %s17
    %s20 = sphi 0, %s18
    %s21 = sphi 0, %s19
    %s22 = sphi 0, %s20
    %s34 = sphi 0, %s36
    %s37 = sphi 0, %s34
    %s38 = sphi 0, %s37
    %s54 = sphi 0, %s38
    %s62 = sphi 0, %s64
    %s65 = sphi 0, %s62
    %s66 = sphi 0, %s65
    %s82 = sphi 0, %s66
    %s90 = sphi 0, %s92
    %s93 = sphi 0, %s90
    %s94 = sphi 0, %s93
    %s110 = sphi 0, %s94
    %s118 = sphi 0, %s120
    %s121 = sphi 0, %s118
    %s122 = sphi 0, %s121
    %s138 = sphi 0, %s122
    %s146 = sphi 0, %s148
    %s149 = sphi 0, %s146
    %s150 = sphi 0, %s149
    %s166 = sphi 0, %s150
  $region4: #{cti_forward.18} parent=0 // loop_header_branch
    %13 = sbr.rel (%p11) target = $region8
  $region5: #{cti_forward.18} parent=0 // loop_body
    %s15 = ssub.s32 %s10, 1
    %s16 = ssub.s32 %s10, 2
    %s23 = sadd.s32 1, %s18
    %p24 = scmp.ge.s32.totalorder %s23, 2
    %s25 = scalar_select %p24, 0, %s23
    %s26 = sadd.s32 1, %s17
    %s27 = scalar_select %p24, %s26, %s17
    %p28 = scmp.ge.s32.totalorder %s27, 2
    %s29 = scalar_select %p28, 0, %s27
    %s30 = ssub.s32 %s17, %s29
    %s31 = ssub.s32 %s18, %s25
    %s32 = sor.u32 %s30, %s31
    %p33 = scmp.eq.s32.totalorder %s32, 0
    %s35 = sadd.s32 %s34, 1
    %s36 = scalar_select %p33, %s34, %s35
    %p39 = pneg %p33
    %p40 = scmp.eq.s32.totalorder %s10, 3
    %p41 = por %p39, %p40
    %p42 = scmp.ne.s32.totalorder %s34, %s37
    %p43 = scmp.eq.s32.totalorder %s10, 0
    %p44 = por %p42, %p43
    %p45 = scmp.ne.s32.totalorder %s34, %s37
    %p46 = scmp.eq.s32.totalorder %s15, 3
    %p47 = por %p45, %p46
    %p48 = scmp.ne.s32.totalorder %s37, %s38
    %p49 = scmp.eq.s32.totalorder %s15, 0
    %p50 = por %p48, %p49
    %p51 = scmp.ne.s32.totalorder %s37, %s38
    %p52 = scmp.eq.s32.totalorder %s16, 3
    %p53 = por %p51, %p52
    %p55 = scmp.ne.s32.totalorder %s38, %s54
    %p56 = scmp.eq.s32.totalorder %s16, 0
    %p57 = por %p55, %p56
    %s58 = ssub.s32 %s18, %s25
    %s59 = ssub.s32 %s17, %s29
    %s60 = sor.u32 %s58, %s59
    %p61 = scmp.eq.s32.totalorder %s60, 0
    %s63 = sadd.s32 %s62, 1
    %s64 = scalar_select %p61, %s62, %s63
    %p67 = pneg %p61
    %p68 = scmp.eq.s32.totalorder %s10, 3
    %p69 = por %p67, %p68
    %p70 = scmp.ne.s32.totalorder %s62, %s65
    %p71 = scmp.eq.s32.totalorder %s10, 0
    %p72 = por %p70, %p71
    %p73 = scmp.ne.s32.totalorder %s62, %s65
    %p74 = scmp.eq.s32.totalorder %s15, 3
    %p75 = por %p73, %p74
    %p76 = scmp.ne.s32.totalorder %s65, %s66
    %p77 = scmp.eq.s32.totalorder %s15, 0
    %p78 = por %p76, %p77
    %p79 = scmp.ne.s32.totalorder %s65, %s66
    %p80 = scmp.eq.s32.totalorder %s16, 3
    %p81 = por %p79, %p80
    %p83 = scmp.ne.s32.totalorder %s66, %s82
    %p84 = scmp.eq.s32.totalorder %s16, 0
    %p85 = por %p83, %p84
    %s86 = ssub.s32 %s18, %s25
    %s87 = ssub.s32 %s17, %s29
    %s88 = sor.u32 %s86, %s87
    %p89 = scmp.eq.s32.totalorder %s88, 0
    %s91 = sadd.s32 %s90, 1
    %s92 = scalar_select %p89, %s90, %s91
    %p95 = pneg %p89
    %p96 = scmp.eq.s32.totalorder %s10, 3
    %p97 = por %p95, %p96
    %p98 = scmp.ne.s32.totalorder %s90, %s93
    %p99 = scmp.eq.s32.totalorder %s10, 0
    %p100 = por %p98, %p99
    %p101 = scmp.ne.s32.totalorder %s90, %s93
    %p102 = scmp.eq.s32.totalorder %s15, 3
    %p103 = por %p101, %p102
    %p104 = scmp.ne.s32.totalorder %s93, %s94
    %p105 = scmp.eq.s32.totalorder %s15, 0
    %p106 = por %p104, %p105
    %p107 = scmp.ne.s32.totalorder %s93, %s94
    %p108 = scmp.eq.s32.totalorder %s16, 3
    %p109 = por %p107, %p108
    %p111 = scmp.ne.s32.totalorder %s94, %s110
    %p112 = scmp.eq.s32.totalorder %s16, 0
    %p113 = por %p111, %p112
    %s114 = ssub.s32 %s18, %s25
    %s115 = ssub.s32 %s17, %s29
    %s116 = sor.u32 %s114, %s115
    %p117 = scmp.eq.s32.totalorder %s116, 0
    %s119 = sadd.s32 %s118, 1
    %s120 = scalar_select %p117, %s118, %s119
    %p123 = pneg %p117
    %p124 = scmp.eq.s32.totalorder %s10, 3
    %p125 = por %p123, %p124
    %p126 = scmp.ne.s32.totalorder %s118, %s121
    %p127 = scmp.eq.s32.totalorder %s10, 0
    %p128 = por %p126, %p127
    %p129 = scmp.ne.s32.totalorder %s118, %s121
    %p130 = scmp.eq.s32.totalorder %s15, 3
    %p131 = por %p129, %p130
    %p132 = scmp.ne.s32.totalorder %s121, %s122
    %p133 = scmp.eq.s32.totalorder %s15, 0
    %p134 = por %p132, %p133
    %p135 = scmp.ne.s32.totalorder %s121, %s122
    %p136 = scmp.eq.s32.totalorder %s16, 3
    %p137 = por %p135, %p136
    %p139 = scmp.ne.s32.totalorder %s122, %s138
    %p140 = scmp.eq.s32.totalorder %s16, 0
    %p141 = por %p139, %p140
    %s142 = ssub.s32 %s17, %s29
    %s143 = ssub.s32 %s18, %s25
    %s144 = sor.u32 %s142, %s143
    %p145 = scmp.eq.s32.totalorder %s144, 0
    %s147 = sadd.s32 %s146, 1
    %s148 = scalar_select %p145, %s146, %s147
    %p151 = pneg %p145
    %p152 = scmp.eq.s32.totalorder %s10, 3
    %p153 = por %p151, %p152
    %p154 = scmp.ne.s32.totalorder %s146, %s149
    %p155 = scmp.eq.s32.totalorder %s10, 0
    %p156 = por %p154, %p155
    %p157 = scmp.ne.s32.totalorder %s146, %s149
    %p158 = scmp.eq.s32.totalorder %s15, 3
    %p159 = por %p157, %p158
    %p160 = scmp.ne.s32.totalorder %s149, %s150
    %p161 = scmp.eq.s32.totalorder %s15, 0
    %p162 = por %p160, %p161
    %p163 = scmp.ne.s32.totalorder %s149, %s150
    %p164 = scmp.eq.s32.totalorder %s16, 3
    %p165 = por %p163, %p164
    %p167 = scmp.ne.s32.totalorder %s150, %s166
    %p168 = scmp.eq.s32.totalorder %s16, 0
    %p169 = por %p167, %p168
    %p170 = scmp.le.s32.totalorder 1, %s10
    %p171 = scmp.lt.s32.totalorder %s10, 5
    %p172 = pnand %p170, %p171
    %p173 = pneg %p172
    // Predicated region
    $region9: #{cti_forward.18} parent=5 // pred_check
      _
    $region10: #{cti_forward.18} parent=5 // pred_check_branch
      %175 = sbr.rel (%p172) target = $region12
    $region11: #{cti_forward.18} parent=5 // pred_region
      %s176 = ssub.s32 %s10, 1
    $region12: #{cti_forward.18} parent=5 // pred_fallthru
      _
    %p177 = scmp.lt.s32.totalorder %s10, 4
    // Predicated region
    $region13: #{cti_forward.18} parent=5 // pred_check
      %p178 = pneg %p177
    $region14: #{cti_forward.18} parent=5 // pred_check_branch
      %180 = sbr.rel (%p178) target = $region16
    $region15: #{cti_forward.18} parent=5 // pred_region
      // Predicated region
      $region17: #{cti_forward.18} parent=15 // pred_check
        %p181 = pneg %p44
      $region18: #{cti_forward.18} parent=15 // pred_check_branch
        %183 = sbr.rel (%p181) target = $region20
      $region19: #{cti_forward.18} parent=15 // pred_region
        %p184 = scmp.lt.s32.totalorder %s17, 1
        %s185 = scalar_select %p184, %s17, 1
        %p186 = scmp.lt.s32.totalorder %s18, 1
        %s187 = scalar_select %p186, %s18, 1
        %s188 = smul.addr %s187, 8
        %s189 = smul.addr %s185, 16
        %s190 = sadd.s32 %s188, %s189
        %s191 = smul.addr %s190, 8
        %s192 = scalar_lea.vmem %s0, %s191
      $region20: #{cti_forward.18} parent=15 // pred_fallthru
        _
      // Predicated region
      $region21: #{cti_forward.18} parent=15 // pred_check
        %p193 = pneg %p72
      $region22: #{cti_forward.18} parent=15 // pred_check_branch
        %195 = sbr.rel (%p193) target = $region24
      $region23: #{cti_forward.18} parent=15 // pred_region
        %p196 = scmp.lt.s32.totalorder %s18, 1
        %s197 = scalar_select %p196, %s18, 1
        %p198 = scmp.lt.s32.totalorder %s17, 1
        %s199 = scalar_select %p198, %s17, 1
        %s200 = smul.addr %s197, 2
        %s201 = sadd.s32 %s199, %s200
        %s202 = smul.addr %s201, 8
        %s203 = scalar_lea.vmem %s1, %s202
      $region24: #{cti_forward.18} parent=15 // pred_fallthru
        _
      // Predicated region
      $region25: #{cti_forward.18} parent=15 // pred_check
        %p204 = pneg %p100
      $region26: #{cti_forward.18} parent=15 // pred_check_branch
        %206 = sbr.rel (%p204) target = $region28
      $region27: #{cti_forward.18} parent=15 // pred_region
        %p207 = scmp.lt.s32.totalorder %s18, 1
        %s208 = scalar_select %p207, %s18, 1
        %p209 = scmp.lt.s32.totalorder %s17, 1
        %s210 = scalar_select %p209, %s17, 1
        %s211 = smul.addr %s208, 2
        %s212 = sadd.s32 %s210, %s211
        %s213 = smul.addr %s212, 8
        %s214 = scalar_lea.vmem %s2, %s213
      $region28: #{cti_forward.18} parent=15 // pred_fallthru
        _
      // Predicated region
      $region29: #{cti_forward.18} parent=15 // pred_check
        %p215 = pneg %p128
      $region30: #{cti_forward.18} parent=15 // pred_check_branch
        %217 = sbr.rel (%p215) target = $region32
      $region31: #{cti_forward.18} parent=15 // pred_region
        %p218 = scmp.lt.s32.totalorder %s18, 1
        %s219 = scalar_select %p218, %s18, 1
        %p220 = scmp.lt.s32.totalorder %s17, 1
        %s221 = scalar_select %p220, %s17, 1
        %s222 = smul.addr %s219, 2
        %s223 = sadd.s32 %s221, %s222
        %s224 = smul.addr %s223, 8
        %s225 = scalar_lea.vmem %s3, %s224
      $region32: #{cti_forward.18} parent=15 // pred_fallthru
        _
    $region16: #{cti_forward.18} parent=5 // pred_fallthru
      _
    %p226 = scmp.le.s32.totalorder 1, %s10
    %p227 = scmp.lt.s32.totalorder %s10, 5
    %p228 = pnand %p226, %p227
    %p229 = pneg %p228
    // Predicated region
    $region33: #{cti_forward.18} parent=5 // pred_check
      _
    $region34: #{cti_forward.18} parent=5 // pred_check_branch
      %231 = sbr.rel (%p228) target = $region36
    $region35: #{cti_forward.18} parent=5 // pred_region
      %s232 = ssub.s32 %s10, 1
      %p233 = scmp.lt.s32.totalorder %s19, 1
      %s234 = scalar_select %p233, %s19, 1
      %p235 = scmp.lt.s32.totalorder %s20, 1
      %s236 = scalar_select %p235, %s20, 1
      %s237 = smul.addr %s236, 8
      %s238 = smul.addr %s234, 16
      %s239 = sadd.s32 %s237, %s238
      %s240 = smul.addr %s239, 8
      %s241 = scalar_lea.vmem %s0, %s240
      %p242 = pneg %p50
      %p243 = pneg %p47
      %p244 = scmp.lt.s32.totalorder %s20, 1
      %s245 = scalar_select %p244, %s20, 1
      %p246 = scmp.lt.s32.totalorder %s19, 1
      %s247 = scalar_select %p246, %s19, 1
      %s248 = smul.addr %s245, 2
      %s249 = sadd.s32 %s247, %s248
      %s250 = smul.addr %s249, 8
      %s251 = scalar_lea.vmem %s1, %s250
      %p252 = pneg %p78
      %p253 = pneg %p75
      %p254 = scmp.lt.s32.totalorder %s20, 1
      %s255 = scalar_select %p254, %s20, 1
      %p256 = scmp.lt.s32.totalorder %s19, 1
      %s257 = scalar_select %p256, %s19, 1
      %s258 = smul.addr %s255, 2
      %s259 = sadd.s32 %s257, %s258
      %s260 = smul.addr %s259, 8
      %s261 = scalar_lea.vmem %s2, %s260
      %p262 = pneg %p106
      %p263 = pneg %p103
      %p264 = scmp.lt.s32.totalorder %s20, 1
      %s265 = scalar_select %p264, %s20, 1
      %p266 = scmp.lt.s32.totalorder %s19, 1
      %s267 = scalar_select %p266, %s19, 1
      %s268 = smul.addr %s265, 2
      %s269 = sadd.s32 %s267, %s268
      %s270 = smul.addr %s269, 8
      %s271 = scalar_lea.vmem %s3, %s270
      %p272 = pneg %p134
      %p273 = pneg %p131
      %p274 = pneg %p162
      %p275 = pneg %p159
      %p276 = scmp.lt.s32.totalorder %s19, 1
      %s277 = scalar_select %p276, %s19, 1
      %p278 = scmp.lt.s32.totalorder %s20, 1
      %s279 = scalar_select %p278, %s20, 1
      %s280 = smul.addr %s277, 2
      %s281 = sadd.s32 %s279, %s280
      %s282 = scalar_lea.vmem %s4, %s281
      %p283 = scmp.lt.s32.totalorder %s19, 1
      %s284 = scalar_select %p283, %s19, 1
      %p285 = scmp.lt.s32.totalorder %s20, 1
      %s286 = scalar_select %p285, %s20, 1
      %s287 = smul.addr %s286, 8
      %s288 = smul.addr %s284, 16
      %s289 = sadd.s32 %s287, %s288
      %s290 = smul.addr %s289, 8
      %s291 = scalar_lea.vmem %s0, %s290
      %p292 = scmp.lt.s32.totalorder %s20, 1
      %s293 = scalar_select %p292, %s20, 1
      %p294 = scmp.lt.s32.totalorder %s19, 1
      %s295 = scalar_select %p294, %s19, 1
      %s296 = smul.addr %s293, 2
      %s297 = sadd.s32 %s295, %s296
      %s298 = smul.addr %s297, 8
      %s299 = scalar_lea.vmem %s1, %s298
      %p300 = scmp.lt.s32.totalorder %s20, 1
      %s301 = scalar_select %p300, %s20, 1
      %p302 = scmp.lt.s32.totalorder %s19, 1
      %s303 = scalar_select %p302, %s19, 1
      %s304 = smul.addr %s301, 2
      %s305 = sadd.s32 %s303, %s304
      %s306 = smul.addr %s305, 8
      %s307 = scalar_lea.vmem %s2, %s306
      %p308 = scmp.lt.s32.totalorder %s20, 1
      %s309 = scalar_select %p308, %s20, 1
      %p310 = scmp.lt.s32.totalorder %s19, 1
      %s311 = scalar_select %p310, %s19, 1
      %s312 = smul.addr %s309, 2
      %s313 = sadd.s32 %s311, %s312
      %s314 = smul.addr %s313, 8
      %s315 = scalar_lea.vmem %s3, %s314
      %p316 = scmp.lt.s32.totalorder %s19, 1
      %s317 = scalar_select %p316, %s19, 1
      %p318 = scmp.lt.s32.totalorder %s20, 1
      %s319 = scalar_select %p318, %s20, 1
      %s320 = smul.addr %s317, 2
      %s321 = sadd.s32 %s319, %s320
      %s322 = scalar_lea.vmem %s4, %s321
      %v323 = vld [vmem:[%s291] sm:$0xff]
      %v324 = vld [vmem:[%s291 + $0x8] sm:$0xff]
      %v325 = vld [vmem:[%s291 + $0x10] sm:$0xff]
      %v326 = vld [vmem:[%s291 + $0x18] sm:$0xff]
      %v327 = vld [vmem:[%s291 + $0x20] sm:$0xff]
      %v328 = vld [vmem:[%s291 + $0x28] sm:$0xff]
      %v329 = vld [vmem:[%s291 + $0x30] sm:$0xff]
      %v330 = vld [vmem:[%s291 + $0x38] sm:$0xff]
      %v331 = vld [vmem:[%s299] sm:$0xff]
      %vm332 = vcmask 64512
      %v334 = vsel %vm332, %v323, 0
      %v337 = vsel %vm332, %v324, 0
      %v340 = vsel %vm332, %v325, 0
      %v343 = vsel %vm332, %v326, 0
      %v346 = vsel %vm332, %v327, 0
      %v349 = vsel %vm332, %v328, 0
      %v352 = vsel %vm332, %v329, 0
      %v355 = vsel %vm332, %v330, 0
      %357 = vmatpush.msra.mxu0 0.0
      %358 = vmatpush.msra.mxu0 0.0
      %359 = vmatpush.msra.mxu0 0.0
      %360 = vmatpush.msra.mxu0 0.0
      %361 = vmatpush.msra.mxu0 0.0
      %362 = vmatpush.msra.mxu0 0.0
      %363 = vmatpush.msra.mxu0 0.0
      %364 = vmatpush.msra.mxu0 0.0
      %365 = vmatpush.msra.mxu0 0.0
      %366 = vmatpush.msra.mxu0 0.0
      %367 = vmatpush.msra.mxu0 0.0
      %368 = vmatpush.msra.mxu0 0.0
      %369 = vmatpush.msra.mxu0 0.0
      %370 = vmatpush.msra.mxu0 0.0
      %371 = vmatpush.msra.mxu0 0.0
      %372 = vmatpush.msra.mxu0 %v331
      %373 = vmatmul.f32.gmra.mxu0 %v334
      %v374 = vpop.f32.mrf.mxu0
      %v375 = vadd.f32 0.0, %v374
      %376 = vmatmul.f32.gmra.mxu0 %v337
      %v377 = vpop.f32.mrf.mxu0
      %v378 = vadd.f32 0.0, %v377
      %379 = vmatmul.f32.gmra.mxu0 %v340
      %v380 = vpop.f32.mrf.mxu0
      %v381 = vadd.f32 0.0, %v380
      %382 = vmatmul.f32.gmra.mxu0 %v343
      %v383 = vpop.f32.mrf.mxu0
      %v384 = vadd.f32 0.0, %v383
      %385 = vmatmul.f32.gmra.mxu0 %v346
      %v386 = vpop.f32.mrf.mxu0
      %v387 = vadd.f32 0.0, %v386
      %388 = vmatmul.f32.gmra.mxu0 %v349
      %v389 = vpop.f32.mrf.mxu0
      %v390 = vadd.f32 0.0, %v389
      %391 = vmatmul.f32.gmra.mxu0 %v352
      %v392 = vpop.f32.mrf.mxu0
      %v393 = vadd.f32 0.0, %v392
      %394 = vmatmul.f32.gmra.mxu0 %v355
      %v395 = vpop.f32.mrf.mxu0
      %v396 = vadd.f32 0.0, %v395
      %397 = vdwg.mxu0
      %v398 = vld [vmem:[%s315] sm:$0xff]
      %v399 = vmul.f32 %v375, %v398
      %v400 = vmul.f32 %v378, %v398
      %v401 = vmul.f32 %v381, %v398
      %v402 = vmul.f32 %v384, %v398
      %v403 = vmul.f32 %v387, %v398
      %v404 = vmul.f32 %v390, %v398
      %v405 = vmul.f32 %v393, %v398
      %v406 = vmul.f32 %v396, %v398
      %vm407 = vcmask 523264
      %v408 = vsel %vm407, %v399, 0.0
      %v409 = vrot.slane %v408, 4
      %v410 = vadd.f32 %v408, %v409
      %v411 = vrot.slane %v410, 2
      %v412 = vadd.f32 %v410, %v411
      %v413 = vrot.slane %v412, 1
      %v414 = vadd.f32 %v412, %v413
      %v415 = vsel %vm407, %v400, 0.0
      %v416 = vrot.slane %v415, 4
      %v417 = vadd.f32 %v415, %v416
      %v418 = vrot.slane %v417, 2
      %v419 = vadd.f32 %v417, %v418
      %v420 = vrot.slane %v419, 1
      %v421 = vadd.f32 %v419, %v420
      %v422 = vsel %vm407, %v401, 0.0
      %v423 = vrot.slane %v422, 4
      %v424 = vadd.f32 %v422, %v423
      %v425 = vrot.slane %v424, 2
      %v426 = vadd.f32 %v424, %v425
      %v427 = vrot.slane %v426, 1
      %v428 = vadd.f32 %v426, %v427
      %v429 = vsel %vm407, %v402, 0.0
      %v430 = vrot.slane %v429, 4
      %v431 = vadd.f32 %v429, %v430
      %v432 = vrot.slane %v431, 2
      %v433 = vadd.f32 %v431, %v432
      %v434 = vrot.slane %v433, 1
      %v435 = vadd.f32 %v433, %v434
      %v436 = vsel %vm407, %v403, 0.0
      %v437 = vrot.slane %v436, 4
      %v438 = vadd.f32 %v436, %v437
      %v439 = vrot.slane %v438, 2
      %v440 = vadd.f32 %v438, %v439
      %v441 = vrot.slane %v440, 1
      %v442 = vadd.f32 %v440, %v441
      %v443 = vsel %vm407, %v404, 0.0
      %v444 = vrot.slane %v443, 4
      %v445 = vadd.f32 %v443, %v444
      %v446 = vrot.slane %v445, 2
      %v447 = vadd.f32 %v445, %v446
      %v448 = vrot.slane %v447, 1
      %v449 = vadd.f32 %v447, %v448
      %v450 = vsel %vm407, %v405, 0.0
      %v451 = vrot.slane %v450, 4
      %v452 = vadd.f32 %v450, %v451
      %v453 = vrot.slane %v452, 2
      %v454 = vadd.f32 %v452, %v453
      %v455 = vrot.slane %v454, 1
      %v456 = vadd.f32 %v454, %v455
      %v457 = vsel %vm407, %v406, 0.0
      %v458 = vrot.slane %v457, 4
      %v459 = vadd.f32 %v457, %v458
      %v460 = vrot.slane %v459, 2
      %v461 = vadd.f32 %v459, %v460
      %v462 = vrot.slane %v461, 1
      %v463 = vadd.f32 %v461, %v462
      %v464 = vld [vmem:[%s307] sm:$0xff]
      %v466 = vrot.slane %v464, 1
      %v467 = vrot.slane %v464, 2
      %v468 = vrot.slane %v464, 3
      %v469 = vrot.slane %v464, 4
      %v470 = vrot.slane %v464, 5
      %v471 = vrot.slane %v464, 6
      %v472 = vrot.slane %v464, 7
      %v481 = vmul.f32 %v414, %v464
      %v482 = vmul.f32 %v421, %v466
      %v483 = vmul.f32 %v428, %v467
      %v484 = vmul.f32 %v435, %v468
      %v485 = vmul.f32 %v442, %v469
      %v486 = vmul.f32 %v449, %v470
      %v487 = vmul.f32 %v456, %v471
      %v488 = vmul.f32 %v463, %v472
      %v497 = vrot.slane %v482, 7
      %vm498 = vcmask 1041409
      %v499 = vsel %vm498, %v497, %v481
      %v500 = vrot.slane %v483, 6
      %vm501 = vcmask 1042434
      %v502 = vsel %vm501, %v500, %v499
      %v503 = vrot.slane %v484, 5
      %vm504 = vcmask 1043459
      %v505 = vsel %vm504, %v503, %v502
      %v506 = vrot.slane %v485, 4
      %vm507 = vcmask 1044484
      %v508 = vsel %vm507, %v506, %v505
      %v509 = vrot.slane %v486, 3
      %vm510 = vcmask 1045509
      %v511 = vsel %vm510, %v509, %v508
      %v512 = vrot.slane %v487, 2
      %vm513 = vcmask 1046534
      %v514 = vsel %vm513, %v512, %v511
      %v515 = vrot.slane %v488, 1
      %vm516 = vcmask 1047559
      %v517 = vsel %vm516, %v515, %v514
      %v519 = vsel %vm407, %v517, 0.0
      %v520 = vrot.slane %v519, 4
      %v521 = vadd.f32 %v519, %v520
      %v522 = vrot.slane %v521, 2
      %v523 = vadd.f32 %v521, %v522
      %v524 = vrot.slane %v523, 1
      %v525 = vadd.f32 %v523, %v524
      %vm526 = vcmask 516096
      %527 = vst.msk [vmem:[%s322] sm:$0x1] %vm526, %v525
      %p528 = scmp.lt.s32.totalorder %s19, 1
      %s529 = scalar_select %p528, %s19, 1
      %p530 = scmp.lt.s32.totalorder %s20, 1
      %s531 = scalar_select %p530, %s20, 1
      %s532 = smul.addr %s529, 2
      %s533 = sadd.s32 %s531, %s532
      %s534 = scalar_lea.vmem %s4, %s533
      // Predicated region
      $region37: #{cti_forward.18} parent=35 // pred_check
        %p535 = pneg %p159
      $region38: #{cti_forward.18} parent=35 // pred_check_branch
        %537 = sbr.rel (%p535) target = $region40
      $region39: #{cti_forward.18} parent=35 // pred_region
        _
      $region40: #{cti_forward.18} parent=35 // pred_fallthru
        _
    $region36: #{cti_forward.18} parent=5 // pred_fallthru
      _
    %p538 = scmp.le.s32.totalorder 2, %s10
    // Predicated region
    $region41: #{cti_forward.18} parent=5 // pred_check
      %p539 = pneg %p538
    $region42: #{cti_forward.18} parent=5 // pred_check_branch
      %541 = sbr.rel (%p539) target = $region44
    $region43: #{cti_forward.18} parent=5 // pred_region
      %s542 = ssub.s32 %s10, 2
      // Predicated region
      $region45: #{cti_forward.18} parent=43 // pred_check
        %p543 = pneg %p165
      $region46: #{cti_forward.18} parent=43 // pred_check_branch
        %545 = sbr.rel (%p543) target = $region48
      $region47: #{cti_forward.18} parent=43 // pred_region
        %p546 = scmp.lt.s32.totalorder %s21, 1
        %s547 = scalar_select %p546, %s21, 1
        %p548 = scmp.lt.s32.totalorder %s22, 1
        %s549 = scalar_select %p548, %s22, 1
        %s550 = smul.addr %s547, 2
        %s551 = sadd.s32 %s549, %s550
        %s552 = scalar_lea.vmem %s4, %s551
      $region48: #{cti_forward.18} parent=43 // pred_fallthru
        _
    $region44: #{cti_forward.18} parent=5 // pred_fallthru
      _
  $region6: #{cti_forward.18} parent=0 // loop_footer
    %s14 = sadd.s32 1, %s10
  $region7: #{cti_forward.18} parent=0 // loop_footer_branch
    %9 = sbr.rel target = $region3
  $region8: #{cti_forward.18} parent=0 // loop_exit
    _

</llo_original>
